<compile_context>
chip_gen: v6e
topology: v6e:2x2x1
jax: 0.10.0
libtpu: 0.0.40
codegen_flags: <defaults>
</compile_context>

<pallas_src>
import functools

import numpy as np
import jax
import jax.numpy as jnp
from jax.experimental import pallas as pl
from jax.experimental.pallas import tpu as pltpu

_F32 = jnp.float32
_MXU_DTYPE = jnp.bfloat16      # matmul-operand dtype; set to jnp.float32 for exact-f32
_BN_EPS = 1e-5                 # PyTorch BatchNorm1d default
_MIB = 1024 * 1024


# ------------------------------ small helpers ---------------------------------

def _round_up(x, m):
    return ((x + m - 1) // m) * m


def _pick_row_tile(rows):
    for cand in (1024, 512, 256, 128, 64, 32, 16, 8):
        if rows % cand == 0:
            return cand
    return rows


def _full(a):
    """Whole-array BlockSpec (weights / tiny per-call tensors, VMEM-resident)."""
    nd = a.ndim
    return pl.BlockSpec(a.shape, lambda *_: (0,) * nd)


def _nbytes(*shapes, itemsize=4):
    return sum(int(np.prod(s)) * itemsize for s in shapes)


def _cparams(sem, block_bytes):
    # ~2x the live block footprint (double buffering) plus headroom, always
    # well below the smallest physical VMEM (v7x: 64 MiB per TensorCore).
    limit = int(min(48 * _MIB, max(16 * _MIB, 2 * block_bytes + 4 * _MIB)))
    return pltpu.CompilerParams(dimension_semantics=sem,
                                vmem_limit_bytes=limit)


# --------------------------- in-kernel helpers ---------------------------------

def _tshift(p, off):
    """out[t] = p[t + off] along axis 0 of a 2-D slab, zero-filled at the edge.
    TODO(synk): use pltpu.roll (XLU) instead of the slice+concat relayout."""
    if off == 0:
        return p
    tt, c = p.shape
    zeros = jnp.zeros((abs(off), c), p.dtype)
    if off > 0:
        return jnp.concatenate([p[off:, :], zeros], axis=0)
    return jnp.concatenate([zeros, p[:tt + off, :]], axis=0)


def _row_mask(tt, t_valid):
    rows = jax.lax.broadcasted_iota(jnp.int32, (tt, 1), 0)
    return (rows < t_valid).astype(_F32)


def _partial_stats(y, valid):
    """Per-block (sum, sum-of-squares) over valid rows -> (2, C)."""
    yv = y * valid
    s = jnp.sum(yv, axis=0, keepdims=True)
    ss = jnp.sum(yv * y, axis=0, keepdims=True)
    return jnp.concatenate([s, ss], axis=0)


# --------------------------------- kernels -------------------------------------

def bank_kernel(x_ref, w_ref, b_ref, y_ref, st_ref, *, T, offsets):
    """Fused conv bank: one (Cin -> bank_out) matmul per union tap, accumulated
    in f32 with the time shift applied on the narrow output.  Emits BN0
    partial statistics for the T+1 valid frames."""
    x = x_ref[0]                                      # (TT, Cin) f32
    xm = x.astype(_MXU_DTYPE)
    tt = x.shape[0]
    cout = w_ref.shape[2]
    y = jnp.zeros((tt, cout), _F32)
    for j, off in enumerate(offsets):                 # static unroll over taps
        p = jnp.dot(xm, w_ref[j], preferred_element_type=_F32)
        y = y + _tshift(p, off)
    y = y + b_ref[...]
    y_ref[0] = y
    st_ref[0] = _partial_stats(y, _row_mask(tt, T + 1))


def mid_conv_kernel(y_ref, bn_ref, w_ref, b_ref, o_ref, st_ref, *, T, pool):
    """Precomputed BN (scale/shift) + ReLU [+ max_pool1d(2,1)] + K=3 conv as
    three tap-wise matmuls (shift on the narrow output).  Emits partial stats
    of the pre-BN conv output."""
    y = y_ref[0]                                      # (TT, Cin) f32
    tt = y.shape[0]
    a = jnp.maximum(y * bn_ref[0:1, :] + bn_ref[1:2, :], 0.0)
    if pool:                                          # max_pool1d(kernel=2, stride=1)
        a = jnp.maximum(a, _tshift(a, 1))
    h = a * _row_mask(tt, T)                          # zero pad frames (conv halo)
    hm = h.astype(_MXU_DTYPE)
    p0 = jnp.dot(hm, w_ref[0], preferred_element_type=_F32)
    p1 = jnp.dot(hm, w_ref[1], preferred_element_type=_F32)
    p2 = jnp.dot(hm, w_ref[2], preferred_element_type=_F32)
    o = _tshift(p0, -1) + p1 + _tshift(p2, 1) + b_ref[...]
    o_ref[0] = o
    st_ref[0] = _partial_stats(o, _row_mask(tt, T))


def trunk_tail_kernel(y2_ref, x_ref, bn_ref, pw_ref, pb_ref, hww_ref, hwb_ref,
                      rrw_ref, rrb_ref, wih_ref, bih_ref, rr_ref, xp_ref,
                      *, use_proj, num_hw_layers):
    """Per-row tail: BN2 + residual projection/add + highway stack +
    rnn_residual Linear + both GRU directions' input projections.  Outputs are
    emitted pre-split per direction so the GRU writes lane-dense slabs."""
    d = y2_ref.shape[1]
    h3 = wih_ref.shape[1] // 2
    res = y2_ref[...] * bn_ref[0:1, :] + bn_ref[1:2, :]          # BN2
    x = x_ref[...]
    if use_proj:
        r = (jnp.dot(x.astype(_MXU_DTYPE), pw_ref[...],
                     preferred_element_type=_F32) + pb_ref[...] + res)
    else:
        r = x + res
    for l in range(num_hw_layers):       # weights concatenated [gate|nonlin|lin]
        z = (jnp.dot(r.astype(_MXU_DTYPE), hww_ref[l],
                     preferred_element_type=_F32) + hwb_ref[l])
        gate = jax.nn.sigmoid(z[:, :d])
        r = gate * jnp.maximum(z[:, d:2 * d], 0.0) + (1.0 - gate) * z[:, 2 * d:]
    rm = r.astype(_MXU_DTYPE)
    rr = jnp.dot(rm, rrw_ref[...], preferred_element_type=_F32) + rrb_ref[...]
    xp = jnp.dot(rm, wih_ref[...], preferred_element_type=_F32) + bih_ref[...]
    rr_ref[0] = rr[:, :d]
    rr_ref[1] = rr[:, d:]
    xp_ref[0] = xp[:, :h3]
    xp_ref[1] = xp[:, h3:]


def bigru_kernel(xp_ref, rr_ref, m_ref, whh_ref, bhn_ref, o_ref, h_ref):
    """Masked GRU, one direction per grid row (parallel axis -> one direction
    per TensorCore on multi-core chips).  Time blocks stream along the
    arbitrary grid axis; the hidden state is carried in VMEM scratch.  The
    rnn_residual add is fused into the per-step store."""
    d = pl.program_id(0)                  # 0 = forward, 1 = backward

    @pl.when(pl.program_id(1) == 0)
    def _init():
        h_ref[...] = jnp.zeros_like(h_ref)

    tb = xp_ref.shape[1]
    hdim = h_ref.shape[1]
    whh = whh_ref[0]                      # (H, 3H) f32 (recurrence stays f32)
    bhn = bhn_ref[0]                      # (1, H)  (only b_hn stays inside r*(.))

    def step(s, h):
        t = (1 - d) * s + d * (tb - 1 - s)            # fwd: s, bwd: reversed
        gx = xp_ref[0, t]                             # (N, 3H) precomputed x-proj
        gh = jnp.dot(h, whh, preferred_element_type=_F32)
        r = jax.nn.sigmoid(gx[:, :hdim] + gh[:, :hdim])
        z = jax.nn.sigmoid(gx[:, hdim:2 * hdim] + gh[:, hdim:2 * hdim])
        n = jnp.tanh(gx[:, 2 * hdim:] + r * (gh[:, 2 * hdim:] + bhn))
        h_new = (1.0 - z) * n + z * h
        m = m_ref[t]                                  # (N, 1) validity mask
        h = m * h_new + (1.0 - m) * h                 # freeze state past length
        o_ref[0, t] = rr_ref[0, t] + m * h            # fused rnn_residual add
        return h

    h_ref[...] = jax.lax.fori_loop(0, tb, step, h_ref[...])


# ------------------------------- parameters ------------------------------------

def init_params(key, input_dim, conv_bank_dim, conv_dim1, conv_dim2, gru_dim,
                num_filters):
    """Parameters in PyTorch layouts (Conv1d (Cout,Cin,K), Linear (out,in))."""
    keys = iter(jax.random.split(key, 128))

    def rnd(shape, scale=0.1):
        return jax.random.normal(next(keys), shape, _F32) * scale

    bank_out_dim = num_filters * conv_bank_dim
    p = {"cfg": dict(input_dim=input_dim, conv_bank_dim=conv_bank_dim,
                     conv_dim1=conv_dim1, conv_dim2=conv_dim2,
                     gru_dim=gru_dim, num_filters=num_filters)}
    p["bank_w"] = [rnd((conv_bank_dim, input_dim, i + 1)) for i in range(num_filters)]
    p["bank_b"] = [rnd((conv_bank_dim,), 0.01) for _ in range(num_filters)]
    p["bn_g"] = [jnp.ones((bank_out_dim,), _F32), jnp.ones((conv_dim1,), _F32),
                 jnp.ones((conv_dim2,), _F32)]
    p["bn_b"] = [jnp.zeros((bank_out_dim,), _F32), jnp.zeros((conv_dim1,), _F32),
                 jnp.zeros((conv_dim2,), _F32)]
    p["conv1_w"] = rnd((conv_dim1, bank_out_dim, 3))
    p["conv1_b"] = rnd((conv_dim1,), 0.01)
    p["conv2_w"] = rnd((conv_dim2, conv_dim1, 3))
    p["conv2_b"] = rnd((conv_dim2,), 0.01)
    if input_dim != conv_dim2:
        p["proj_w"] = rnd((conv_dim2, input_dim))
        p["proj_b"] = rnd((conv_dim2,), 0.01)
    for name in ("hw_gate", "hw_nl", "hw_lin"):
        p[name + "_w"] = [rnd((conv_dim2, conv_dim2)) for _ in range(4)]
        p[name + "_b"] = [rnd((conv_dim2,), 0.01) for _ in range(4)]
    p["rnnres_w"] = rnd((2 * conv_dim2, conv_dim2))
    p["rnnres_b"] = rnd((2 * conv_dim2,), 0.01)
    for dname in ("f", "b"):
        p[f"gru_wih_{dname}"] = rnd((3 * gru_dim, conv_dim2))
        p[f"gru_whh_{dname}"] = rnd((3 * gru_dim, gru_dim))
        p[f"gru_bih_{dname}"] = rnd((3 * gru_dim,), 0.01)
        p[f"gru_bhh_{dname}"] = rnd((3 * gru_dim,), 0.01)
    return p


def prepare_params(p):
    """One-time weight re-layout (fused bank taps, conv taps, concatenated
    highway/GRU weights, bf16 casts) hoisted out of the forward pass."""
    cfg = dict(p["cfg"])
    nf = cfg["num_filters"]
    cin, cb, h = cfg["input_dim"], cfg["conv_bank_dim"], cfg["gru_dim"]
    bank_out = nf * cb
    p_list = [int(np.ceil(i / 2)) for i in range(nf)]
    p_max = max(p_list)
    r_max = max((i + 1) - p_list[i] for i in range(nf))
    offsets = tuple(range(-p_max, r_max))
    cfg.update(p_max=p_max, r_max=r_max, offsets=offsets,
               use_proj=("proj_w" in p))
    q = {"cfg": cfg, "bn_g": p["bn_g"], "bn_b": p["bn_b"]}

    # Conv bank: zero-pad every branch's taps into fused per-tap matrices.
    wf = np.zeros((len(offsets), cin, bank_out), np.float32)
    for b in range(nf):
        wb = np.asarray(p["bank_w"][b])               # (Cb, Cin, K)
        for k in range(b + 1):
            wf[(k - p_list[b]) + p_max, :, b * cb:(b + 1) * cb] = wb[:, :, k].T
    q["bank_w"] = jnp.asarray(wf, _MXU_DTYPE)
    q["bank_b"] = jnp.concatenate(p["bank_b"]).reshape(1, -1).astype(_F32)

    def conv3_taps(w):                                # (Cout, Cin, 3) -> (3, Cin, Cout)
        return jnp.transpose(w, (2, 1, 0)).astype(_MXU_DTYPE)

    q["c1w"], q["c1b"] = conv3_taps(p["conv1_w"]), p["conv1_b"].reshape(1, -1)
    q["c2w"], q["c2b"] = conv3_taps(p["conv2_w"]), p["conv2_b"].reshape(1, -1)
    if cfg["use_proj"]:
        q["pw"] = p["proj_w"].T.astype(_MXU_DTYPE)
        q["pb"] = p["proj_b"].reshape(1, -1)
    else:
        q["pw"] = jnp.zeros((1, 1), _MXU_DTYPE)       # unused dummies
        q["pb"] = jnp.zeros((1, 1), _F32)
    q["hw_w"] = jnp.stack([jnp.concatenate(
        [p["hw_gate_w"][l].T, p["hw_nl_w"][l].T, p["hw_lin_w"][l].T], axis=1)
        for l in range(4)]).astype(_MXU_DTYPE)
    q["hw_b"] = jnp.stack([jnp.concatenate(
        [p["hw_gate_b"][l], p["hw_nl_b"][l], p["hw_lin_b"][l]]).reshape(1, -1)
        for l in range(4)]).astype(_F32)
    q["rrw"] = p["rnnres_w"].T.astype(_MXU_DTYPE)
    q["rrb"] = p["rnnres_b"].reshape(1, -1)
    # GRU: both directions' input projections fused into (D, 6H); b_hh's r/z
    # halves folded into the x-side bias (only b_hn stays in the recurrence).
    q["wih"] = jnp.concatenate([p["gru_wih_f"].T, p["gru_wih_b"].T],
                               axis=1).astype(_MXU_DTYPE)
    bih = []
    for dname in ("f", "b"):
        bhh = p[f"gru_bhh_{dname}"]
        bih.append(p[f"gru_bih_{dname}"]
                   + jnp.concatenate([bhh[:2 * h], jnp.zeros((h,), _F32)]))
    q["bih"] = jnp.concatenate(bih).reshape(1, -1).astype(_F32)
    q["whh"] = jnp.stack([p["gru_whh_f"].T, p["gru_whh_b"].T]).astype(_F32)
    q["bhn"] = jnp.stack([p["gru_bhh_f"][2 * h:].reshape(1, -1),
                          p["gru_bhh_b"][2 * h:].reshape(1, -1)]).astype(_F32)
    return q


def _finish_bn(partials, count, gamma, beta):
    """Reduce per-tile (sum, sumsq) partials into a fused BN (scale, shift)."""
    s = jnp.sum(partials, axis=0)                     # (2, C)
    mean = s[0] / count
    var = jnp.maximum(s[1] / count - mean * mean, 0.0)
    scale = gamma * jax.lax.rsqrt(var + _BN_EPS)
    return jnp.stack([scale, beta - mean * scale]).astype(_F32)


# ------------------------------- CBHG forward ----------------------------------

def cbhg_forward(prep, x, lengths):
    cfg = prep["cfg"]
    n, t, cin = x.shape
    bank_out = prep["bank_w"].shape[2]
    c1 = prep["c1w"].shape[2]
    d = prep["c2w"].shape[2]
    h = prep["whh"].shape[1]
    # The reference adds rnn_residual (N,T,2*conv_dim2) to the GRU output
    # (N,T,2*gru_dim): only valid when gru_dim == conv_dim2.
    assert h == d, "gru_dim must equal conv_dim2 (required by the residual add)"

    tb = min(64, _round_up(t, 8))                     # GRU time-block
    tt = _round_up(t + cfg["r_max"], tb)              # shared padded time length
    nb = tt // tb

    x_pad = jnp.pad(x.astype(_F32), ((0, 0), (0, tt - t), (0, 0)))

    # ---- K1: conv bank (tiled over batch; BN0 stats as per-tile partials) ----
    y0, st0 = pl.pallas_call(
        functools.partial(bank_kernel, T=t, offsets=cfg["offsets"]),
        grid=(n,),
        in_specs=[pl.BlockSpec((1, tt, cin), lambda i: (i, 0, 0)),
                  _full(prep["bank_w"]), _full(prep["bank_b"])],
        out_specs=(pl.BlockSpec((1, tt, bank_out), lambda i: (i, 0, 0)),
                   pl.BlockSpec((1, 2, bank_out), lambda i: (i, 0, 0))),
        out_shape=(jax.ShapeDtypeStruct((n, tt, bank_out), _F32),
                   jax.ShapeDtypeStruct((n, 2, bank_out), _F32)),
        compiler_params=_cparams(("parallel",),
                                 _nbytes((tt, cin), (tt, bank_out),
                                         prep["bank_w"].shape)),
    )(x_pad, prep["bank_w"], prep["bank_b"])
    bn0 = _finish_bn(st0, n * (t + 1), prep["bn_g"][0], prep["bn_b"][0])

    # ---- K2: BN0 + ReLU + maxpool(2,1) + conv1 ----
    y1, st1 = pl.pallas_call(
        functools.partial(mid_conv_kernel, T=t, pool=True),
        grid=(n,),
        in_specs=[pl.BlockSpec((1, tt, bank_out), lambda i: (i, 0, 0)),
                  _full(bn0), _full(prep["c1w"]), _full(prep["c1b"])],
        out_specs=(pl.BlockSpec((1, tt, c1), lambda i: (i, 0, 0)),
                   pl.BlockSpec((1, 2, c1), lambda i: (i, 0, 0))),
        out_shape=(jax.ShapeDtypeStruct((n, tt, c1), _F32),
                   jax.ShapeDtypeStruct((n, 2, c1), _F32)),
        compiler_params=_cparams(("parallel",),
                                 _nbytes((tt, bank_out), (tt, c1),
                                         prep["c1w"].shape)),
    )(y0, bn0, prep["c1w"], prep["c1b"])
    bn1 = _finish_bn(st1, n * t, prep["bn_g"][1], prep["bn_b"][1])

    # ---- K3: BN1 + ReLU + conv2 ----
    y2, st2 = pl.pallas_call(
        functools.partial(mid_conv_kernel, T=t, pool=False),
        grid=(n,),
        in_specs=[pl.BlockSpec((1, tt, c1), lambda i: (i, 0, 0)),
                  _full(bn1), _full(prep["c2w"]), _full(prep["c2b"])],
        out_specs=(pl.BlockSpec((1, tt, d), lambda i: (i, 0, 0)),
                   pl.BlockSpec((1, 2, d), lambda i: (i, 0, 0))),
        out_shape=(jax.ShapeDtypeStruct((n, tt, d), _F32),
                   jax.ShapeDtypeStruct((n, 2, d), _F32)),
        compiler_params=_cparams(("parallel",),
                                 _nbytes((tt, c1), (tt, d), prep["c2w"].shape)),
    )(y1, bn1, prep["c2w"], prep["c2b"])
    bn2 = _finish_bn(st2, n * t, prep["bn_g"][2], prep["bn_b"][2])

    # ---- K4: BN2 + residual + highway + rnn_residual + GRU x-projection ----
    # Time-major flattening so the GRU streams contiguous (N, .) slabs per step
    # (removes the big (N,T,6H)/(N,T,2H) XLA transposes of xproj/rnn_residual).
    rows = tt * n
    y2_tm = jnp.transpose(y2, (1, 0, 2)).reshape(rows, d)
    x_tm = jnp.transpose(x_pad, (1, 0, 2)).reshape(rows, cin)
    rt = _pick_row_tile(rows)
    rr, xp = pl.pallas_call(
        functools.partial(trunk_tail_kernel, use_proj=cfg["use_proj"],
                          num_hw_layers=4),
        grid=(rows // rt,),
        in_specs=[pl.BlockSpec((rt, d), lambda i: (i, 0)),
                  pl.BlockSpec((rt, cin), lambda i: (i, 0)),
                  _full(bn2), _full(prep["pw"]), _full(prep["pb"]),
                  _full(prep["hw_w"]), _full(prep["hw_b"]),
                  _full(prep["rrw"]), _full(prep["rrb"]),
                  _full(prep["wih"]), _full(prep["bih"])],
        out_specs=(pl.BlockSpec((2, rt, h), lambda i: (0, i, 0)),
                   pl.BlockSpec((2, rt, 3 * h), lambda i: (0, i, 0))),
        out_shape=(jax.ShapeDtypeStruct((2, rows, h), _F32),
                   jax.ShapeDtypeStruct((2, rows, 3 * h), _F32)),
        compiler_params=_cparams(("parallel",),
                                 _nbytes((rt, d), (rt, cin), (rt, 8 * h),
                                         prep["hw_w"].shape)),
    )(y2_tm, x_tm, bn2, prep["pw"], prep["pb"], prep["hw_w"], prep["hw_b"],
      prep["rrw"], prep["rrb"], prep["wih"], prep["bih"])

    # ---- K5: bidirectional masked GRU (fwd/bwd on the parallel grid axis) ----
    xp4 = xp.reshape(2, tt, n, 3 * h)
    rr4 = rr.reshape(2, tt, n, h)
    mask = (jnp.arange(tt)[:, None] < lengths[None, :]).astype(_F32)[:, :, None]

    def tmap(dd, j):           # per-direction time-block order (bwd reversed)
        return (1 - dd) * j + dd * (nb - 1 - j)

    o = pl.pallas_call(
        bigru_kernel,
        grid=(2, nb),
        in_specs=[
            pl.BlockSpec((1, tb, n, 3 * h), lambda dd, j: (dd, tmap(dd, j), 0, 0)),
            pl.BlockSpec((1, tb, n, h), lambda dd, j: (dd, tmap(dd, j), 0, 0)),
            pl.BlockSpec((tb, n, 1), lambda dd, j: (tmap(dd, j), 0, 0)),
            pl.BlockSpec((1, h, 3 * h), lambda dd, j: (dd, 0, 0)),
            pl.BlockSpec((1, 1, h), lambda dd, j: (dd, 0, 0)),
        ],
        out_specs=pl.BlockSpec((1, tb, n, h),
                               lambda dd, j: (dd, tmap(dd, j), 0, 0)),
        out_shape=jax.ShapeDtypeStruct((2, tt, n, h), _F32),
        scratch_shapes=[pltpu.VMEM((n, h), _F32)],
        compiler_params=_cparams(("parallel", "arbitrary"),
                                 _nbytes((tb, n, 3 * h), (tb, n, h),
                                         (h, 3 * h))),
    )(xp4, rr4, mask, prep["whh"], prep["bhn"])

    out = jnp.concatenate([o[0], o[1]], axis=-1)      # (TT, N, 2H)
    return jnp.transpose(out, (1, 0, 2))[:, :t, :]    # (N, T, 2*gru_dim)


# ----------------------------------- main ---------------------------------------

if __name__ == "__main__":
    # Small demo shapes; production configs should use channel dims that are
    # multiples of 128 for lane-dense MXU/store paths.
    N, T = 2, 8
    input_dim = 16
    conv_bank_dim = 16
    conv_dim1 = 32
    conv_dim2 = 32
    gru_dim = 32              # must equal conv_dim2 (residual add)
    num_filters = 4

    key = jax.random.PRNGKey(0)
    pkey, xkey = jax.random.split(key)
    raw = init_params(pkey, input_dim, conv_bank_dim, conv_dim1, conv_dim2,
                      gru_dim, num_filters)
    prep = prepare_params(raw)            # one-time weight re-layout

    x = jax.random.normal(xkey, (N, T, input_dim), _F32)
    lengths = jnp.array([8, 6], dtype=jnp.int32)   # sorted desc (pack_padded req.)

    fwd = jax.jit(functools.partial(cbhg_forward, prep))
    out = jax.block_until_ready(fwd(x, lengths))
    assert out.shape == (N, T, 2 * gru_dim), out.shape
    assert bool(jnp.all(jnp.isfinite(out)))
    print("KERNEL_OK")
</pallas_src>

<mosaic_0001>
module attributes {stable_mosaic.version = 11 : i64} {
  func.func @bank_kernel(%arg0: i32, %arg1: memref<1x16x16xf32, #tpu.memory_space<vmem>>, %arg2: memref<4x16x64xbf16, #tpu.memory_space<vmem>>, %arg3: memref<1x64xf32, #tpu.memory_space<vmem>>, %arg4: memref<1x16x64xf32, #tpu.memory_space<vmem>>, %arg5: memref<1x2x64xf32, #tpu.memory_space<vmem>>) attributes {dimension_semantics = [#tpu.dimension_semantics<parallel>], iteration_bounds = array<i64: 2>, scalar_prefetch = 0 : i64, scratch_operands = 0 : i64, tpu.core_type = #tpu.core_type<tc>, window_params = [{transform_indices = @transform_0, window_bounds = array<i64: 1, 16, 16>}, {pipeline_mode = #tpu.pipeline_mode<synchronous>, transform_indices = @transform_1, window_bounds = array<i64: 4, 16, 64>}, {pipeline_mode = #tpu.pipeline_mode<synchronous>, transform_indices = @transform_2, window_bounds = array<i64: 1, 64>}, {transform_indices = @transform_3, window_bounds = array<i64: 1, 16, 64>}, {transform_indices = @transform_4, window_bounds = array<i64: 1, 2, 64>}]} {
    %c0 = arith.constant 0 : index
    %c0_0 = arith.constant 0 : index
    %c0_1 = arith.constant 0 : index
    %0 = vector.load %arg1[%c0, %c0_0, %c0_1] : memref<1x16x16xf32, #tpu.memory_space<vmem>>, vector<1x16x16xf32>
    %1 = vector.shape_cast %0 : vector<1x16x16xf32> to vector<16x16xf32>
    %2 = arith.truncf %1 : vector<16x16xf32> to vector<16x16xbf16>
    %cst = arith.constant 0.000000e+00 : f32
    %3 = vector.broadcast %cst : f32 to vector<16x64xf32>
    %c0_2 = arith.constant 0 : index
    %c0_3 = arith.constant 0 : index
    %c0_4 = arith.constant 0 : index
    %4 = vector.load %arg2[%c0_2, %c0_3, %c0_4] : memref<4x16x64xbf16, #tpu.memory_space<vmem>>, vector<1x16x64xbf16>
    %5 = vector.shape_cast %4 : vector<1x16x64xbf16> to vector<16x64xbf16>
    %cst_5 = arith.constant dense<0.000000e+00> : vector<16x64xf32>
    %6 = tpu.matmul %2, %5, %cst_5 {dimension_numbers = #tpu.dot_dimension_numbers<[1], [0], [0], [1], [0, 0, 1, 1], [], []>} : vector<16x16xbf16>, vector<16x64xbf16>, vector<16x64xf32> -> vector<16x64xf32>
    %cst_6 = arith.constant 0.000000e+00 : f32
    %7 = vector.broadcast %cst_6 : f32 to vector<2x64xf32>
    %8 = vector.extract_strided_slice %6 {offsets = [0, 0], sizes = [14, 64], strides = [1, 1]} : vector<16x64xf32> to vector<14x64xf32>
    %9 = tpu.concatenate %7, %8 in 0 : vector<2x64xf32>, vector<14x64xf32> -> vector<16x64xf32>
    %10 = arith.addf %3, %9 : vector<16x64xf32>
    %c1 = arith.constant 1 : index
    %c0_7 = arith.constant 0 : index
    %c0_8 = arith.constant 0 : index
    %11 = vector.load %arg2[%c1, %c0_7, %c0_8] : memref<4x16x64xbf16, #tpu.memory_space<vmem>>, vector<1x16x64xbf16>
    %12 = vector.shape_cast %11 : vector<1x16x64xbf16> to vector<16x64xbf16>
    %cst_9 = arith.constant dense<0.000000e+00> : vector<16x64xf32>
    %13 = tpu.matmul %2, %12, %cst_9 {dimension_numbers = #tpu.dot_dimension_numbers<[1], [0], [0], [1], [0, 0, 1, 1], [], []>} : vector<16x16xbf16>, vector<16x64xbf16>, vector<16x64xf32> -> vector<16x64xf32>
    %cst_10 = arith.constant 0.000000e+00 : f32
    %14 = vector.broadcast %cst_10 : f32 to vector<1x64xf32>
    %15 = vector.extract_strided_slice %13 {offsets = [0, 0], sizes = [15, 64], strides = [1, 1]} : vector<16x64xf32> to vector<15x64xf32>
    %16 = tpu.concatenate %14, %15 in 0 : vector<1x64xf32>, vector<15x64xf32> -> vector<16x64xf32>
    %17 = arith.addf %10, %16 : vector<16x64xf32>
    %c2 = arith.constant 2 : index
    %c0_11 = arith.constant 0 : index
    %c0_12 = arith.constant 0 : index
    %18 = vector.load %arg2[%c2, %c0_11, %c0_12] : memref<4x16x64xbf16, #tpu.memory_space<vmem>>, vector<1x16x64xbf16>
    %19 = vector.shape_cast %18 : vector<1x16x64xbf16> to vector<16x64xbf16>
    %cst_13 = arith.constant dense<0.000000e+00> : vector<16x64xf32>
    %20 = tpu.matmul %2, %19, %cst_13 {dimension_numbers = #tpu.dot_dimension_numbers<[1], [0], [0], [1], [0, 0, 1, 1], [], []>} : vector<16x16xbf16>, vector<16x64xbf16>, vector<16x64xf32> -> vector<16x64xf32>
    %21 = arith.addf %17, %20 : vector<16x64xf32>
    %c3 = arith.constant 3 : index
    %c0_14 = arith.constant 0 : index
    %c0_15 = arith.constant 0 : index
    %22 = vector.load %arg2[%c3, %c0_14, %c0_15] : memref<4x16x64xbf16, #tpu.memory_space<vmem>>, vector<1x16x64xbf16>
    %23 = vector.shape_cast %22 : vector<1x16x64xbf16> to vector<16x64xbf16>
    %cst_16 = arith.constant dense<0.000000e+00> : vector<16x64xf32>
    %24 = tpu.matmul %2, %23, %cst_16 {dimension_numbers = #tpu.dot_dimension_numbers<[1], [0], [0], [1], [0, 0, 1, 1], [], []>} : vector<16x16xbf16>, vector<16x64xbf16>, vector<16x64xf32> -> vector<16x64xf32>
    %cst_17 = arith.constant 0.000000e+00 : f32
    %25 = vector.broadcast %cst_17 : f32 to vector<1x64xf32>
    %26 = vector.extract_strided_slice %24 {offsets = [1, 0], sizes = [15, 64], strides = [1, 1]} : vector<16x64xf32> to vector<15x64xf32>
    %27 = tpu.concatenate %26, %25 in 0 : vector<15x64xf32>, vector<1x64xf32> -> vector<16x64xf32>
    %28 = arith.addf %21, %27 : vector<16x64xf32>
    %c0_18 = arith.constant 0 : index
    %c0_19 = arith.constant 0 : index
    %29 = vector.load %arg3[%c0_18, %c0_19] : memref<1x64xf32, #tpu.memory_space<vmem>>, vector<1x64xf32>
    %30 = vector.broadcast %29 : vector<1x64xf32> to vector<16x64xf32>
    %31 = arith.addf %28, %30 : vector<16x64xf32>
    %c0_20 = arith.constant 0 : index
    %c0_21 = arith.constant 0 : index
    %c0_22 = arith.constant 0 : index
    %32 = vector.load %arg4[%c0_20, %c0_21, %c0_22] : memref<1x16x64xf32, #tpu.memory_space<vmem>>, vector<1x16x64xf32>
    %33 = vector.shape_cast %32 : vector<1x16x64xf32> to vector<16x64xf32>
    %34 = vector.shape_cast %31 : vector<16x64xf32> to vector<1x16x64xf32>
    tpu.vector_store %arg4[%c0_20, %c0_21, %c0_22], %34 {strides = array<i32>} : memref<1x16x64xf32, #tpu.memory_space<vmem>>, vector<1x16x64xf32>,
    %35 = tpu.iota {dimensions = array<i32: 0>} : vector<16x1xi32>
    %c9_i32 = arith.constant 9 : i32
    %36 = vector.broadcast %c9_i32 : i32 to vector<16x1xi32>
    %37 = arith.cmpi slt, %35, %36 : vector<16x1xi32>
    %38 = arith.extui %37 : vector<16x1xi1> to vector<16x1xi32>
    %39 = arith.sitofp %38 : vector<16x1xi32> to vector<16x1xf32>
    %40 = vector.broadcast %39 : vector<16x1xf32> to vector<16x64xf32>
    %41 = arith.mulf %31, %40 : vector<16x64xf32>
    %cst_23 = arith.constant dense<0.000000e+00> : vector<64xf32>
    %42 = vector.multi_reduction <add>, %41, %cst_23 [0] : vector<16x64xf32> to vector<64xf32>
    %43 = vector.shape_cast %42 : vector<64xf32> to vector<1x64xf32>
    %44 = arith.mulf %41, %31 : vector<16x64xf32>
    %cst_24 = arith.constant dense<0.000000e+00> : vector<64xf32>
    %45 = vector.multi_reduction <add>, %44, %cst_24 [0] : vector<16x64xf32> to vector<64xf32>
    %46 = vector.shape_cast %45 : vector<64xf32> to vector<1x64xf32>
    %47 = tpu.concatenate %43, %46 in 0 : vector<1x64xf32>, vector<1x64xf32> -> vector<2x64xf32>
    %c0_25 = arith.constant 0 : index
    %c0_26 = arith.constant 0 : index
    %c0_27 = arith.constant 0 : index
    %48 = vector.load %arg5[%c0_25, %c0_26, %c0_27] : memref<1x2x64xf32, #tpu.memory_space<vmem>>, vector<1x2x64xf32>
    %49 = vector.shape_cast %48 : vector<1x2x64xf32> to vector<2x64xf32>
    %50 = vector.shape_cast %47 : vector<2x64xf32> to vector<1x2x64xf32>
    tpu.vector_store %arg5[%c0_25, %c0_26, %c0_27], %50 {strides = array<i32>} : memref<1x2x64xf32, #tpu.memory_space<vmem>>, vector<1x2x64xf32>,
    return
  }
  func.func @transform_0(%arg0: i32) -> (i32, i32, i32) {
    %c0_i32 = arith.constant 0 : i32
    %c0_i32_0 = arith.constant 0 : i32
    %c0_i32_1 = arith.constant 0 : i32
    return %arg0, %c0_i32, %c0_i32_0 : i32, i32, i32
  }
  func.func @transform_1(%arg0: i32) -> (i32, i32, i32) {
    %c0_i32 = arith.constant 0 : i32
    %c0_i32_0 = arith.constant 0 : i32
    %c0_i32_1 = arith.constant 0 : i32
    %c0_i32_2 = arith.constant 0 : i32
    return %c0_i32, %c0_i32_0, %c0_i32_1 : i32, i32, i32
  }
  func.func @transform_2(%arg0: i32) -> (i32, i32) {
    %c0_i32 = arith.constant 0 : i32
    %c0_i32_0 = arith.constant 0 : i32
    %c0_i32_1 = arith.constant 0 : i32
    return %c0_i32, %c0_i32_0 : i32, i32
  }
  func.func @transform_3(%arg0: i32) -> (i32, i32, i32) {
    %c0_i32 = arith.constant 0 : i32
    %c0_i32_0 = arith.constant 0 : i32
    %c0_i32_1 = arith.constant 0 : i32
    return %arg0, %c0_i32, %c0_i32_0 : i32, i32, i32
  }
  func.func @transform_4(%arg0: i32) -> (i32, i32, i32) {
    %c0_i32 = arith.constant 0 : i32
    %c0_i32_0 = arith.constant 0 : i32
    %c0_i32_1 = arith.constant 0 : i32
    return %arg0, %c0_i32, %c0_i32_0 : i32, i32, i32
  }
}

module attributes {stable_mosaic.version = 11 : i64} {
  func.func @mid_conv_kernel(%arg0: i32, %arg1: memref<1x16x64xf32, #tpu.memory_space<vmem>>, %arg2: memref<2x64xf32, #tpu.memory_space<vmem>>, %arg3: memref<3x64x32xbf16, #tpu.memory_space<vmem>>, %arg4: memref<1x32xf32, #tpu.memory_space<vmem>>, %arg5: memref<1x16x32xf32, #tpu.memory_space<vmem>>, %arg6: memref<1x2x32xf32, #tpu.memory_space<vmem>>) attributes {dimension_semantics = [#tpu.dimension_semantics<parallel>], iteration_bounds = array<i64: 2>, scalar_prefetch = 0 : i64, scratch_operands = 0 : i64, tpu.core_type = #tpu.core_type<tc>, window_params = [{transform_indices = @transform_0, window_bounds = array<i64: 1, 16, 64>}, {pipeline_mode = #tpu.pipeline_mode<synchronous>, transform_indices = @transform_1, window_bounds = array<i64: 2, 64>}, {pipeline_mode = #tpu.pipeline_mode<synchronous>, transform_indices = @transform_2, window_bounds = array<i64: 3, 64, 32>}, {pipeline_mode = #tpu.pipeline_mode<synchronous>, transform_indices = @transform_3, window_bounds = array<i64: 1, 32>}, {transform_indices = @transform_4, window_bounds = array<i64: 1, 16, 32>}, {transform_indices = @transform_5, window_bounds = array<i64: 1, 2, 32>}]} {
    %c0 = arith.constant 0 : index
    %c0_0 = arith.constant 0 : index
    %c0_1 = arith.constant 0 : index
    %0 = vector.load %arg1[%c0, %c0_0, %c0_1] : memref<1x16x64xf32, #tpu.memory_space<vmem>>, vector<1x16x64xf32>
    %1 = vector.shape_cast %0 : vector<1x16x64xf32> to vector<16x64xf32>
    %c0_2 = arith.constant 0 : index
    %c0_3 = arith.constant 0 : index
    %2 = vector.load %arg2[%c0_2, %c0_3] : memref<2x64xf32, #tpu.memory_space<vmem>>, vector<1x64xf32>
    %3 = vector.broadcast %2 : vector<1x64xf32> to vector<16x64xf32>
    %4 = arith.mulf %1, %3 : vector<16x64xf32>
    %c1 = arith.constant 1 : index
    %c0_4 = arith.constant 0 : index
    %5 = vector.load %arg2[%c1, %c0_4] : memref<2x64xf32, #tpu.memory_space<vmem>>, vector<1x64xf32>
    %6 = vector.broadcast %5 : vector<1x64xf32> to vector<16x64xf32>
    %7 = arith.addf %4, %6 : vector<16x64xf32>
    %cst = arith.constant 0.000000e+00 : f32
    %8 = vector.broadcast %cst : f32 to vector<16x64xf32>
    %9 = arith.maximumf %7, %8 : vector<16x64xf32>
    %cst_5 = arith.constant 0.000000e+00 : f32
    %10 = vector.broadcast %cst_5 : f32 to vector<1x64xf32>
    %11 = vector.extract_strided_slice %9 {offsets = [1, 0], sizes = [15, 64], strides = [1, 1]} : vector<16x64xf32> to vector<15x64xf32>
    %12 = tpu.concatenate %11, %10 in 0 : vector<15x64xf32>, vector<1x64xf32> -> vector<16x64xf32>
    %13 = arith.maximumf %9, %12 : vector<16x64xf32>
    %14 = tpu.iota {dimensions = array<i32: 0>} : vector<16x1xi32>
    %c8_i32 = arith.constant 8 : i32
    %15 = vector.broadcast %c8_i32 : i32 to vector<16x1xi32>
    %16 = arith.cmpi slt, %14, %15 : vector<16x1xi32>
    %17 = arith.extui %16 : vector<16x1xi1> to vector<16x1xi32>
    %18 = arith.sitofp %17 : vector<16x1xi32> to vector<16x1xf32>
    %19 = vector.broadcast %18 : vector<16x1xf32> to vector<16x64xf32>
    %20 = arith.mulf %13, %19 : vector<16x64xf32>
    %21 = arith.truncf %20 : vector<16x64xf32> to vector<16x64xbf16>
    %c0_6 = arith.constant 0 : index
    %c0_7 = arith.constant 0 : index
    %c0_8 = arith.constant 0 : index
    %22 = vector.load %arg3[%c0_6, %c0_7, %c0_8] : memref<3x64x32xbf16, #tpu.memory_space<vmem>>, vector<1x64x32xbf16>
    %23 = vector.shape_cast %22 : vector<1x64x32xbf16> to vector<64x32xbf16>
    %cst_9 = arith.constant dense<0.000000e+00> : vector<16x32xf32>
    %24 = tpu.matmul %21, %23, %cst_9 {dimension_numbers = #tpu.dot_dimension_numbers<[1], [0], [0], [1], [0, 0, 1, 1], [], []>} : vector<16x64xbf16>, vector<64x32xbf16>, vector<16x32xf32> -> vector<16x32xf32>
    %c1_10 = arith.constant 1 : index
    %c0_11 = arith.constant 0 : index
    %c0_12 = arith.constant 0 : index
    %25 = vector.load %arg3[%c1_10, %c0_11, %c0_12] : memref<3x64x32xbf16, #tpu.memory_space<vmem>>, vector<1x64x32xbf16>
    %26 = vector.shape_cast %25 : vector<1x64x32xbf16> to vector<64x32xbf16>
    %cst_13 = arith.constant dense<0.000000e+00> : vector<16x32xf32>
    %27 = tpu.matmul %21, %26, %cst_13 {dimension_numbers = #tpu.dot_dimension_numbers<[1], [0], [0], [1], [0, 0, 1, 1], [], []>} : vector<16x64xbf16>, vector<64x32xbf16>, vector<16x32xf32> -> vector<16x32xf32>
    %c2 = arith.constant 2 : index
    %c0_14 = arith.constant 0 : index
    %c0_15 = arith.constant 0 : index
    %28 = vector.load %arg3[%c2, %c0_14, %c0_15] : memref<3x64x32xbf16, #tpu.memory_space<vmem>>, vector<1x64x32xbf16>
    %29 = vector.shape_cast %28 : vector<1x64x32xbf16> to vector<64x32xbf16>
    %cst_16 = arith.constant dense<0.000000e+00> : vector<16x32xf32>
    %30 = tpu.matmul %21, %29, %cst_16 {dimension_numbers = #tpu.dot_dimension_numbers<[1], [0], [0], [1], [0, 0, 1, 1], [], []>} : vector<16x64xbf16>, vector<64x32xbf16>, vector<16x32xf32> -> vector<16x32xf32>
    %cst_17 = arith.constant 0.000000e+00 : f32
    %31 = vector.broadcast %cst_17 : f32 to vector<1x32xf32>
    %32 = vector.extract_strided_slice %24 {offsets = [0, 0], sizes = [15, 32], strides = [1, 1]} : vector<16x32xf32> to vector<15x32xf32>
    %33 = tpu.concatenate %31, %32 in 0 : vector<1x32xf32>, vector<15x32xf32> -> vector<16x32xf32>
    %34 = arith.addf %33, %27 : vector<16x32xf32>
    %cst_18 = arith.constant 0.000000e+00 : f32
    %35 = vector.broadcast %cst_18 : f32 to vector<1x32xf32>
    %36 = vector.extract_strided_slice %30 {offsets = [1, 0], sizes = [15, 32], strides = [1, 1]} : vector<16x32xf32> to vector<15x32xf32>
    %37 = tpu.concatenate %36, %35 in 0 : vector<15x32xf32>, vector<1x32xf32> -> vector<16x32xf32>
    %38 = arith.addf %34, %37 : vector<16x32xf32>
    %c0_19 = arith.constant 0 : index
    %c0_20 = arith.constant 0 : index
    %39 = vector.load %arg4[%c0_19, %c0_20] : memref<1x32xf32, #tpu.memory_space<vmem>>, vector<1x32xf32>
    %40 = vector.broadcast %39 : vector<1x32xf32> to vector<16x32xf32>
    %41 = arith.addf %38, %40 : vector<16x32xf32>
    %c0_21 = arith.constant 0 : index
    %c0_22 = arith.constant 0 : index
    %c0_23 = arith.constant 0 : index
    %42 = vector.load %arg5[%c0_21, %c0_22, %c0_23] : memref<1x16x32xf32, #tpu.memory_space<vmem>>, vector<1x16x32xf32>
    %43 = vector.shape_cast %42 : vector<1x16x32xf32> to vector<16x32xf32>
    %44 = vector.shape_cast %41 : vector<16x32xf32> to vector<1x16x32xf32>
    tpu.vector_store %arg5[%c0_21, %c0_22, %c0_23], %44 {strides = array<i32>} : memref<1x16x32xf32, #tpu.memory_space<vmem>>, vector<1x16x32xf32>,
    %45 = tpu.iota {dimensions = array<i32: 0>} : vector<16x1xi32>
    %c8_i32_24 = arith.constant 8 : i32
    %46 = vector.broadcast %c8_i32_24 : i32 to vector<16x1xi32>
    %47 = arith.cmpi slt, %45, %46 : vector<16x1xi32>
    %48 = arith.extui %47 : vector<16x1xi1> to vector<16x1xi32>
    %49 = arith.sitofp %48 : vector<16x1xi32> to vector<16x1xf32>
    %50 = vector.broadcast %49 : vector<16x1xf32> to vector<16x32xf32>
    %51 = arith.mulf %41, %50 : vector<16x32xf32>
    %cst_25 = arith.constant dense<0.000000e+00> : vector<32xf32>
    %52 = vector.multi_reduction <add>, %51, %cst_25 [0] : vector<16x32xf32> to vector<32xf32>
    %53 = vector.shape_cast %52 : vector<32xf32> to vector<1x32xf32>
    %54 = arith.mulf %51, %41 : vector<16x32xf32>
    %cst_26 = arith.constant dense<0.000000e+00> : vector<32xf32>
    %55 = vector.multi_reduction <add>, %54, %cst_26 [0] : vector<16x32xf32> to vector<32xf32>
    %56 = vector.shape_cast %55 : vector<32xf32> to vector<1x32xf32>
    %57 = tpu.concatenate %53, %56 in 0 : vector<1x32xf32>, vector<1x32xf32> -> vector<2x32xf32>
    %c0_27 = arith.constant 0 : index
    %c0_28 = arith.constant 0 : index
    %c0_29 = arith.constant 0 : index
    %58 = vector.load %arg6[%c0_27, %c0_28, %c0_29] : memref<1x2x32xf32, #tpu.memory_space<vmem>>, vector<1x2x32xf32>
    %59 = vector.shape_cast %58 : vector<1x2x32xf32> to vector<2x32xf32>
    %60 = vector.shape_cast %57 : vector<2x32xf32> to vector<1x2x32xf32>
    tpu.vector_store %arg6[%c0_27, %c0_28, %c0_29], %60 {strides = array<i32>} : memref<1x2x32xf32, #tpu.memory_space<vmem>>, vector<1x2x32xf32>,
    return
  }
  func.func @transform_0(%arg0: i32) -> (i32, i32, i32) {
    %c0_i32 = arith.constant 0 : i32
    %c0_i32_0 = arith.constant 0 : i32
    %c0_i32_1 = arith.constant 0 : i32
    return %arg0, %c0_i32, %c0_i32_0 : i32, i32, i32
  }
  func.func @transform_1(%arg0: i32) -> (i32, i32) {
    %c0_i32 = arith.constant 0 : i32
    %c0_i32_0 = arith.constant 0 : i32
    %c0_i32_1 = arith.constant 0 : i32
    return %c0_i32, %c0_i32_0 : i32, i32
  }
  func.func @transform_2(%arg0: i32) -> (i32, i32, i32) {
    %c0_i32 = arith.constant 0 : i32
    %c0_i32_0 = arith.constant 0 : i32
    %c0_i32_1 = arith.constant 0 : i32
    %c0_i32_2 = arith.constant 0 : i32
    return %c0_i32, %c0_i32_0, %c0_i32_1 : i32, i32, i32
  }
  func.func @transform_3(%arg0: i32) -> (i32, i32) {
    %c0_i32 = arith.constant 0 : i32
    %c0_i32_0 = arith.constant 0 : i32
    %c0_i32_1 = arith.constant 0 : i32
    return %c0_i32, %c0_i32_0 : i32, i32
  }
  func.func @transform_4(%arg0: i32) -> (i32, i32, i32) {
    %c0_i32 = arith.constant 0 : i32
    %c0_i32_0 = arith.constant 0 : i32
    %c0_i32_1 = arith.constant 0 : i32
    return %arg0, %c0_i32, %c0_i32_0 : i32, i32, i32
  }
  func.func @transform_5(%arg0: i32) -> (i32, i32, i32) {
    %c0_i32 = arith.constant 0 : i32
    %c0_i32_0 = arith.constant 0 : i32
    %c0_i32_1 = arith.constant 0 : i32
    return %arg0, %c0_i32, %c0_i32_0 : i32, i32, i32
  }
}

module attributes {stable_mosaic.version = 11 : i64} {
  func.func @mid_conv_kernel(%arg0: i32, %arg1: memref<1x16x32xf32, #tpu.memory_space<vmem>>, %arg2: memref<2x32xf32, #tpu.memory_space<vmem>>, %arg3: memref<3x32x32xbf16, #tpu.memory_space<vmem>>, %arg4: memref<1x32xf32, #tpu.memory_space<vmem>>, %arg5: memref<1x16x32xf32, #tpu.memory_space<vmem>>, %arg6: memref<1x2x32xf32, #tpu.memory_space<vmem>>) attributes {dimension_semantics = [#tpu.dimension_semantics<parallel>], iteration_bounds = array<i64: 2>, scalar_prefetch = 0 : i64, scratch_operands = 0 : i64, tpu.core_type = #tpu.core_type<tc>, window_params = [{transform_indices = @transform_0, window_bounds = array<i64: 1, 16, 32>}, {pipeline_mode = #tpu.pipeline_mode<synchronous>, transform_indices = @transform_1, window_bounds = array<i64: 2, 32>}, {pipeline_mode = #tpu.pipeline_mode<synchronous>, transform_indices = @transform_2, window_bounds = array<i64: 3, 32, 32>}, {pipeline_mode = #tpu.pipeline_mode<synchronous>, transform_indices = @transform_3, window_bounds = array<i64: 1, 32>}, {transform_indices = @transform_4, window_bounds = array<i64: 1, 16, 32>}, {transform_indices = @transform_5, window_bounds = array<i64: 1, 2, 32>}]} {
    %c0 = arith.constant 0 : index
    %c0_0 = arith.constant 0 : index
    %c0_1 = arith.constant 0 : index
    %0 = vector.load %arg1[%c0, %c0_0, %c0_1] : memref<1x16x32xf32, #tpu.memory_space<vmem>>, vector<1x16x32xf32>
    %1 = vector.shape_cast %0 : vector<1x16x32xf32> to vector<16x32xf32>
    %c0_2 = arith.constant 0 : index
    %c0_3 = arith.constant 0 : index
    %2 = vector.load %arg2[%c0_2, %c0_3] : memref<2x32xf32, #tpu.memory_space<vmem>>, vector<1x32xf32>
    %3 = vector.broadcast %2 : vector<1x32xf32> to vector<16x32xf32>
    %4 = arith.mulf %1, %3 : vector<16x32xf32>
    %c1 = arith.constant 1 : index
    %c0_4 = arith.constant 0 : index
    %5 = vector.load %arg2[%c1, %c0_4] : memref<2x32xf32, #tpu.memory_space<vmem>>, vector<1x32xf32>
    %6 = vector.broadcast %5 : vector<1x32xf32> to vector<16x32xf32>
    %7 = arith.addf %4, %6 : vector<16x32xf32>
    %cst = arith.constant 0.000000e+00 : f32
    %8 = vector.broadcast %cst : f32 to vector<16x32xf32>
    %9 = arith.maximumf %7, %8 : vector<16x32xf32>
    %10 = tpu.iota {dimensions = array<i32: 0>} : vector<16x1xi32>
    %c8_i32 = arith.constant 8 : i32
    %11 = vector.broadcast %c8_i32 : i32 to vector<16x1xi32>
    %12 = arith.cmpi slt, %10, %11 : vector<16x1xi32>
    %13 = arith.extui %12 : vector<16x1xi1> to vector<16x1xi32>
    %14 = arith.sitofp %13 : vector<16x1xi32> to vector<16x1xf32>
    %15 = vector.broadcast %14 : vector<16x1xf32> to vector<16x32xf32>
    %16 = arith.mulf %9, %15 : vector<16x32xf32>
    %17 = arith.truncf %16 : vector<16x32xf32> to vector<16x32xbf16>
    %c0_5 = arith.constant 0 : index
    %c0_6 = arith.constant 0 : index
    %c0_7 = arith.constant 0 : index
    %18 = vector.load %arg3[%c0_5, %c0_6, %c0_7] : memref<3x32x32xbf16, #tpu.memory_space<vmem>>, vector<1x32x32xbf16>
    %19 = vector.shape_cast %18 : vector<1x32x32xbf16> to vector<32x32xbf16>
    %cst_8 = arith.constant dense<0.000000e+00> : vector<16x32xf32>
    %20 = tpu.matmul %17, %19, %cst_8 {dimension_numbers = #tpu.dot_dimension_numbers<[1], [0], [0], [1], [0, 0, 1, 1], [], []>} : vector<16x32xbf16>, vector<32x32xbf16>, vector<16x32xf32> -> vector<16x32xf32>
    %c1_9 = arith.constant 1 : index
    %c0_10 = arith.constant 0 : index
    %c0_11 = arith.constant 0 : index
    %21 = vector.load %arg3[%c1_9, %c0_10, %c0_11] : memref<3x32x32xbf16, #tpu.memory_space<vmem>>, vector<1x32x32xbf16>
    %22 = vector.shape_cast %21 : vector<1x32x32xbf16> to vector<32x32xbf16>
    %cst_12 = arith.constant dense<0.000000e+00> : vector<16x32xf32>
    %23 = tpu.matmul %17, %22, %cst_12 {dimension_numbers = #tpu.dot_dimension_numbers<[1], [0], [0], [1], [0, 0, 1, 1], [], []>} : vector<16x32xbf16>, vector<32x32xbf16>, vector<16x32xf32> -> vector<16x32xf32>
    %c2 = arith.constant 2 : index
    %c0_13 = arith.constant 0 : index
    %c0_14 = arith.constant 0 : index
    %24 = vector.load %arg3[%c2, %c0_13, %c0_14] : memref<3x32x32xbf16, #tpu.memory_space<vmem>>, vector<1x32x32xbf16>
    %25 = vector.shape_cast %24 : vector<1x32x32xbf16> to vector<32x32xbf16>
    %cst_15 = arith.constant dense<0.000000e+00> : vector<16x32xf32>
    %26 = tpu.matmul %17, %25, %cst_15 {dimension_numbers = #tpu.dot_dimension_numbers<[1], [0], [0], [1], [0, 0, 1, 1], [], []>} : vector<16x32xbf16>, vector<32x32xbf16>, vector<16x32xf32> -> vector<16x32xf32>
    %cst_16 = arith.constant 0.000000e+00 : f32
    %27 = vector.broadcast %cst_16 : f32 to vector<1x32xf32>
    %28 = vector.extract_strided_slice %20 {offsets = [0, 0], sizes = [15, 32], strides = [1, 1]} : vector<16x32xf32> to vector<15x32xf32>
    %29 = tpu.concatenate %27, %28 in 0 : vector<1x32xf32>, vector<15x32xf32> -> vector<16x32xf32>
    %30 = arith.addf %29, %23 : vector<16x32xf32>
    %cst_17 = arith.constant 0.000000e+00 : f32
    %31 = vector.broadcast %cst_17 : f32 to vector<1x32xf32>
    %32 = vector.extract_strided_slice %26 {offsets = [1, 0], sizes = [15, 32], strides = [1, 1]} : vector<16x32xf32> to vector<15x32xf32>
    %33 = tpu.concatenate %32, %31 in 0 : vector<15x32xf32>, vector<1x32xf32> -> vector<16x32xf32>
    %34 = arith.addf %30, %33 : vector<16x32xf32>
    %c0_18 = arith.constant 0 : index
    %c0_19 = arith.constant 0 : index
    %35 = vector.load %arg4[%c0_18, %c0_19] : memref<1x32xf32, #tpu.memory_space<vmem>>, vector<1x32xf32>
    %36 = vector.broadcast %35 : vector<1x32xf32> to vector<16x32xf32>
    %37 = arith.addf %34, %36 : vector<16x32xf32>
    %c0_20 = arith.constant 0 : index
    %c0_21 = arith.constant 0 : index
    %c0_22 = arith.constant 0 : index
    %38 = vector.load %arg5[%c0_20, %c0_21, %c0_22] : memref<1x16x32xf32, #tpu.memory_space<vmem>>, vector<1x16x32xf32>
    %39 = vector.shape_cast %38 : vector<1x16x32xf32> to vector<16x32xf32>
    %40 = vector.shape_cast %37 : vector<16x32xf32> to vector<1x16x32xf32>
    tpu.vector_store %arg5[%c0_20, %c0_21, %c0_22], %40 {strides = array<i32>} : memref<1x16x32xf32, #tpu.memory_space<vmem>>, vector<1x16x32xf32>,
    %41 = tpu.iota {dimensions = array<i32: 0>} : vector<16x1xi32>
    %c8_i32_23 = arith.constant 8 : i32
    %42 = vector.broadcast %c8_i32_23 : i32 to vector<16x1xi32>
    %43 = arith.cmpi slt, %41, %42 : vector<16x1xi32>
    %44 = arith.extui %43 : vector<16x1xi1> to vector<16x1xi32>
    %45 = arith.sitofp %44 : vector<16x1xi32> to vector<16x1xf32>
    %46 = vector.broadcast %45 : vector<16x1xf32> to vector<16x32xf32>
    %47 = arith.mulf %37, %46 : vector<16x32xf32>
    %cst_24 = arith.constant dense<0.000000e+00> : vector<32xf32>
    %48 = vector.multi_reduction <add>, %47, %cst_24 [0] : vector<16x32xf32> to vector<32xf32>
    %49 = vector.shape_cast %48 : vector<32xf32> to vector<1x32xf32>
    %50 = arith.mulf %47, %37 : vector<16x32xf32>
    %cst_25 = arith.constant dense<0.000000e+00> : vector<32xf32>
    %51 = vector.multi_reduction <add>, %50, %cst_25 [0] : vector<16x32xf32> to vector<32xf32>
    %52 = vector.shape_cast %51 : vector<32xf32> to vector<1x32xf32>
    %53 = tpu.concatenate %49, %52 in 0 : vector<1x32xf32>, vector<1x32xf32> -> vector<2x32xf32>
    %c0_26 = arith.constant 0 : index
    %c0_27 = arith.constant 0 : index
    %c0_28 = arith.constant 0 : index
    %54 = vector.load %arg6[%c0_26, %c0_27, %c0_28] : memref<1x2x32xf32, #tpu.memory_space<vmem>>, vector<1x2x32xf32>
    %55 = vector.shape_cast %54 : vector<1x2x32xf32> to vector<2x32xf32>
    %56 = vector.shape_cast %53 : vector<2x32xf32> to vector<1x2x32xf32>
    tpu.vector_store %arg6[%c0_26, %c0_27, %c0_28], %56 {strides = array<i32>} : memref<1x2x32xf32, #tpu.memory_space<vmem>>, vector<1x2x32xf32>,
    return
  }
  func.func @transform_0(%arg0: i32) -> (i32, i32, i32) {
    %c0_i32 = arith.constant 0 : i32
    %c0_i32_0 = arith.constant 0 : i32
    %c0_i32_1 = arith.constant 0 : i32
    return %arg0, %c0_i32, %c0_i32_0 : i32, i32, i32
  }
  func.func @transform_1(%arg0: i32) -> (i32, i32) {
    %c0_i32 = arith.constant 0 : i32
    %c0_i32_0 = arith.constant 0 : i32
    %c0_i32_1 = arith.constant 0 : i32
    return %c0_i32, %c0_i32_0 : i32, i32
  }
  func.func @transform_2(%arg0: i32) -> (i32, i32, i32) {
    %c0_i32 = arith.constant 0 : i32
    %c0_i32_0 = arith.constant 0 : i32
    %c0_i32_1 = arith.constant 0 : i32
    %c0_i32_2 = arith.constant 0 : i32
    return %c0_i32, %c0_i32_0, %c0_i32_1 : i32, i32, i32
  }
  func.func @transform_3(%arg0: i32) -> (i32, i32) {
    %c0_i32 = arith.constant 0 : i32
    %c0_i32_0 = arith.constant 0 : i32
    %c0_i32_1 = arith.constant 0 : i32
    return %c0_i32, %c0_i32_0 : i32, i32
  }
  func.func @transform_4(%arg0: i32) -> (i32, i32, i32) {
    %c0_i32 = arith.constant 0 : i32
    %c0_i32_0 = arith.constant 0 : i32
    %c0_i32_1 = arith.constant 0 : i32
    return %arg0, %c0_i32, %c0_i32_0 : i32, i32, i32
  }
  func.func @transform_5(%arg0: i32) -> (i32, i32, i32) {
    %c0_i32 = arith.constant 0 : i32
    %c0_i32_0 = arith.constant 0 : i32
    %c0_i32_1 = arith.constant 0 : i32
    return %arg0, %c0_i32, %c0_i32_0 : i32, i32, i32
  }
}

module attributes {stable_mosaic.version = 11 : i64} {
  func.func @trunk_tail_kernel(%arg0: i32, %arg1: memref<32x32xf32, #tpu.memory_space<vmem>>, %arg2: memref<32x16xf32, #tpu.memory_space<vmem>>, %arg3: memref<2x32xf32, #tpu.memory_space<vmem>>, %arg4: memref<16x32xbf16, #tpu.memory_space<vmem>>, %arg5: memref<1x32xf32, #tpu.memory_space<vmem>>, %arg6: memref<4x32x96xbf16, #tpu.memory_space<vmem>>, %arg7: memref<4x1x96xf32, #tpu.memory_space<vmem>>, %arg8: memref<32x64xbf16, #tpu.memory_space<vmem>>, %arg9: memref<1x64xf32, #tpu.memory_space<vmem>>, %arg10: memref<32x192xbf16, #tpu.memory_space<vmem>>, %arg11: memref<1x192xf32, #tpu.memory_space<vmem>>, %arg12: memref<2x32x32xf32, #tpu.memory_space<vmem>>, %arg13: memref<2x32x96xf32, #tpu.memory_space<vmem>>) attributes {dimension_semantics = [#tpu.dimension_semantics<parallel>], iteration_bounds = array<i64: 1>, scalar_prefetch = 0 : i64, scratch_operands = 0 : i64, tpu.core_type = #tpu.core_type<tc>, window_params = [{transform_indices = @transform_0, window_bounds = array<i64: 32, 32>}, {transform_indices = @transform_1, window_bounds = array<i64: 32, 16>}, {pipeline_mode = #tpu.pipeline_mode<synchronous>, transform_indices = @transform_2, window_bounds = array<i64: 2, 32>}, {pipeline_mode = #tpu.pipeline_mode<synchronous>, transform_indices = @transform_3, window_bounds = array<i64: 16, 32>}, {pipeline_mode = #tpu.pipeline_mode<synchronous>, transform_indices = @transform_4, window_bounds = array<i64: 1, 32>}, {pipeline_mode = #tpu.pipeline_mode<synchronous>, transform_indices = @transform_5, window_bounds = array<i64: 4, 32, 96>}, {pipeline_mode = #tpu.pipeline_mode<synchronous>, transform_indices = @transform_6, window_bounds = array<i64: 4, 1, 96>}, {pipeline_mode = #tpu.pipeline_mode<synchronous>, transform_indices = @transform_7, window_bounds = array<i64: 32, 64>}, {pipeline_mode = #tpu.pipeline_mode<synchronous>, transform_indices = @transform_8, window_bounds = array<i64: 1, 64>}, {pipeline_mode = #tpu.pipeline_mode<synchronous>, transform_indices = @transform_9, window_bounds = array<i64: 32, 192>}, {pipeline_mode = #tpu.pipeline_mode<synchronous>, transform_indices = @transform_10, window_bounds = array<i64: 1, 192>}, {transform_indices = @transform_11, window_bounds = array<i64: 2, 32, 32>}, {transform_indices = @transform_12, window_bounds = array<i64: 2, 32, 96>}]} {
    %c0 = arith.constant 0 : index
    %c0_0 = arith.constant 0 : index
    %0 = vector.load %arg1[%c0, %c0_0] : memref<32x32xf32, #tpu.memory_space<vmem>>, vector<32x32xf32>
    %c0_1 = arith.constant 0 : index
    %c0_2 = arith.constant 0 : index
    %1 = vector.load %arg3[%c0_1, %c0_2] : memref<2x32xf32, #tpu.memory_space<vmem>>, vector<1x32xf32>
    %2 = vector.broadcast %1 : vector<1x32xf32> to vector<32x32xf32>
    %3 = arith.mulf %0, %2 : vector<32x32xf32>
    %c1 = arith.constant 1 : index
    %c0_3 = arith.constant 0 : index
    %4 = vector.load %arg3[%c1, %c0_3] : memref<2x32xf32, #tpu.memory_space<vmem>>, vector<1x32xf32>
    %5 = vector.broadcast %4 : vector<1x32xf32> to vector<32x32xf32>
    %6 = arith.addf %3, %5 : vector<32x32xf32>
    %c0_4 = arith.constant 0 : index
    %c0_5 = arith.constant 0 : index
    %7 = vector.load %arg2[%c0_4, %c0_5] : memref<32x16xf32, #tpu.memory_space<vmem>>, vector<32x16xf32>
    %8 = arith.truncf %7 : vector<32x16xf32> to vector<32x16xbf16>
    %c0_6 = arith.constant 0 : index
    %c0_7 = arith.constant 0 : index
    %9 = vector.load %arg4[%c0_6, %c0_7] : memref<16x32xbf16, #tpu.memory_space<vmem>>, vector<16x32xbf16>
    %cst = arith.constant dense<0.000000e+00> : vector<32x32xf32>
    %10 = tpu.matmul %8, %9, %cst {dimension_numbers = #tpu.dot_dimension_numbers<[1], [0], [0], [1], [0, 0, 1, 1], [], []>} : vector<32x16xbf16>, vector<16x32xbf16>, vector<32x32xf32> -> vector<32x32xf32>
    %c0_8 = arith.constant 0 : index
    %c0_9 = arith.constant 0 : index
    %11 = vector.load %arg5[%c0_8, %c0_9] : memref<1x32xf32, #tpu.memory_space<vmem>>, vector<1x32xf32>
    %12 = vector.broadcast %11 : vector<1x32xf32> to vector<32x32xf32>
    %13 = arith.addf %10, %12 : vector<32x32xf32>
    %14 = arith.addf %13, %6 : vector<32x32xf32>
    %15 = arith.truncf %14 : vector<32x32xf32> to vector<32x32xbf16>
    %c0_10 = arith.constant 0 : index
    %c0_11 = arith.constant 0 : index
    %c0_12 = arith.constant 0 : index
    %16 = vector.load %arg6[%c0_10, %c0_11, %c0_12] : memref<4x32x96xbf16, #tpu.memory_space<vmem>>, vector<1x32x96xbf16>
    %17 = vector.shape_cast %16 : vector<1x32x96xbf16> to vector<32x96xbf16>
    %cst_13 = arith.constant dense<0.000000e+00> : vector<32x96xf32>
    %18 = tpu.matmul %15, %17, %cst_13 {dimension_numbers = #tpu.dot_dimension_numbers<[1], [0], [0], [1], [0, 0, 1, 1], [], []>} : vector<32x32xbf16>, vector<32x96xbf16>, vector<32x96xf32> -> vector<32x96xf32>
    %c0_14 = arith.constant 0 : index
    %c0_15 = arith.constant 0 : index
    %c0_16 = arith.constant 0 : index
    %19 = vector.load %arg7[%c0_14, %c0_15, %c0_16] : memref<4x1x96xf32, #tpu.memory_space<vmem>>, vector<1x1x96xf32>
    %20 = vector.shape_cast %19 : vector<1x1x96xf32> to vector<1x96xf32>
    %21 = vector.broadcast %20 : vector<1x96xf32> to vector<32x96xf32>
    %22 = arith.addf %18, %21 : vector<32x96xf32>
    %23 = vector.extract_strided_slice %22 {offsets = [0, 0], sizes = [32, 32], strides = [1, 1]} : vector<32x96xf32> to vector<32x32xf32>
    %24 = arith.negf %23 : vector<32x32xf32>
    %25 = math.exp %24 : vector<32x32xf32>
    %cst_17 = arith.constant 1.000000e+00 : f32
    %26 = vector.broadcast %cst_17 : f32 to vector<32x32xf32>
    %27 = arith.addf %26, %25 : vector<32x32xf32>
    %28 = arith.divf %26, %27 : vector<32x32xf32>
    %29 = vector.extract_strided_slice %22 {offsets = [0, 32], sizes = [32, 32], strides = [1, 1]} : vector<32x96xf32> to vector<32x32xf32>
    %cst_18 = arith.constant 0.000000e+00 : f32
    %30 = vector.broadcast %cst_18 : f32 to vector<32x32xf32>
    %31 = arith.maximumf %29, %30 : vector<32x32xf32>
    %32 = arith.mulf %28, %31 : vector<32x32xf32>
    %cst_19 = arith.constant 1.000000e+00 : f32
    %33 = vector.broadcast %cst_19 : f32 to vector<32x32xf32>
    %34 = arith.subf %33, %28 : vector<32x32xf32>
    %35 = vector.extract_strided_slice %22 {offsets = [0, 64], sizes = [32, 32], strides = [1, 1]} : vector<32x96xf32> to vector<32x32xf32>
    %36 = arith.mulf %34, %35 : vector<32x32xf32>
    %37 = arith.addf %32, %36 : vector<32x32xf32>
    %38 = arith.truncf %37 : vector<32x32xf32> to vector<32x32xbf16>
    %c1_20 = arith.constant 1 : index
    %c0_21 = arith.constant 0 : index
    %c0_22 = arith.constant 0 : index
    %39 = vector.load %arg6[%c1_20, %c0_21, %c0_22] : memref<4x32x96xbf16, #tpu.memory_space<vmem>>, vector<1x32x96xbf16>
    %40 = vector.shape_cast %39 : vector<1x32x96xbf16> to vector<32x96xbf16>
    %cst_23 = arith.constant dense<0.000000e+00> : vector<32x96xf32>
    %41 = tpu.matmul %38, %40, %cst_23 {dimension_numbers = #tpu.dot_dimension_numbers<[1], [0], [0], [1], [0, 0, 1, 1], [], []>} : vector<32x32xbf16>, vector<32x96xbf16>, vector<32x96xf32> -> vector<32x96xf32>
    %c1_24 = arith.constant 1 : index
    %c0_25 = arith.constant 0 : index
    %c0_26 = arith.constant 0 : index
    %42 = vector.load %arg7[%c1_24, %c0_25, %c0_26] : memref<4x1x96xf32, #tpu.memory_space<vmem>>, vector<1x1x96xf32>
    %43 = vector.shape_cast %42 : vector<1x1x96xf32> to vector<1x96xf32>
    %44 = vector.broadcast %43 : vector<1x96xf32> to vector<32x96xf32>
    %45 = arith.addf %41, %44 : vector<32x96xf32>
    %46 = vector.extract_strided_slice %45 {offsets = [0, 0], sizes = [32, 32], strides = [1, 1]} : vector<32x96xf32> to vector<32x32xf32>
    %47 = arith.negf %46 : vector<32x32xf32>
    %48 = math.exp %47 : vector<32x32xf32>
    %cst_27 = arith.constant 1.000000e+00 : f32
    %49 = vector.broadcast %cst_27 : f32 to vector<32x32xf32>
    %50 = arith.addf %49, %48 : vector<32x32xf32>
    %51 = arith.divf %49, %50 : vector<32x32xf32>
    %52 = vector.extract_strided_slice %45 {offsets = [0, 32], sizes = [32, 32], strides = [1, 1]} : vector<32x96xf32> to vector<32x32xf32>
    %cst_28 = arith.constant 0.000000e+00 : f32
    %53 = vector.broadcast %cst_28 : f32 to vector<32x32xf32>
    %54 = arith.maximumf %52, %53 : vector<32x32xf32>
    %55 = arith.mulf %51, %54 : vector<32x32xf32>
    %cst_29 = arith.constant 1.000000e+00 : f32
    %56 = vector.broadcast %cst_29 : f32 to vector<32x32xf32>
    %57 = arith.subf %56, %51 : vector<32x32xf32>
    %58 = vector.extract_strided_slice %45 {offsets = [0, 64], sizes = [32, 32], strides = [1, 1]} : vector<32x96xf32> to vector<32x32xf32>
    %59 = arith.mulf %57, %58 : vector<32x32xf32>
    %60 = arith.addf %55, %59 : vector<32x32xf32>
    %61 = arith.truncf %60 : vector<32x32xf32> to vector<32x32xbf16>
    %c2 = arith.constant 2 : index
    %c0_30 = arith.constant 0 : index
    %c0_31 = arith.constant 0 : index
    %62 = vector.load %arg6[%c2, %c0_30, %c0_31] : memref<4x32x96xbf16, #tpu.memory_space<vmem>>, vector<1x32x96xbf16>
    %63 = vector.shape_cast %62 : vector<1x32x96xbf16> to vector<32x96xbf16>
    %cst_32 = arith.constant dense<0.000000e+00> : vector<32x96xf32>
    %64 = tpu.matmul %61, %63, %cst_32 {dimension_numbers = #tpu.dot_dimension_numbers<[1], [0], [0], [1], [0, 0, 1, 1], [], []>} : vector<32x32xbf16>, vector<32x96xbf16>, vector<32x96xf32> -> vector<32x96xf32>
    %c2_33 = arith.constant 2 : index
    %c0_34 = arith.constant 0 : index
    %c0_35 = arith.constant 0 : index
    %65 = vector.load %arg7[%c2_33, %c0_34, %c0_35] : memref<4x1x96xf32, #tpu.memory_space<vmem>>, vector<1x1x96xf32>
    %66 = vector.shape_cast %65 : vector<1x1x96xf32> to vector<1x96xf32>
    %67 = vector.broadcast %66 : vector<1x96xf32> to vector<32x96xf32>
    %68 = arith.addf %64, %67 : vector<32x96xf32>
    %69 = vector.extract_strided_slice %68 {offsets = [0, 0], sizes = [32, 32], strides = [1, 1]} : vector<32x96xf32> to vector<32x32xf32>
    %70 = arith.negf %69 : vector<32x32xf32>
    %71 = math.exp %70 : vector<32x32xf32>
    %cst_36 = arith.constant 1.000000e+00 : f32
    %72 = vector.broadcast %cst_36 : f32 to vector<32x32xf32>
    %73 = arith.addf %72, %71 : vector<32x32xf32>
    %74 = arith.divf %72, %73 : vector<32x32xf32>
    %75 = vector.extract_strided_slice %68 {offsets = [0, 32], sizes = [32, 32], strides = [1, 1]} : vector<32x96xf32> to vector<32x32xf32>
    %cst_37 = arith.constant 0.000000e+00 : f32
    %76 = vector.broadcast %cst_37 : f32 to vector<32x32xf32>
    %77 = arith.maximumf %75, %76 : vector<32x32xf32>
    %78 = arith.mulf %74, %77 : vector<32x32xf32>
    %cst_38 = arith.constant 1.000000e+00 : f32
    %79 = vector.broadcast %cst_38 : f32 to vector<32x32xf32>
    %80 = arith.subf %79, %74 : vector<32x32xf32>
    %81 = vector.extract_strided_slice %68 {offsets = [0, 64], sizes = [32, 32], strides = [1, 1]} : vector<32x96xf32> to vector<32x32xf32>
    %82 = arith.mulf %80, %81 : vector<32x32xf32>
    %83 = arith.addf %78, %82 : vector<32x32xf32>
    %84 = arith.truncf %83 : vector<32x32xf32> to vector<32x32xbf16>
    %c3 = arith.constant 3 : index
    %c0_39 = arith.constant 0 : index
    %c0_40 = arith.constant 0 : index
    %85 = vector.load %arg6[%c3, %c0_39, %c0_40] : memref<4x32x96xbf16, #tpu.memory_space<vmem>>, vector<1x32x96xbf16>
    %86 = vector.shape_cast %85 : vector<1x32x96xbf16> to vector<32x96xbf16>
    %cst_41 = arith.constant dense<0.000000e+00> : vector<32x96xf32>
    %87 = tpu.matmul %84, %86, %cst_41 {dimension_numbers = #tpu.dot_dimension_numbers<[1], [0], [0], [1], [0, 0, 1, 1], [], []>} : vector<32x32xbf16>, vector<32x96xbf16>, vector<32x96xf32> -> vector<32x96xf32>
    %c3_42 = arith.constant 3 : index
    %c0_43 = arith.constant 0 : index
    %c0_44 = arith.constant 0 : index
    %88 = vector.load %arg7[%c3_42, %c0_43, %c0_44] : memref<4x1x96xf32, #tpu.memory_space<vmem>>, vector<1x1x96xf32>
    %89 = vector.shape_cast %88 : vector<1x1x96xf32> to vector<1x96xf32>
    %90 = vector.broadcast %89 : vector<1x96xf32> to vector<32x96xf32>
    %91 = arith.addf %87, %90 : vector<32x96xf32>
    %92 = vector.extract_strided_slice %91 {offsets = [0, 0], sizes = [32, 32], strides = [1, 1]} : vector<32x96xf32> to vector<32x32xf32>
    %93 = arith.negf %92 : vector<32x32xf32>
    %94 = math.exp %93 : vector<32x32xf32>
    %cst_45 = arith.constant 1.000000e+00 : f32
    %95 = vector.broadcast %cst_45 : f32 to vector<32x32xf32>
    %96 = arith.addf %95, %94 : vector<32x32xf32>
    %97 = arith.divf %95, %96 : vector<32x32xf32>
    %98 = vector.extract_strided_slice %91 {offsets = [0, 32], sizes = [32, 32], strides = [1, 1]} : vector<32x96xf32> to vector<32x32xf32>
    %cst_46 = arith.constant 0.000000e+00 : f32
    %99 = vector.broadcast %cst_46 : f32 to vector<32x32xf32>
    %100 = arith.maximumf %98, %99 : vector<32x32xf32>
    %101 = arith.mulf %97, %100 : vector<32x32xf32>
    %cst_47 = arith.constant 1.000000e+00 : f32
    %102 = vector.broadcast %cst_47 : f32 to vector<32x32xf32>
    %103 = arith.subf %102, %97 : vector<32x32xf32>
    %104 = vector.extract_strided_slice %91 {offsets = [0, 64], sizes = [32, 32], strides = [1, 1]} : vector<32x96xf32> to vector<32x32xf32>
    %105 = arith.mulf %103, %104 : vector<32x32xf32>
    %106 = arith.addf %101, %105 : vector<32x32xf32>
    %107 = arith.truncf %106 : vector<32x32xf32> to vector<32x32xbf16>
    %c0_48 = arith.constant 0 : index
    %c0_49 = arith.constant 0 : index
    %108 = vector.load %arg8[%c0_48, %c0_49] : memref<32x64xbf16, #tpu.memory_space<vmem>>, vector<32x64xbf16>
    %cst_50 = arith.constant dense<0.000000e+00> : vector<32x64xf32>
    %109 = tpu.matmul %107, %108, %cst_50 {dimension_numbers = #tpu.dot_dimension_numbers<[1], [0], [0], [1], [0, 0, 1, 1], [], []>} : vector<32x32xbf16>, vector<32x64xbf16>, vector<32x64xf32> -> vector<32x64xf32>
    %c0_51 = arith.constant 0 : index
    %c0_52 = arith.constant 0 : index
    %110 = vector.load %arg9[%c0_51, %c0_52] : memref<1x64xf32, #tpu.memory_space<vmem>>, vector<1x64xf32>
    %111 = vector.broadcast %110 : vector<1x64xf32> to vector<32x64xf32>
    %112 = arith.addf %109, %111 : vector<32x64xf32>
    %c0_53 = arith.constant 0 : index
    %c0_54 = arith.constant 0 : index
    %113 = vector.load %arg10[%c0_53, %c0_54] : memref<32x192xbf16, #tpu.memory_space<vmem>>, vector<32x192xbf16>
    %cst_55 = arith.constant dense<0.000000e+00> : vector<32x192xf32>
    %114 = tpu.matmul %107, %113, %cst_55 {dimension_numbers = #tpu.dot_dimension_numbers<[1], [0], [0], [1], [0, 0, 1, 1], [], []>} : vector<32x32xbf16>, vector<32x192xbf16>, vector<32x192xf32> -> vector<32x192xf32>
    %c0_56 = arith.constant 0 : index
    %c0_57 = arith.constant 0 : index
    %115 = vector.load %arg11[%c0_56, %c0_57] : memref<1x192xf32, #tpu.memory_space<vmem>>, vector<1x192xf32>
    %116 = vector.broadcast %115 : vector<1x192xf32> to vector<32x192xf32>
    %117 = arith.addf %114, %116 : vector<32x192xf32>
    %118 = vector.extract_strided_slice %112 {offsets = [0, 0], sizes = [32, 32], strides = [1, 1]} : vector<32x64xf32> to vector<32x32xf32>
    %c0_58 = arith.constant 0 : index
    %c0_59 = arith.constant 0 : index
    %c0_60 = arith.constant 0 : index
    %119 = vector.load %arg12[%c0_58, %c0_59, %c0_60] : memref<2x32x32xf32, #tpu.memory_space<vmem>>, vector<1x32x32xf32>
    %120 = vector.shape_cast %119 : vector<1x32x32xf32> to vector<32x32xf32>
    %121 = vector.shape_cast %118 : vector<32x32xf32> to vector<1x32x32xf32>
    tpu.vector_store %arg12[%c0_58, %c0_59, %c0_60], %121 {strides = array<i32>} : memref<2x32x32xf32, #tpu.memory_space<vmem>>, vector<1x32x32xf32>,
    %122 = vector.extract_strided_slice %112 {offsets = [0, 32], sizes = [32, 32], strides = [1, 1]} : vector<32x64xf32> to vector<32x32xf32>
    %c1_61 = arith.constant 1 : index
    %c0_62 = arith.constant 0 : index
    %c0_63 = arith.constant 0 : index
    %123 = vector.load %arg12[%c1_61, %c0_62, %c0_63] : memref<2x32x32xf32, #tpu.memory_space<vmem>>, vector<1x32x32xf32>
    %124 = vector.shape_cast %123 : vector<1x32x32xf32> to vector<32x32xf32>
    %125 = vector.shape_cast %122 : vector<32x32xf32> to vector<1x32x32xf32>
    tpu.vector_store %arg12[%c1_61, %c0_62, %c0_63], %125 {strides = array<i32>} : memref<2x32x32xf32, #tpu.memory_space<vmem>>, vector<1x32x32xf32>,
    %126 = vector.extract_strided_slice %117 {offsets = [0, 0], sizes = [32, 96], strides = [1, 1]} : vector<32x192xf32> to vector<32x96xf32>
    %c0_64 = arith.constant 0 : index
    %c0_65 = arith.constant 0 : index
    %c0_66 = arith.constant 0 : index
    %127 = vector.load %arg13[%c0_64, %c0_65, %c0_66] : memref<2x32x96xf32, #tpu.memory_space<vmem>>, vector<1x32x96xf32>
    %128 = vector.shape_cast %127 : vector<1x32x96xf32> to vector<32x96xf32>
    %129 = vector.shape_cast %126 : vector<32x96xf32> to vector<1x32x96xf32>
    tpu.vector_store %arg13[%c0_64, %c0_65, %c0_66], %129 {strides = array<i32>} : memref<2x32x96xf32, #tpu.memory_space<vmem>>, vector<1x32x96xf32>,
    %130 = vector.extract_strided_slice %117 {offsets = [0, 96], sizes = [32, 96], strides = [1, 1]} : vector<32x192xf32> to vector<32x96xf32>
    %c1_67 = arith.constant 1 : index
    %c0_68 = arith.constant 0 : index
    %c0_69 = arith.constant 0 : index
    %131 = vector.load %arg13[%c1_67, %c0_68, %c0_69] : memref<2x32x96xf32, #tpu.memory_space<vmem>>, vector<1x32x96xf32>
    %132 = vector.shape_cast %131 : vector<1x32x96xf32> to vector<32x96xf32>
    %133 = vector.shape_cast %130 : vector<32x96xf32> to vector<1x32x96xf32>
    tpu.vector_store %arg13[%c1_67, %c0_68, %c0_69], %133 {strides = array<i32>} : memref<2x32x96xf32, #tpu.memory_space<vmem>>, vector<1x32x96xf32>,
    return
  }
  func.func @transform_0(%arg0: i32) -> (i32, i32) {
    %c0_i32 = arith.constant 0 : i32
    %c0_i32_0 = arith.constant 0 : i32
    return %arg0, %c0_i32 : i32, i32
  }
  func.func @transform_1(%arg0: i32) -> (i32, i32) {
    %c0_i32 = arith.constant 0 : i32
    %c0_i32_0 = arith.constant 0 : i32
    return %arg0, %c0_i32 : i32, i32
  }
  func.func @transform_2(%arg0: i32) -> (i32, i32) {
    %c0_i32 = arith.constant 0 : i32
    %c0_i32_0 = arith.constant 0 : i32
    %c0_i32_1 = arith.constant 0 : i32
    return %c0_i32, %c0_i32_0 : i32, i32
  }
  func.func @transform_3(%arg0: i32) -> (i32, i32) {
    %c0_i32 = arith.constant 0 : i32
    %c0_i32_0 = arith.constant 0 : i32
    %c0_i32_1 = arith.constant 0 : i32
    return %c0_i32, %c0_i32_0 : i32, i32
  }
  func.func @transform_4(%arg0: i32) -> (i32, i32) {
    %c0_i32 = arith.constant 0 : i32
    %c0_i32_0 = arith.constant 0 : i32
    %c0_i32_1 = arith.constant 0 : i32
    return %c0_i32, %c0_i32_0 : i32, i32
  }
  func.func @transform_5(%arg0: i32) -> (i32, i32, i32) {
    %c0_i32 = arith.constant 0 : i32
    %c0_i32_0 = arith.constant 0 : i32
    %c0_i32_1 = arith.constant 0 : i32
    %c0_i32_2 = arith.constant 0 : i32
    return %c0_i32, %c0_i32_0, %c0_i32_1 : i32, i32, i32
  }
  func.func @transform_6(%arg0: i32) -> (i32, i32, i32) {
    %c0_i32 = arith.constant 0 : i32
    %c0_i32_0 = arith.constant 0 : i32
    %c0_i32_1 = arith.constant 0 : i32
    %c0_i32_2 = arith.constant 0 : i32
    return %c0_i32, %c0_i32_0, %c0_i32_1 : i32, i32, i32
  }
  func.func @transform_7(%arg0: i32) -> (i32, i32) {
    %c0_i32 = arith.constant 0 : i32
    %c0_i32_0 = arith.constant 0 : i32
    %c0_i32_1 = arith.constant 0 : i32
    return %c0_i32, %c0_i32_0 : i32, i32
  }
  func.func @transform_8(%arg0: i32) -> (i32, i32) {
    %c0_i32 = arith.constant 0 : i32
    %c0_i32_0 = arith.constant 0 : i32
    %c0_i32_1 = arith.constant 0 : i32
    return %c0_i32, %c0_i32_0 : i32, i32
  }
  func.func @transform_9(%arg0: i32) -> (i32, i32) {
    %c0_i32 = arith.constant 0 : i32
    %c0_i32_0 = arith.constant 0 : i32
    %c0_i32_1 = arith.constant 0 : i32
    return %c0_i32, %c0_i32_0 : i32, i32
  }
  func.func @transform_10(%arg0: i32) -> (i32, i32) {
    %c0_i32 = arith.constant 0 : i32
    %c0_i32_0 = arith.constant 0 : i32
    %c0_i32_1 = arith.constant 0 : i32
    return %c0_i32, %c0_i32_0 : i32, i32
  }
  func.func @transform_11(%arg0: i32) -> (i32, i32, i32) {
    %c0_i32 = arith.constant 0 : i32
    %c0_i32_0 = arith.constant 0 : i32
    %c0_i32_1 = arith.constant 0 : i32
    return %c0_i32, %arg0, %c0_i32_0 : i32, i32, i32
  }
  func.func @transform_12(%arg0: i32) -> (i32, i32, i32) {
    %c0_i32 = arith.constant 0 : i32
    %c0_i32_0 = arith.constant 0 : i32
    %c0_i32_1 = arith.constant 0 : i32
    return %c0_i32, %arg0, %c0_i32_0 : i32, i32, i32
  }
}

module attributes {stable_mosaic.version = 11 : i64} {
  func.func @bigru_kernel(%arg0: i32, %arg1: i32, %arg2: memref<1x8x2x96xf32, #tpu.memory_space<vmem>>, %arg3: memref<1x8x2x32xf32, #tpu.memory_space<vmem>>, %arg4: memref<8x2x1xf32, #tpu.memory_space<vmem>>, %arg5: memref<1x32x96xf32, #tpu.memory_space<vmem>>, %arg6: memref<1x1x32xf32, #tpu.memory_space<vmem>>, %arg7: memref<1x8x2x32xf32, #tpu.memory_space<vmem>>, %arg8: memref<2x32xf32, #tpu.memory_space<vmem>>) attributes {dimension_semantics = [#tpu.dimension_semantics<parallel>, #tpu.dimension_semantics<arbitrary>], iteration_bounds = array<i64: 2, 2>, scalar_prefetch = 0 : i64, scratch_operands = 1 : i64, tpu.core_type = #tpu.core_type<tc>, window_params = [{transform_indices = @transform_0, window_bounds = array<i64: 1, 8, 2, 96>}, {transform_indices = @transform_1, window_bounds = array<i64: 1, 8, 2, 32>}, {transform_indices = @transform_2, window_bounds = array<i64: 8, 2, 1>}, {transform_indices = @transform_3, window_bounds = array<i64: 1, 32, 96>}, {transform_indices = @transform_4, window_bounds = array<i64: 1, 1, 32>}, {transform_indices = @transform_5, window_bounds = array<i64: 1, 8, 2, 32>}]} {
    %c0_i32 = arith.constant 0 : i32
    %0 = arith.cmpi eq, %arg1, %c0_i32 : i32
    %1 = arith.extui %0 : i1 to i32
    %c0_i32_0 = arith.constant 0 : i32
    %2 = arith.cmpi ne, %1, %c0_i32_0 : i32
    scf.if %2 {
      %cst = arith.constant 0.000000e+00 : f32
      %11 = vector.broadcast %cst : f32 to vector<2x32xf32>
      %c0_12 = arith.constant 0 : index
      %c0_13 = arith.constant 0 : index
      %12 = vector.load %arg8[%c0_12, %c0_13] : memref<2x32xf32, #tpu.memory_space<vmem>>, vector<2x32xf32>
      tpu.vector_store %arg8[%c0_12, %c0_13], %11 {strides = array<i32>} : memref<2x32xf32, #tpu.memory_space<vmem>>, vector<2x32xf32>,
    } else {
    }
    %c0 = arith.constant 0 : index
    %c0_1 = arith.constant 0 : index
    %c0_2 = arith.constant 0 : index
    %3 = vector.load %arg5[%c0, %c0_1, %c0_2] : memref<1x32x96xf32, #tpu.memory_space<vmem>>, vector<1x32x96xf32>
    %4 = vector.shape_cast %3 : vector<1x32x96xf32> to vector<32x96xf32>
    %c0_3 = arith.constant 0 : index
    %c0_4 = arith.constant 0 : index
    %c0_5 = arith.constant 0 : index
    %5 = vector.load %arg6[%c0_3, %c0_4, %c0_5] : memref<1x1x32xf32, #tpu.memory_space<vmem>>, vector<1x1x32xf32>
    %6 = vector.shape_cast %5 : vector<1x1x32xf32> to vector<1x32xf32>
    %c0_6 = arith.constant 0 : index
    %c0_7 = arith.constant 0 : index
    %7 = vector.load %arg8[%c0_6, %c0_7] : memref<2x32xf32, #tpu.memory_space<vmem>>, vector<2x32xf32>
    %c0_i32_8 = arith.constant 0 : i32
    %c8_i32 = arith.constant 8 : i32
    %8 = arith.addi %c0_i32_8, %c8_i32 : i32
    %c1_i32 = arith.constant 1 : i32
    %9 = scf.for %arg9 = %c0_i32_8 to %8 step %c1_i32 iter_args(%arg10 = %7) -> (vector<2x32xf32>)  : i32 {
      %c1_i32_12 = arith.constant 1 : i32
      %11 = arith.subi %c1_i32_12, %arg0 : i32
      %12 = arith.muli %11, %arg9 : i32
      %c7_i32 = arith.constant 7 : i32
      %13 = arith.subi %c7_i32, %arg9 : i32
      %14 = arith.muli %arg0, %13 : i32
      %15 = arith.addi %12, %14 : i32
      %c0_13 = arith.constant 0 : index
      %16 = arith.index_cast %15 : i32 to index
      %c0_14 = arith.constant 0 : index
      %c0_15 = arith.constant 0 : index
      %17 = vector.load %arg2[%c0_13, %16, %c0_14, %c0_15] : memref<1x8x2x96xf32, #tpu.memory_space<vmem>>, vector<1x1x2x96xf32>
      %18 = vector.shape_cast %17 : vector<1x1x2x96xf32> to vector<2x96xf32>
      %cst = arith.constant dense<0.000000e+00> : vector<2x96xf32>
      %19 = tpu.matmul %arg10, %4, %cst {dimension_numbers = #tpu.dot_dimension_numbers<[1], [0], [0], [1], [0, 0, 1, 1], [], []>} : vector<2x32xf32>, vector<32x96xf32>, vector<2x96xf32> -> vector<2x96xf32>
      %20 = vector.extract_strided_slice %18 {offsets = [0, 0], sizes = [2, 32], strides = [1, 1]} : vector<2x96xf32> to vector<2x32xf32>
      %21 = vector.extract_strided_slice %19 {offsets = [0, 0], sizes = [2, 32], strides = [1, 1]} : vector<2x96xf32> to vector<2x32xf32>
      %22 = arith.addf %20, %21 : vector<2x32xf32>
      %23 = arith.negf %22 : vector<2x32xf32>
      %24 = math.exp %23 : vector<2x32xf32>
      %cst_16 = arith.constant 1.000000e+00 : f32
      %25 = vector.broadcast %cst_16 : f32 to vector<2x32xf32>
      %26 = arith.addf %25, %24 : vector<2x32xf32>
      %27 = arith.divf %25, %26 : vector<2x32xf32>
      %28 = vector.extract_strided_slice %18 {offsets = [0, 32], sizes = [2, 32], strides = [1, 1]} : vector<2x96xf32> to vector<2x32xf32>
      %29 = vector.extract_strided_slice %19 {offsets = [0, 32], sizes = [2, 32], strides = [1, 1]} : vector<2x96xf32> to vector<2x32xf32>
      %30 = arith.addf %28, %29 : vector<2x32xf32>
      %31 = arith.negf %30 : vector<2x32xf32>
      %32 = math.exp %31 : vector<2x32xf32>
      %cst_17 = arith.constant 1.000000e+00 : f32
      %33 = vector.broadcast %cst_17 : f32 to vector<2x32xf32>
      %34 = arith.addf %33, %32 : vector<2x32xf32>
      %35 = arith.divf %33, %34 : vector<2x32xf32>
      %36 = vector.extract_strided_slice %18 {offsets = [0, 64], sizes = [2, 32], strides = [1, 1]} : vector<2x96xf32> to vector<2x32xf32>
      %37 = vector.extract_strided_slice %19 {offsets = [0, 64], sizes = [2, 32], strides = [1, 1]} : vector<2x96xf32> to vector<2x32xf32>
      %38 = vector.broadcast %6 : vector<1x32xf32> to vector<2x32xf32>
      %39 = arith.addf %37, %38 : vector<2x32xf32>
      %40 = arith.mulf %27, %39 : vector<2x32xf32>
      %41 = arith.addf %36, %40 : vector<2x32xf32>
      %42 = math.tanh %41 : vector<2x32xf32>
      %cst_18 = arith.constant 1.000000e+00 : f32
      %43 = vector.broadcast %cst_18 : f32 to vector<2x32xf32>
      %44 = arith.subf %43, %35 : vector<2x32xf32>
      %45 = arith.mulf %44, %42 : vector<2x32xf32>
      %46 = arith.mulf %35, %arg10 : vector<2x32xf32>
      %47 = arith.addf %45, %46 : vector<2x32xf32>
      %48 = arith.index_cast %15 : i32 to index
      %c0_19 = arith.constant 0 : index
      %c0_20 = arith.constant 0 : index
      %49 = vector.load %arg4[%48, %c0_19, %c0_20] : memref<8x2x1xf32, #tpu.memory_space<vmem>>, vector<1x2x1xf32>
      %50 = vector.shape_cast %49 : vector<1x2x1xf32> to vector<2x1xf32>
      %51 = vector.broadcast %50 : vector<2x1xf32> to vector<2x32xf32>
      %52 = arith.mulf %51, %47 : vector<2x32xf32>
      %cst_21 = arith.constant 1.000000e+00 : f32
      %53 = vector.broadcast %cst_21 : f32 to vector<2x1xf32>
      %54 = arith.subf %53, %50 : vector<2x1xf32>
      %55 = vector.broadcast %54 : vector<2x1xf32> to vector<2x32xf32>
      %56 = arith.mulf %55, %arg10 : vector<2x32xf32>
      %57 = arith.addf %52, %56 : vector<2x32xf32>
      %c0_22 = arith.constant 0 : index
      %58 = arith.index_cast %15 : i32 to index
      %c0_23 = arith.constant 0 : index
      %c0_24 = arith.constant 0 : index
      %59 = vector.load %arg3[%c0_22, %58, %c0_23, %c0_24] : memref<1x8x2x32xf32, #tpu.memory_space<vmem>>, vector<1x1x2x32xf32>
      %60 = vector.shape_cast %59 : vector<1x1x2x32xf32> to vector<2x32xf32>
      %61 = vector.broadcast %50 : vector<2x1xf32> to vector<2x32xf32>
      %62 = arith.mulf %61, %57 : vector<2x32xf32>
      %63 = arith.addf %60, %62 : vector<2x32xf32>
      %c0_25 = arith.constant 0 : index
      %64 = arith.index_cast %15 : i32 to index
      %c0_26 = arith.constant 0 : index
      %c0_27 = arith.constant 0 : index
      %65 = vector.load %arg7[%c0_25, %64, %c0_26, %c0_27] : memref<1x8x2x32xf32, #tpu.memory_space<vmem>>, vector<1x1x2x32xf32>
      %66 = vector.shape_cast %65 : vector<1x1x2x32xf32> to vector<2x32xf32>
      %67 = vector.shape_cast %63 : vector<2x32xf32> to vector<1x1x2x32xf32>
      tpu.vector_store %arg7[%c0_25, %64, %c0_26, %c0_27], %67 {strides = array<i32>} : memref<1x8x2x32xf32, #tpu.memory_space<vmem>>, vector<1x1x2x32xf32>,
      scf.yield %57 : vector<2x32xf32>
    }
    %c8_i32_9 = arith.constant 8 : i32
    %c0_10 = arith.constant 0 : index
    %c0_11 = arith.constant 0 : index
    %10 = vector.load %arg8[%c0_10, %c0_11] : memref<2x32xf32, #tpu.memory_space<vmem>>, vector<2x32xf32>
    tpu.vector_store %arg8[%c0_10, %c0_11], %9 {strides = array<i32>} : memref<2x32xf32, #tpu.memory_space<vmem>>, vector<2x32xf32>,
    return
  }
  func.func @transform_0(%arg0: i32, %arg1: i32) -> (i32, i32, i32, i32) {
    %c1_i32 = arith.constant 1 : i32
    %0 = arith.subi %c1_i32, %arg0 : i32
    %1 = arith.muli %0, %arg1 : i32
    %c1_i32_0 = arith.constant 1 : i32
    %2 = arith.subi %c1_i32_0, %arg1 : i32
    %3 = arith.muli %arg0, %2 : i32
    %4 = arith.addi %1, %3 : i32
    %c0_i32 = arith.constant 0 : i32
    %c0_i32_1 = arith.constant 0 : i32
    %c0_i32_2 = arith.constant 0 : i32
    return %arg0, %4, %c0_i32, %c0_i32_1 : i32, i32, i32, i32
  }
  func.func @transform_1(%arg0: i32, %arg1: i32) -> (i32, i32, i32, i32) {
    %c1_i32 = arith.constant 1 : i32
    %0 = arith.subi %c1_i32, %arg0 : i32
    %1 = arith.muli %0, %arg1 : i32
    %c1_i32_0 = arith.constant 1 : i32
    %2 = arith.subi %c1_i32_0, %arg1 : i32
    %3 = arith.muli %arg0, %2 : i32
    %4 = arith.addi %1, %3 : i32
    %c0_i32 = arith.constant 0 : i32
    %c0_i32_1 = arith.constant 0 : i32
    %c0_i32_2 = arith.constant 0 : i32
    return %arg0, %4, %c0_i32, %c0_i32_1 : i32, i32, i32, i32
  }
  func.func @transform_2(%arg0: i32, %arg1: i32) -> (i32, i32, i32) {
    %c1_i32 = arith.constant 1 : i32
    %0 = arith.subi %c1_i32, %arg0 : i32
    %1 = arith.muli %0, %arg1 : i32
    %c1_i32_0 = arith.constant 1 : i32
    %2 = arith.subi %c1_i32_0, %arg1 : i32
    %3 = arith.muli %arg0, %2 : i32
    %4 = arith.addi %1, %3 : i32
    %c0_i32 = arith.constant 0 : i32
    %c0_i32_1 = arith.constant 0 : i32
    %c0_i32_2 = arith.constant 0 : i32
    return %4, %c0_i32, %c0_i32_1 : i32, i32, i32
  }
  func.func @transform_3(%arg0: i32, %arg1: i32) -> (i32, i32, i32) {
    %c0_i32 = arith.constant 0 : i32
    %c0_i32_0 = arith.constant 0 : i32
    %c0_i32_1 = arith.constant 0 : i32
    return %arg0, %c0_i32, %c0_i32_0 : i32, i32, i32
  }
  func.func @transform_4(%arg0: i32, %arg1: i32) -> (i32, i32, i32) {
    %c0_i32 = arith.constant 0 : i32
    %c0_i32_0 = arith.constant 0 : i32
    %c0_i32_1 = arith.constant 0 : i32
    return %arg0, %c0_i32, %c0_i32_0 : i32, i32, i32
  }
  func.func @transform_5(%arg0: i32, %arg1: i32) -> (i32, i32, i32, i32) {
    %c1_i32 = arith.constant 1 : i32
    %0 = arith.subi %c1_i32, %arg0 : i32
    %1 = arith.muli %0, %arg1 : i32
    %c1_i32_0 = arith.constant 1 : i32
    %2 = arith.subi %c1_i32_0, %arg1 : i32
    %3 = arith.muli %arg0, %2 : i32
    %4 = arith.addi %1, %3 : i32
    %c0_i32 = arith.constant 0 : i32
    %c0_i32_1 = arith.constant 0 : i32
    %c0_i32_2 = arith.constant 0 : i32
    return %arg0, %4, %c0_i32, %c0_i32_1 : i32, i32, i32, i32
  }
}

</mosaic_0001>

<llo_original>
// kernel: cbhg_forward.5
$region0: #{cbhg_forward.5}
  #allocation0 [shape = 'u32[]', space=smem, size = 0x4, offset = 0x4, fixed_abs, tag = 'smem constant byte address 0x4 - core index']
  #allocation1 [shape = 'u32[144,128]{1,0:T(1,128)}', space=vmem, size = 0x12000, scoped, tag = 'internal scratch']
  %s0 = inlined_call_operand.vmem [shape: f32[2,16,16], index: 0, kind: input, shape index: {}]
  %s1 = inlined_call_operand.vmem [shape: bf16[4,16,64], index: 1, kind: input, shape index: {}]
  %s2 = inlined_call_operand.vmem [shape: f32[1,64], index: 2, kind: input, shape index: {}]
  %s3 = inlined_call_operand.vmem [shape: f32[2,16,64], index: 3, kind: output, shape index: {0}]
  %s4 = inlined_call_operand.vmem [shape: f32[2,2,64], index: 4, kind: output, shape index: {1}]
  %5 = xla_tuple %s3, %s4
  %s6 = sld [smem:[#allocation0]]
  $region53: #{cbhg_forward.5} parent=0
    _
  %s8 = ssub.s32 1, %s6
  %s9 = scalar_select 0, %s8, %s6
  loop: start=0, step=1, limit=4
  $region2: #{cbhg_forward.5} parent=0 // loop_pre_header
    _
  $region3: #{cbhg_forward.5} parent=0 // loop_header
    %s11 = sphi 0, %s15
    %p12 = scmp.ge.s32.totalorder %s11, 4
    %s21 = sphi 0, %s23
    %s24 = sphi 0, %s21
    %s25 = sphi 0, %s24
    %s41 = sphi 0, %s25
    %s45 = sphi 0, %s45
    %s47 = sphi 0, %s45
    %s48 = sphi 0, %s47
    %s62 = sphi 0, %s48
    %s66 = sphi 0, %s66
    %s68 = sphi 0, %s66
    %s69 = sphi 0, %s68
    %s83 = sphi 0, %s69
    %s89 = sphi 0, %s91
    %s92 = sphi 0, %s89
    %s93 = sphi 0, %s92
    %s109 = sphi 0, %s93
    %s115 = sphi 0, %s117
    %s118 = sphi 0, %s115
    %s119 = sphi 0, %s118
    %s135 = sphi 0, %s119
  $region4: #{cbhg_forward.5} parent=0 // loop_header_branch
    %14 = sbr.rel (%p12) target = $region8
  $region5: #{cbhg_forward.5} parent=0 // loop_body
    %s16 = ssub.s32 %s11, 1
    %s17 = ssub.s32 %s11, 2
    %s18 = sadd.s32 %s11, 1
    %s19 = ssub.s32 %s11, %s18
    %p20 = scmp.eq.s32.totalorder %s19, 0
    %s22 = sadd.s32 %s21, 1
    %s23 = scalar_select %p20, %s21, %s22
    %p26 = pneg %p20
    %p27 = scmp.eq.s32.totalorder %s11, 1
    %p28 = por %p26, %p27
    %p29 = scmp.ne.s32.totalorder %s21, %s24
    %p30 = scmp.eq.s32.totalorder %s11, 0
    %p31 = por %p29, %p30
    %p32 = scmp.ne.s32.totalorder %s21, %s24
    %p33 = scmp.eq.s32.totalorder %s16, 1
    %p34 = por %p32, %p33
    %p35 = scmp.ne.s32.totalorder %s24, %s25
    %p36 = scmp.eq.s32.totalorder %s16, 0
    %p37 = por %p35, %p36
    %p38 = scmp.ne.s32.totalorder %s24, %s25
    %p39 = scmp.eq.s32.totalorder %s17, 1
    %p40 = por %p38, %p39
    %p42 = scmp.ne.s32.totalorder %s25, %s41
    %p43 = scmp.eq.s32.totalorder %s17, 0
    %p44 = por %p42, %p43
    %s46 = sadd.s32 %s45, 1
    %p49 = scmp.eq.s32.totalorder %s11, 1
    %p50 = scmp.ne.s32.totalorder %s45, %s47
    %p51 = scmp.eq.s32.totalorder %s11, 0
    %p52 = por %p50, %p51
    %p53 = scmp.ne.s32.totalorder %s45, %s47
    %p54 = scmp.eq.s32.totalorder %s16, 1
    %p55 = por %p53, %p54
    %p56 = scmp.ne.s32.totalorder %s47, %s48
    %p57 = scmp.eq.s32.totalorder %s16, 0
    %p58 = por %p56, %p57
    %p59 = scmp.ne.s32.totalorder %s47, %s48
    %p60 = scmp.eq.s32.totalorder %s17, 1
    %p61 = por %p59, %p60
    %p63 = scmp.ne.s32.totalorder %s48, %s62
    %p64 = scmp.eq.s32.totalorder %s17, 0
    %p65 = por %p63, %p64
    %s67 = sadd.s32 %s66, 1
    %p70 = scmp.eq.s32.totalorder %s11, 1
    %p71 = scmp.ne.s32.totalorder %s66, %s68
    %p72 = scmp.eq.s32.totalorder %s11, 0
    %p73 = por %p71, %p72
    %p74 = scmp.ne.s32.totalorder %s66, %s68
    %p75 = scmp.eq.s32.totalorder %s16, 1
    %p76 = por %p74, %p75
    %p77 = scmp.ne.s32.totalorder %s68, %s69
    %p78 = scmp.eq.s32.totalorder %s16, 0
    %p79 = por %p77, %p78
    %p80 = scmp.ne.s32.totalorder %s68, %s69
    %p81 = scmp.eq.s32.totalorder %s17, 1
    %p82 = por %p80, %p81
    %p84 = scmp.ne.s32.totalorder %s69, %s83
    %p85 = scmp.eq.s32.totalorder %s17, 0
    %p86 = por %p84, %p85
    %s87 = ssub.s32 %s11, %s18
    %p88 = scmp.eq.s32.totalorder %s87, 0
    %s90 = sadd.s32 %s89, 1
    %s91 = scalar_select %p88, %s89, %s90
    %p94 = pneg %p88
    %p95 = scmp.eq.s32.totalorder %s11, 1
    %p96 = por %p94, %p95
    %p97 = scmp.ne.s32.totalorder %s89, %s92
    %p98 = scmp.eq.s32.totalorder %s11, 0
    %p99 = por %p97, %p98
    %p100 = scmp.ne.s32.totalorder %s89, %s92
    %p101 = scmp.eq.s32.totalorder %s16, 1
    %p102 = por %p100, %p101
    %p103 = scmp.ne.s32.totalorder %s92, %s93
    %p104 = scmp.eq.s32.totalorder %s16, 0
    %p105 = por %p103, %p104
    %p106 = scmp.ne.s32.totalorder %s92, %s93
    %p107 = scmp.eq.s32.totalorder %s17, 1
    %p108 = por %p106, %p107
    %p110 = scmp.ne.s32.totalorder %s93, %s109
    %p111 = scmp.eq.s32.totalorder %s17, 0
    %p112 = por %p110, %p111
    %s113 = ssub.s32 %s11, %s18
    %p114 = scmp.eq.s32.totalorder %s113, 0
    %s116 = sadd.s32 %s115, 1
    %s117 = scalar_select %p114, %s115, %s116
    %p120 = pneg %p114
    %p121 = scmp.eq.s32.totalorder %s11, 1
    %p122 = por %p120, %p121
    %p123 = scmp.ne.s32.totalorder %s115, %s118
    %p124 = scmp.eq.s32.totalorder %s11, 0
    %p125 = por %p123, %p124
    %p126 = scmp.ne.s32.totalorder %s115, %s118
    %p127 = scmp.eq.s32.totalorder %s16, 1
    %p128 = por %p126, %p127
    %p129 = scmp.ne.s32.totalorder %s118, %s119
    %p130 = scmp.eq.s32.totalorder %s16, 0
    %p131 = por %p129, %p130
    %p132 = scmp.ne.s32.totalorder %s118, %s119
    %p133 = scmp.eq.s32.totalorder %s17, 1
    %p134 = por %p132, %p133
    %p136 = scmp.ne.s32.totalorder %s119, %s135
    %p137 = scmp.eq.s32.totalorder %s17, 0
    %p138 = por %p136, %p137
    %p139 = scmp.le.s32.totalorder 1, %s11
    %p140 = scmp.lt.s32.totalorder %s11, 3
    %p141 = pnand %p139, %p140
    %p142 = pneg %p141
    // Predicated region
    $region9: #{cbhg_forward.5} parent=5 // pred_check
      _
    $region10: #{cbhg_forward.5} parent=5 // pred_check_branch
      %144 = sbr.rel (%p141) target = $region12
    $region11: #{cbhg_forward.5} parent=5 // pred_region
      %s145 = ssub.s32 %s11, 1
      // Predicated region
      $region13: #{cbhg_forward.5} parent=11 // pred_check
        %p146 = pneg %p58
      $region14: #{cbhg_forward.5} parent=11 // pred_check_branch
        %148 = sbr.rel (%p146) target = $region16
      $region15: #{cbhg_forward.5} parent=11 // pred_region
        _
      $region16: #{cbhg_forward.5} parent=11 // pred_fallthru
        _
      // Predicated region
      $region17: #{cbhg_forward.5} parent=11 // pred_check
        %p149 = pneg %p79
      $region18: #{cbhg_forward.5} parent=11 // pred_check_branch
        %151 = sbr.rel (%p149) target = $region20
      $region19: #{cbhg_forward.5} parent=11 // pred_region
        _
      $region20: #{cbhg_forward.5} parent=11 // pred_fallthru
        _
    $region12: #{cbhg_forward.5} parent=5 // pred_fallthru
      _
    %p152 = scmp.lt.s32.totalorder %s11, 2
    // Predicated region
    $region21: #{cbhg_forward.5} parent=5 // pred_check
      %p153 = pneg %p152
    $region22: #{cbhg_forward.5} parent=5 // pred_check_branch
      %155 = sbr.rel (%p153) target = $region24
    $region23: #{cbhg_forward.5} parent=5 // pred_region
      // Predicated region
      $region25: #{cbhg_forward.5} parent=23 // pred_check
        %p156 = pneg %p31
      $region26: #{cbhg_forward.5} parent=23 // pred_check_branch
        %158 = sbr.rel (%p156) target = $region28
      $region27: #{cbhg_forward.5} parent=23 // pred_region
        %p159 = scmp.lt.s32.totalorder %s11, 1
        %s160 = scalar_select %p159, %s11, 1
        %s161 = smul.addr %s160, 2
        %s162 = smul.addr %s161, 8
        %s163 = scalar_lea.vmem %s0, %s162
      $region28: #{cbhg_forward.5} parent=23 // pred_fallthru
        _
    $region24: #{cbhg_forward.5} parent=5 // pred_fallthru
      _
    %p164 = scmp.le.s32.totalorder 1, %s11
    %p165 = scmp.lt.s32.totalorder %s11, 3
    %p166 = pnand %p164, %p165
    %p167 = pneg %p166
    // Predicated region
    $region29: #{cbhg_forward.5} parent=5 // pred_check
      _
    $region30: #{cbhg_forward.5} parent=5 // pred_check_branch
      %169 = sbr.rel (%p166) target = $region32
    $region31: #{cbhg_forward.5} parent=5 // pred_region
      %s170 = ssub.s32 %s11, 1
      %p171 = scmp.lt.s32.totalorder %s16, 1
      %s172 = scalar_select %p171, %s16, 1
      %s173 = smul.addr %s172, 2
      %s174 = smul.addr %s173, 8
      %s175 = scalar_lea.vmem %s0, %s174
      %p176 = pneg %p37
      %p177 = pneg %p34
      %p178 = pneg %p58
      %p179 = pneg %p55
      %p180 = pneg %p79
      %p181 = pneg %p76
      %p182 = pneg %p105
      %p183 = pneg %p102
      %p184 = scmp.lt.s32.totalorder %s16, 1
      %s185 = scalar_select %p184, %s16, 1
      %s186 = smul.addr %s185, 2
      %s187 = smul.addr %s186, 8
      %s188 = scalar_lea.vmem %s3, %s187
      %p189 = pneg %p131
      %p190 = pneg %p128
      %p191 = scmp.lt.s32.totalorder %s16, 1
      %s192 = scalar_select %p191, %s16, 1
      %s193 = smul.addr %s192, 2
      %s194 = scalar_lea.vmem %s4, %s193
      %p195 = scmp.lt.s32.totalorder %s16, 1
      %s196 = scalar_select %p195, %s16, 1
      %s197 = smul.addr %s196, 2
      %s198 = smul.addr %s197, 8
      %s199 = scalar_lea.vmem %s0, %s198
      %p200 = scmp.lt.s32.totalorder %s16, 1
      %s201 = scalar_select %p200, %s16, 1
      %s202 = smul.addr %s201, 2
      %s203 = smul.addr %s202, 8
      %s204 = scalar_lea.vmem %s3, %s203
      %p205 = scmp.lt.s32.totalorder %s16, 1
      %s206 = scalar_select %p205, %s16, 1
      %s207 = smul.addr %s206, 2
      %s208 = scalar_lea.vmem %s4, %s207
      %v210 = vld [vmem:[%s199] sm:$0xff]
      %v211 = vld [vmem:[%s199 + $0x8] sm:$0xff]
      %v212 = vpack.c.bf16 %v211, %v210
      %v213 = vld [vmem:[%s1] sm:$0xf]
      %v214 = vld [vmem:[%s1 + $0x4] sm:$0xf]
      %v217 = vunpack.c.l.b16 %v213
      %v218 = vunpack.c.l.b16 %v214
      %v219 = vpack.c.b16 %v218, %v217
      %vm221 = vcmask 130048
      %v223 = vsel %vm221, %v212, 0
      %225 = vmatprep.subr.bf16.mxu0 0
      %226 = vmatpush1.bf16.msra.mxu0 0
      %227 = vmatprep.subr.bf16.mxu0 0
      %228 = vmatpush1.bf16.msra.mxu0 0
      %229 = vmatprep.subr.bf16.mxu0 0
      %230 = vmatpush1.bf16.msra.mxu0 0
      %231 = vmatprep.subr.bf16.mxu0 0
      %232 = vmatpush1.bf16.msra.mxu0 0
      %233 = vmatprep.subr.bf16.mxu0 0
      %234 = vmatpush1.bf16.msra.mxu0 0
      %235 = vmatprep.subr.bf16.mxu0 0
      %236 = vmatpush1.bf16.msra.mxu0 0
      %237 = vmatprep.subr.bf16.mxu0 0
      %238 = vmatpush1.bf16.msra.mxu0 0
      %239 = vmatprep.subr.bf16.mxu0 0
      %240 = vmatpush1.bf16.msra.mxu0 %v219
      %241 = vmatprep.subr.bf16.mxu0 0
      %242 = vmatpush2.bf16.msra.mxu0 0
      %243 = vmatprep.subr.bf16.mxu0 0
      %244 = vmatpush2.bf16.msra.mxu0 0
      %245 = vmatprep.subr.bf16.mxu0 0
      %246 = vmatpush2.bf16.msra.mxu0 0
      %247 = vmatprep.subr.bf16.mxu0 0
      %248 = vmatpush2.bf16.msra.mxu0 0
      %249 = vmatprep.subr.bf16.mxu0 0
      %250 = vmatpush2.bf16.msra.mxu0 0
      %251 = vmatprep.subr.bf16.mxu0 0
      %252 = vmatpush2.bf16.msra.mxu0 0
      %253 = vmatprep.subr.bf16.mxu0 0
      %254 = vmatpush2.bf16.msra.mxu0 0
      %255 = vmatprep.subr.bf16.mxu0 0
      %256 = vmatpush2.bf16.msra.mxu0 0
      %257 = vmatprep.mubr.bf16.mxu0 0
      %258 = vmatmul.mubr.bf16.gmra.mxu0 %v223
      %v259 = vpop.f32.mrf.mxu0
      %v260 = vadd.f32 0.0, %v259
      %v261 = vpop.f32.mrf.mxu0
      %v262 = vpop.f32.mrf.mxu0
      %v263 = vadd.f32 0.0, %v262
      %v264 = vpop.f32.mrf.mxu0
      %265 = vdwg.mxu0
      %vm268 = vcmask 1041408
      %v269 = vrot.slane %v260, 6
      %v270 = vrot.slane %v263, 6
      %v271 = vsel %vm268, %v269, %v270
      %v274 = vsel %vm268, 0.0, %v269
      %v275 = vadd.f32 %v274, 0.0
      %v276 = vadd.f32 %v271, 0.0
      %s277 = scalar_lea.vmem %s1, 8
      %v278 = vld [vmem:[%s277] sm:$0xf]
      %v279 = vld [vmem:[%s277 + $0x4] sm:$0xf]
      %v282 = vunpack.c.l.b16 %v278
      %v283 = vunpack.c.l.b16 %v279
      %v284 = vpack.c.b16 %v283, %v282
      %286 = vmatprep.subr.bf16.mxu0 0
      %287 = vmatpush1.bf16.msra.mxu0 0
      %288 = vmatprep.subr.bf16.mxu0 0
      %289 = vmatpush1.bf16.msra.mxu0 0
      %290 = vmatprep.subr.bf16.mxu0 0
      %291 = vmatpush1.bf16.msra.mxu0 0
      %292 = vmatprep.subr.bf16.mxu0 0
      %293 = vmatpush1.bf16.msra.mxu0 0
      %294 = vmatprep.subr.bf16.mxu0 0
      %295 = vmatpush1.bf16.msra.mxu0 0
      %296 = vmatprep.subr.bf16.mxu0 0
      %297 = vmatpush1.bf16.msra.mxu0 0
      %298 = vmatprep.subr.bf16.mxu0 0
      %299 = vmatpush1.bf16.msra.mxu0 0
      %300 = vmatprep.subr.bf16.mxu0 0
      %301 = vmatpush1.bf16.msra.mxu0 %v284
      %302 = vmatprep.subr.bf16.mxu0 0
      %303 = vmatpush2.bf16.msra.mxu0 0
      %304 = vmatprep.subr.bf16.mxu0 0
      %305 = vmatpush2.bf16.msra.mxu0 0
      %306 = vmatprep.subr.bf16.mxu0 0
      %307 = vmatpush2.bf16.msra.mxu0 0
      %308 = vmatprep.subr.bf16.mxu0 0
      %309 = vmatpush2.bf16.msra.mxu0 0
      %310 = vmatprep.subr.bf16.mxu0 0
      %311 = vmatpush2.bf16.msra.mxu0 0
      %312 = vmatprep.subr.bf16.mxu0 0
      %313 = vmatpush2.bf16.msra.mxu0 0
      %314 = vmatprep.subr.bf16.mxu0 0
      %315 = vmatpush2.bf16.msra.mxu0 0
      %316 = vmatprep.subr.bf16.mxu0 0
      %317 = vmatpush2.bf16.msra.mxu0 0
      %318 = vmatprep.mubr.bf16.mxu0 0
      %319 = vmatmul.mubr.bf16.gmra.mxu0 %v223
      %v320 = vpop.f32.mrf.mxu0
      %v321 = vadd.f32 0.0, %v320
      %v322 = vpop.f32.mrf.mxu0
      %v323 = vpop.f32.mrf.mxu0
      %v324 = vadd.f32 0.0, %v323
      %v325 = vpop.f32.mrf.mxu0
      %326 = vdwg.mxu0
      %vm329 = vcmask 1040384
      %v330 = vrot.slane %v321, 7
      %v331 = vrot.slane %v324, 7
      %v332 = vsel %vm329, %v330, %v331
      %v335 = vsel %vm329, 0.0, %v330
      %v336 = vadd.f32 %v275, %v335
      %v337 = vadd.f32 %v276, %v332
      %s338 = scalar_lea.vmem %s1, 16
      %v339 = vld [vmem:[%s338] sm:$0xf]
      %v340 = vld [vmem:[%s338 + $0x4] sm:$0xf]
      %v343 = vunpack.c.l.b16 %v339
      %v344 = vunpack.c.l.b16 %v340
      %v345 = vpack.c.b16 %v344, %v343
      %347 = vmatprep.subr.bf16.mxu0 0
      %348 = vmatpush1.bf16.msra.mxu0 0
      %349 = vmatprep.subr.bf16.mxu0 0
      %350 = vmatpush1.bf16.msra.mxu0 0
      %351 = vmatprep.subr.bf16.mxu0 0
      %352 = vmatpush1.bf16.msra.mxu0 0
      %353 = vmatprep.subr.bf16.mxu0 0
      %354 = vmatpush1.bf16.msra.mxu0 0
      %355 = vmatprep.subr.bf16.mxu0 0
      %356 = vmatpush1.bf16.msra.mxu0 0
      %357 = vmatprep.subr.bf16.mxu0 0
      %358 = vmatpush1.bf16.msra.mxu0 0
      %359 = vmatprep.subr.bf16.mxu0 0
      %360 = vmatpush1.bf16.msra.mxu0 0
      %361 = vmatprep.subr.bf16.mxu0 0
      %362 = vmatpush1.bf16.msra.mxu0 %v345
      %363 = vmatprep.subr.bf16.mxu0 0
      %364 = vmatpush2.bf16.msra.mxu0 0
      %365 = vmatprep.subr.bf16.mxu0 0
      %366 = vmatpush2.bf16.msra.mxu0 0
      %367 = vmatprep.subr.bf16.mxu0 0
      %368 = vmatpush2.bf16.msra.mxu0 0
      %369 = vmatprep.subr.bf16.mxu0 0
      %370 = vmatpush2.bf16.msra.mxu0 0
      %371 = vmatprep.subr.bf16.mxu0 0
      %372 = vmatpush2.bf16.msra.mxu0 0
      %373 = vmatprep.subr.bf16.mxu0 0
      %374 = vmatpush2.bf16.msra.mxu0 0
      %375 = vmatprep.subr.bf16.mxu0 0
      %376 = vmatpush2.bf16.msra.mxu0 0
      %377 = vmatprep.subr.bf16.mxu0 0
      %378 = vmatpush2.bf16.msra.mxu0 0
      %379 = vmatprep.mubr.bf16.mxu0 0
      %380 = vmatmul.mubr.bf16.gmra.mxu0 %v223
      %v381 = vpop.f32.mrf.mxu0
      %v382 = vadd.f32 0.0, %v381
      %v383 = vpop.f32.mrf.mxu0
      %v384 = vpop.f32.mrf.mxu0
      %v385 = vadd.f32 0.0, %v384
      %v386 = vpop.f32.mrf.mxu0
      %387 = vdwg.mxu0
      %v388 = vadd.f32 %v336, %v382
      %v389 = vadd.f32 %v337, %v385
      %s390 = scalar_lea.vmem %s1, 24
      %v391 = vld [vmem:[%s390] sm:$0xf]
      %v392 = vld [vmem:[%s390 + $0x4] sm:$0xf]
      %v395 = vunpack.c.l.b16 %v391
      %v396 = vunpack.c.l.b16 %v392
      %v397 = vpack.c.b16 %v396, %v395
      %399 = vmatprep.subr.bf16.mxu0 0
      %400 = vmatpush1.bf16.msra.mxu0 0
      %401 = vmatprep.subr.bf16.mxu0 0
      %402 = vmatpush1.bf16.msra.mxu0 0
      %403 = vmatprep.subr.bf16.mxu0 0
      %404 = vmatpush1.bf16.msra.mxu0 0
      %405 = vmatprep.subr.bf16.mxu0 0
      %406 = vmatpush1.bf16.msra.mxu0 0
      %407 = vmatprep.subr.bf16.mxu0 0
      %408 = vmatpush1.bf16.msra.mxu0 0
      %409 = vmatprep.subr.bf16.mxu0 0
      %410 = vmatpush1.bf16.msra.mxu0 0
      %411 = vmatprep.subr.bf16.mxu0 0
      %412 = vmatpush1.bf16.msra.mxu0 0
      %413 = vmatprep.subr.bf16.mxu0 0
      %414 = vmatpush1.bf16.msra.mxu0 %v397
      %415 = vmatprep.subr.bf16.mxu0 0
      %416 = vmatpush2.bf16.msra.mxu0 0
      %417 = vmatprep.subr.bf16.mxu0 0
      %418 = vmatpush2.bf16.msra.mxu0 0
      %419 = vmatprep.subr.bf16.mxu0 0
      %420 = vmatpush2.bf16.msra.mxu0 0
      %421 = vmatprep.subr.bf16.mxu0 0
      %422 = vmatpush2.bf16.msra.mxu0 0
      %423 = vmatprep.subr.bf16.mxu0 0
      %424 = vmatpush2.bf16.msra.mxu0 0
      %425 = vmatprep.subr.bf16.mxu0 0
      %426 = vmatpush2.bf16.msra.mxu0 0
      %427 = vmatprep.subr.bf16.mxu0 0
      %428 = vmatpush2.bf16.msra.mxu0 0
      %429 = vmatprep.subr.bf16.mxu0 0
      %430 = vmatpush2.bf16.msra.mxu0 0
      %431 = vmatprep.mubr.bf16.mxu0 0
      %432 = vmatmul.mubr.bf16.gmra.mxu0 %v223
      %v433 = vpop.f32.mrf.mxu0
      %v434 = vadd.f32 0.0, %v433
      %v435 = vpop.f32.mrf.mxu0
      %v436 = vpop.f32.mrf.mxu0
      %v437 = vadd.f32 0.0, %v436
      %v438 = vpop.f32.mrf.mxu0
      %439 = vdwg.mxu0
      %vm442 = vcmask 1046528
      %v443 = vrot.slane %v434, 1
      %v444 = vrot.slane %v437, 1
      %v445 = vsel %vm442, %v443, %v444
      %v448 = vsel %vm442, %v444, 0.0
      %v449 = vadd.f32 %v388, %v445
      %v450 = vadd.f32 %v389, %v448
      %v451 = vld [vmem:[%s2] sm:$0x1]
      %v453 = vlaneseq
      %v454 = vshrl.u32 %v453, 7
      %v455 = vsub.s32 0, %v454
      %v456 = vrot.slane %v451, %v455
      %v458 = vadd.f32 %v449, %v456
      %v459 = vadd.f32 %v450, %v456
      %vm460 = vcmask 523264
      %461 = vst.msk [vmem:[%s204] sm:$0xff] %vm460, %v458
      %462 = vst.msk [vmem:[%s204 + $0x8] sm:$0xff] %vm460, %v459
      %v463 = vlaneseq
      %v464 = vshrl.u32 %v463, 7
      %v465 = vadd.s32 %v464, 8
      %vm466 = vcmp.lt.s32.totalorder %v464, 9
      %vm467 = vcmp.lt.s32.totalorder %v465, 9
      %v468 = vsel %vm466, 1, 0
      %v469 = vsel %vm467, 1, 0
      %v470 = vcvt.s32.f32 %v468
      %v471 = vcvt.s32.f32 %v469
      %v472 = vmul.f32 %v458, %v470
      %v473 = vmul.f32 %v459, %v471
      %v474 = vsel %vm460, %v472, 0.0
      %v475 = vsel %vm460, %v473, 0.0
      %v476 = vadd.f32 %v474, %v475
      %v477 = vrot.slane %v476, 4
      %v478 = vadd.f32 %v476, %v477
      %v479 = vrot.slane %v478, 2
      %v480 = vadd.f32 %v478, %v479
      %v481 = vrot.slane %v480, 1
      %v482 = vadd.f32 %v480, %v481
      %v483 = vmul.f32 %v472, %v458
      %v484 = vmul.f32 %v473, %v459
      %v485 = vsel %vm460, %v483, 0.0
      %v486 = vsel %vm460, %v484, 0.0
      %v487 = vadd.f32 %v485, %v486
      %v488 = vrot.slane %v487, 4
      %v489 = vadd.f32 %v487, %v488
      %v490 = vrot.slane %v489, 2
      %v491 = vadd.f32 %v489, %v490
      %v492 = vrot.slane %v491, 1
      %v493 = vadd.f32 %v491, %v492
      %v494 = vsel %vm329, %v482, %v493
      %vm495 = vcmask 517120
      %496 = vst.msk [vmem:[%s208] sm:$0x3] %vm495, %v494
      %p497 = scmp.lt.s32.totalorder %s16, 1
      %s498 = scalar_select %p497, %s16, 1
      %s499 = smul.addr %s498, 2
      %s500 = smul.addr %s499, 8
      %s501 = scalar_lea.vmem %s3, %s500
      %p502 = scmp.lt.s32.totalorder %s16, 1
      %s503 = scalar_select %p502, %s16, 1
      %s504 = smul.addr %s503, 2
      %s505 = scalar_lea.vmem %s4, %s504
      // Predicated region
      $region33: #{cbhg_forward.5} parent=31 // pred_check
        %p506 = pneg %p102
      $region34: #{cbhg_forward.5} parent=31 // pred_check_branch
        %508 = sbr.rel (%p506) target = $region36
      $region35: #{cbhg_forward.5} parent=31 // pred_region
        _
      $region36: #{cbhg_forward.5} parent=31 // pred_fallthru
        _
      // Predicated region
      $region37: #{cbhg_forward.5} parent=31 // pred_check
        %p509 = pneg %p128
      $region38: #{cbhg_forward.5} parent=31 // pred_check_branch
        %511 = sbr.rel (%p509) target = $region40
      $region39: #{cbhg_forward.5} parent=31 // pred_region
        _
      $region40: #{cbhg_forward.5} parent=31 // pred_fallthru
        _
    $region32: #{cbhg_forward.5} parent=5 // pred_fallthru
      _
    %p512 = scmp.le.s32.totalorder 2, %s11
    // Predicated region
    $region41: #{cbhg_forward.5} parent=5 // pred_check
      %p513 = pneg %p512
    $region42: #{cbhg_forward.5} parent=5 // pred_check_branch
      %515 = sbr.rel (%p513) target = $region44
    $region43: #{cbhg_forward.5} parent=5 // pred_region
      %s516 = ssub.s32 %s11, 2
      // Predicated region
      $region45: #{cbhg_forward.5} parent=43 // pred_check
        %p517 = pneg %p108
      $region46: #{cbhg_forward.5} parent=43 // pred_check_branch
        %519 = sbr.rel (%p517) target = $region48
      $region47: #{cbhg_forward.5} parent=43 // pred_region
        %p520 = scmp.lt.s32.totalorder %s17, 1
        %s521 = scalar_select %p520, %s17, 1
        %s522 = smul.addr %s521, 2
        %s523 = smul.addr %s522, 8
        %s524 = scalar_lea.vmem %s3, %s523
      $region48: #{cbhg_forward.5} parent=43 // pred_fallthru
        _
      // Predicated region
      $region49: #{cbhg_forward.5} parent=43 // pred_check
        %p525 = pneg %p134
      $region50: #{cbhg_forward.5} parent=43 // pred_check_branch
        %527 = sbr.rel (%p525) target = $region52
      $region51: #{cbhg_forward.5} parent=43 // pred_region
        %p528 = scmp.lt.s32.totalorder %s17, 1
        %s529 = scalar_select %p528, %s17, 1
        %s530 = smul.addr %s529, 2
        %s531 = scalar_lea.vmem %s4, %s530
      $region52: #{cbhg_forward.5} parent=43 // pred_fallthru
        _
    $region44: #{cbhg_forward.5} parent=5 // pred_fallthru
      _
  $region6: #{cbhg_forward.5} parent=0 // loop_footer
    %s15 = sadd.s32 1, %s11
  $region7: #{cbhg_forward.5} parent=0 // loop_footer_branch
    %10 = sbr.rel target = $region3
  $region8: #{cbhg_forward.5} parent=0 // loop_exit
    _

// kernel: cbhg_forward.7
$region0: #{cbhg_forward.7}
  #allocation0 [shape = 'u32[]', space=smem, size = 0x4, offset = 0x4, fixed_abs, tag = 'smem constant byte address 0x4 - core index']
  #allocation1 [shape = 'u32[144,128]{1,0:T(1,128)}', space=vmem, size = 0x12000, scoped, tag = 'internal scratch']
  %s0 = inlined_call_operand.vmem [shape: f32[2,16,32], index: 0, kind: input, shape index: {}]
  %s1 = inlined_call_operand.vmem [shape: f32[2,32], index: 1, kind: input, shape index: {}]
  %s2 = inlined_call_operand.vmem [shape: bf16[3,32,32], index: 2, kind: input, shape index: {}]
  %s3 = inlined_call_operand.vmem [shape: f32[1,32], index: 3, kind: input, shape index: {}]
  %s4 = inlined_call_operand.vmem [shape: f32[2,16,32], index: 4, kind: output, shape index: {0}]
  %s5 = inlined_call_operand.vmem [shape: f32[2,2,32], index: 5, kind: output, shape index: {1}]
  %6 = xla_tuple %s4, %s5
  %s7 = sld [smem:[#allocation0]]
  $region57: #{cbhg_forward.7} parent=0
    _
  %s9 = ssub.s32 1, %s7
  %s10 = scalar_select 0, %s9, %s7
  loop: start=0, step=1, limit=4
  $region2: #{cbhg_forward.7} parent=0 // loop_pre_header
    _
  $region3: #{cbhg_forward.7} parent=0 // loop_header
    %s12 = sphi 0, %s16
    %p13 = scmp.ge.s32.totalorder %s12, 4
    %s22 = sphi 0, %s24
    %s25 = sphi 0, %s22
    %s26 = sphi 0, %s25
    %s42 = sphi 0, %s26
    %s46 = sphi 0, %s46
    %s48 = sphi 0, %s46
    %s49 = sphi 0, %s48
    %s63 = sphi 0, %s49
    %s67 = sphi 0, %s67
    %s69 = sphi 0, %s67
    %s70 = sphi 0, %s69
    %s84 = sphi 0, %s70
    %s88 = sphi 0, %s88
    %s90 = sphi 0, %s88
    %s91 = sphi 0, %s90
    %s105 = sphi 0, %s91
    %s111 = sphi 0, %s113
    %s114 = sphi 0, %s111
    %s115 = sphi 0, %s114
    %s131 = sphi 0, %s115
    %s137 = sphi 0, %s139
    %s140 = sphi 0, %s137
    %s141 = sphi 0, %s140
    %s157 = sphi 0, %s141
  $region4: #{cbhg_forward.7} parent=0 // loop_header_branch
    %15 = sbr.rel (%p13) target = $region8
  $region5: #{cbhg_forward.7} parent=0 // loop_body
    %s17 = ssub.s32 %s12, 1
    %s18 = ssub.s32 %s12, 2
    %s19 = sadd.s32 %s12, 1
    %s20 = ssub.s32 %s12, %s19
    %p21 = scmp.eq.s32.totalorder %s20, 0
    %s23 = sadd.s32 %s22, 1
    %s24 = scalar_select %p21, %s22, %s23
    %p27 = pneg %p21
    %p28 = scmp.eq.s32.totalorder %s12, 1
    %p29 = por %p27, %p28
    %p30 = scmp.ne.s32.totalorder %s22, %s25
    %p31 = scmp.eq.s32.totalorder %s12, 0
    %p32 = por %p30, %p31
    %p33 = scmp.ne.s32.totalorder %s22, %s25
    %p34 = scmp.eq.s32.totalorder %s17, 1
    %p35 = por %p33, %p34
    %p36 = scmp.ne.s32.totalorder %s25, %s26
    %p37 = scmp.eq.s32.totalorder %s17, 0
    %p38 = por %p36, %p37
    %p39 = scmp.ne.s32.totalorder %s25, %s26
    %p40 = scmp.eq.s32.totalorder %s18, 1
    %p41 = por %p39, %p40
    %p43 = scmp.ne.s32.totalorder %s26, %s42
    %p44 = scmp.eq.s32.totalorder %s18, 0
    %p45 = por %p43, %p44
    %s47 = sadd.s32 %s46, 1
    %p50 = scmp.eq.s32.totalorder %s12, 1
    %p51 = scmp.ne.s32.totalorder %s46, %s48
    %p52 = scmp.eq.s32.totalorder %s12, 0
    %p53 = por %p51, %p52
    %p54 = scmp.ne.s32.totalorder %s46, %s48
    %p55 = scmp.eq.s32.totalorder %s17, 1
    %p56 = por %p54, %p55
    %p57 = scmp.ne.s32.totalorder %s48, %s49
    %p58 = scmp.eq.s32.totalorder %s17, 0
    %p59 = por %p57, %p58
    %p60 = scmp.ne.s32.totalorder %s48, %s49
    %p61 = scmp.eq.s32.totalorder %s18, 1
    %p62 = por %p60, %p61
    %p64 = scmp.ne.s32.totalorder %s49, %s63
    %p65 = scmp.eq.s32.totalorder %s18, 0
    %p66 = por %p64, %p65
    %s68 = sadd.s32 %s67, 1
    %p71 = scmp.eq.s32.totalorder %s12, 1
    %p72 = scmp.ne.s32.totalorder %s67, %s69
    %p73 = scmp.eq.s32.totalorder %s12, 0
    %p74 = por %p72, %p73
    %p75 = scmp.ne.s32.totalorder %s67, %s69
    %p76 = scmp.eq.s32.totalorder %s17, 1
    %p77 = por %p75, %p76
    %p78 = scmp.ne.s32.totalorder %s69, %s70
    %p79 = scmp.eq.s32.totalorder %s17, 0
    %p80 = por %p78, %p79
    %p81 = scmp.ne.s32.totalorder %s69, %s70
    %p82 = scmp.eq.s32.totalorder %s18, 1
    %p83 = por %p81, %p82
    %p85 = scmp.ne.s32.totalorder %s70, %s84
    %p86 = scmp.eq.s32.totalorder %s18, 0
    %p87 = por %p85, %p86
    %s89 = sadd.s32 %s88, 1
    %p92 = scmp.eq.s32.totalorder %s12, 1
    %p93 = scmp.ne.s32.totalorder %s88, %s90
    %p94 = scmp.eq.s32.totalorder %s12, 0
    %p95 = por %p93, %p94
    %p96 = scmp.ne.s32.totalorder %s88, %s90
    %p97 = scmp.eq.s32.totalorder %s17, 1
    %p98 = por %p96, %p97
    %p99 = scmp.ne.s32.totalorder %s90, %s91
    %p100 = scmp.eq.s32.totalorder %s17, 0
    %p101 = por %p99, %p100
    %p102 = scmp.ne.s32.totalorder %s90, %s91
    %p103 = scmp.eq.s32.totalorder %s18, 1
    %p104 = por %p102, %p103
    %p106 = scmp.ne.s32.totalorder %s91, %s105
    %p107 = scmp.eq.s32.totalorder %s18, 0
    %p108 = por %p106, %p107
    %s109 = ssub.s32 %s12, %s19
    %p110 = scmp.eq.s32.totalorder %s109, 0
    %s112 = sadd.s32 %s111, 1
    %s113 = scalar_select %p110, %s111, %s112
    %p116 = pneg %p110
    %p117 = scmp.eq.s32.totalorder %s12, 1
    %p118 = por %p116, %p117
    %p119 = scmp.ne.s32.totalorder %s111, %s114
    %p120 = scmp.eq.s32.totalorder %s12, 0
    %p121 = por %p119, %p120
    %p122 = scmp.ne.s32.totalorder %s111, %s114
    %p123 = scmp.eq.s32.totalorder %s17, 1
    %p124 = por %p122, %p123
    %p125 = scmp.ne.s32.totalorder %s114, %s115
    %p126 = scmp.eq.s32.totalorder %s17, 0
    %p127 = por %p125, %p126
    %p128 = scmp.ne.s32.totalorder %s114, %s115
    %p129 = scmp.eq.s32.totalorder %s18, 1
    %p130 = por %p128, %p129
    %p132 = scmp.ne.s32.totalorder %s115, %s131
    %p133 = scmp.eq.s32.totalorder %s18, 0
    %p134 = por %p132, %p133
    %s135 = ssub.s32 %s12, %s19
    %p136 = scmp.eq.s32.totalorder %s135, 0
    %s138 = sadd.s32 %s137, 1
    %s139 = scalar_select %p136, %s137, %s138
    %p142 = pneg %p136
    %p143 = scmp.eq.s32.totalorder %s12, 1
    %p144 = por %p142, %p143
    %p145 = scmp.ne.s32.totalorder %s137, %s140
    %p146 = scmp.eq.s32.totalorder %s12, 0
    %p147 = por %p145, %p146
    %p148 = scmp.ne.s32.totalorder %s137, %s140
    %p149 = scmp.eq.s32.totalorder %s17, 1
    %p150 = por %p148, %p149
    %p151 = scmp.ne.s32.totalorder %s140, %s141
    %p152 = scmp.eq.s32.totalorder %s17, 0
    %p153 = por %p151, %p152
    %p154 = scmp.ne.s32.totalorder %s140, %s141
    %p155 = scmp.eq.s32.totalorder %s18, 1
    %p156 = por %p154, %p155
    %p158 = scmp.ne.s32.totalorder %s141, %s157
    %p159 = scmp.eq.s32.totalorder %s18, 0
    %p160 = por %p158, %p159
    %p161 = scmp.le.s32.totalorder 1, %s12
    %p162 = scmp.lt.s32.totalorder %s12, 3
    %p163 = pnand %p161, %p162
    %p164 = pneg %p163
    // Predicated region
    $region9: #{cbhg_forward.7} parent=5 // pred_check
      _
    $region10: #{cbhg_forward.7} parent=5 // pred_check_branch
      %166 = sbr.rel (%p163) target = $region12
    $region11: #{cbhg_forward.7} parent=5 // pred_region
      %s167 = ssub.s32 %s12, 1
      // Predicated region
      $region13: #{cbhg_forward.7} parent=11 // pred_check
        %p168 = pneg %p59
      $region14: #{cbhg_forward.7} parent=11 // pred_check_branch
        %170 = sbr.rel (%p168) target = $region16
      $region15: #{cbhg_forward.7} parent=11 // pred_region
        _
      $region16: #{cbhg_forward.7} parent=11 // pred_fallthru
        _
      // Predicated region
      $region17: #{cbhg_forward.7} parent=11 // pred_check
        %p171 = pneg %p80
      $region18: #{cbhg_forward.7} parent=11 // pred_check_branch
        %173 = sbr.rel (%p171) target = $region20
      $region19: #{cbhg_forward.7} parent=11 // pred_region
        _
      $region20: #{cbhg_forward.7} parent=11 // pred_fallthru
        _
      // Predicated region
      $region21: #{cbhg_forward.7} parent=11 // pred_check
        %p174 = pneg %p101
      $region22: #{cbhg_forward.7} parent=11 // pred_check_branch
        %176 = sbr.rel (%p174) target = $region24
      $region23: #{cbhg_forward.7} parent=11 // pred_region
        _
      $region24: #{cbhg_forward.7} parent=11 // pred_fallthru
        _
    $region12: #{cbhg_forward.7} parent=5 // pred_fallthru
      _
    %p177 = scmp.lt.s32.totalorder %s12, 2
    // Predicated region
    $region25: #{cbhg_forward.7} parent=5 // pred_check
      %p178 = pneg %p177
    $region26: #{cbhg_forward.7} parent=5 // pred_check_branch
      %180 = sbr.rel (%p178) target = $region28
    $region27: #{cbhg_forward.7} parent=5 // pred_region
      // Predicated region
      $region29: #{cbhg_forward.7} parent=27 // pred_check
        %p181 = pneg %p32
      $region30: #{cbhg_forward.7} parent=27 // pred_check_branch
        %183 = sbr.rel (%p181) target = $region32
      $region31: #{cbhg_forward.7} parent=27 // pred_region
        %p184 = scmp.lt.s32.totalorder %s12, 1
        %s185 = scalar_select %p184, %s12, 1
        %s186 = smul.addr %s185, 2
        %s187 = smul.addr %s186, 8
        %s188 = scalar_lea.vmem %s0, %s187
      $region32: #{cbhg_forward.7} parent=27 // pred_fallthru
        _
    $region28: #{cbhg_forward.7} parent=5 // pred_fallthru
      _
    %p189 = scmp.le.s32.totalorder 1, %s12
    %p190 = scmp.lt.s32.totalorder %s12, 3
    %p191 = pnand %p189, %p190
    %p192 = pneg %p191
    // Predicated region
    $region33: #{cbhg_forward.7} parent=5 // pred_check
      _
    $region34: #{cbhg_forward.7} parent=5 // pred_check_branch
      %194 = sbr.rel (%p191) target = $region36
    $region35: #{cbhg_forward.7} parent=5 // pred_region
      %s195 = ssub.s32 %s12, 1
      %p196 = scmp.lt.s32.totalorder %s17, 1
      %s197 = scalar_select %p196, %s17, 1
      %s198 = smul.addr %s197, 2
      %s199 = smul.addr %s198, 8
      %s200 = scalar_lea.vmem %s0, %s199
      %p201 = pneg %p38
      %p202 = pneg %p35
      %p203 = pneg %p59
      %p204 = pneg %p56
      %p205 = pneg %p80
      %p206 = pneg %p77
      %p207 = pneg %p101
      %p208 = pneg %p98
      %p209 = pneg %p127
      %p210 = pneg %p124
      %p211 = scmp.lt.s32.totalorder %s17, 1
      %s212 = scalar_select %p211, %s17, 1
      %s213 = smul.addr %s212, 2
      %s214 = smul.addr %s213, 8
      %s215 = scalar_lea.vmem %s4, %s214
      %p216 = pneg %p153
      %p217 = pneg %p150
      %p218 = scmp.lt.s32.totalorder %s17, 1
      %s219 = scalar_select %p218, %s17, 1
      %s220 = smul.addr %s219, 2
      %s221 = scalar_lea.vmem %s5, %s220
      %p222 = scmp.lt.s32.totalorder %s17, 1
      %s223 = scalar_select %p222, %s17, 1
      %s224 = smul.addr %s223, 2
      %s225 = smul.addr %s224, 8
      %s226 = scalar_lea.vmem %s0, %s225
      %p227 = scmp.lt.s32.totalorder %s17, 1
      %s228 = scalar_select %p227, %s17, 1
      %s229 = smul.addr %s228, 2
      %s230 = smul.addr %s229, 8
      %s231 = scalar_lea.vmem %s4, %s230
      %p232 = scmp.lt.s32.totalorder %s17, 1
      %s233 = scalar_select %p232, %s17, 1
      %s234 = smul.addr %s233, 2
      %s235 = scalar_lea.vmem %s5, %s234
      %v237 = vld [vmem:[%s226] sm:$0xff]
      %v238 = vld [vmem:[%s226 + $0x8] sm:$0xff]
      %v239 = vld [vmem:[%s1] sm:$0x1]
      %v240 = vlaneseq
      %v241 = vshrl.u32 %v240, 7
      %v242 = vsub.s32 0, %v241
      %v243 = vrot.slane %v239, %v242
      %v244 = vmul.f32 %v237, %v243
      %v245 = vmul.f32 %v238, %v243
      %v246 = vld [vmem:[%s1 + $0x1] sm:$0x1]
      %v247 = vlaneseq
      %v248 = vshrl.u32 %v247, 7
      %v249 = vsub.s32 0, %v248
      %v250 = vrot.slane %v246, %v249
      %v251 = vadd.f32 %v244, %v250
      %v252 = vadd.f32 %v245, %v250
      %v253 = vmax.f32 %v251, 0.0
      %v254 = vmax.f32 %v252, 0.0
      %v255 = vlaneseq
      %v256 = vshrl.u32 %v255, 7
      %v257 = vadd.s32 %v256, 8
      %vm258 = vcmp.lt.s32.totalorder %v256, 8
      %vm259 = vcmp.lt.s32.totalorder %v257, 8
      %v260 = vsel %vm258, 1, 0
      %v261 = vsel %vm259, 1, 0
      %v262 = vcvt.s32.f32 %v260
      %v263 = vcvt.s32.f32 %v261
      %v264 = vmul.f32 %v253, %v262
      %v265 = vmul.f32 %v254, %v263
      %v266 = vpack.c.bf16 %v265, %v264
      %v267 = vld [vmem:[%s2] sm:$0xf]
      %v268 = vld [vmem:[%s2 + $0x4] sm:$0xf]
      %v269 = vld [vmem:[%s2 + $0x8] sm:$0xf]
      %v270 = vld [vmem:[%s2 + $0xc] sm:$0xf]
      %v275 = vunpack.c.l.b16 %v267
      %v276 = vunpack.c.l.b16 %v268
      %v277 = vunpack.c.l.b16 %v269
      %v278 = vunpack.c.l.b16 %v270
      %v279 = vpack.c.b16 %v276, %v275
      %v280 = vpack.c.b16 %v278, %v277
      %vm283 = vcmask 261120
      %v285 = vsel %vm283, %v266, 0
      %287 = vmatprep.subr.bf16.mxu0 0
      %288 = vmatpush1.bf16.msra.mxu0 0
      %289 = vmatprep.subr.bf16.mxu0 0
      %290 = vmatpush1.bf16.msra.mxu0 0
      %291 = vmatprep.subr.bf16.mxu0 0
      %292 = vmatpush1.bf16.msra.mxu0 0
      %293 = vmatprep.subr.bf16.mxu0 0
      %294 = vmatpush1.bf16.msra.mxu0 0
      %295 = vmatprep.subr.bf16.mxu0 0
      %296 = vmatpush1.bf16.msra.mxu0 0
      %297 = vmatprep.subr.bf16.mxu0 0
      %298 = vmatpush1.bf16.msra.mxu0 0
      %299 = vmatprep.subr.bf16.mxu0 0
      %300 = vmatpush1.bf16.msra.mxu0 %v280
      %301 = vmatprep.subr.bf16.mxu0 0
      %302 = vmatpush1.bf16.msra.mxu0 %v279
      %303 = vmatprep.subr.bf16.mxu0 0
      %304 = vmatpush2.bf16.msra.mxu0 0
      %305 = vmatprep.subr.bf16.mxu0 0
      %306 = vmatpush2.bf16.msra.mxu0 0
      %307 = vmatprep.subr.bf16.mxu0 0
      %308 = vmatpush2.bf16.msra.mxu0 0
      %309 = vmatprep.subr.bf16.mxu0 0
      %310 = vmatpush2.bf16.msra.mxu0 0
      %311 = vmatprep.subr.bf16.mxu0 0
      %312 = vmatpush2.bf16.msra.mxu0 0
      %313 = vmatprep.subr.bf16.mxu0 0
      %314 = vmatpush2.bf16.msra.mxu0 0
      %315 = vmatprep.subr.bf16.mxu0 0
      %316 = vmatpush2.bf16.msra.mxu0 0
      %317 = vmatprep.subr.bf16.mxu0 0
      %318 = vmatpush2.bf16.msra.mxu0 0
      %319 = vmatprep.mubr.bf16.mxu0 0
      %320 = vmatmul.mubr.bf16.gmra.mxu0 %v285
      %v321 = vpop.f32.mrf.mxu0
      %v322 = vadd.f32 0.0, %v321
      %v323 = vpop.f32.mrf.mxu0
      %v324 = vpop.f32.mrf.mxu0
      %v325 = vadd.f32 0.0, %v324
      %v326 = vpop.f32.mrf.mxu0
      %327 = vdwg.mxu0
      %s328 = scalar_lea.vmem %s2, 16
      %v329 = vld [vmem:[%s328] sm:$0xf]
      %v330 = vld [vmem:[%s328 + $0x4] sm:$0xf]
      %v331 = vld [vmem:[%s328 + $0x8] sm:$0xf]
      %v332 = vld [vmem:[%s328 + $0xc] sm:$0xf]
      %v337 = vunpack.c.l.b16 %v329
      %v338 = vunpack.c.l.b16 %v330
      %v339 = vunpack.c.l.b16 %v331
      %v340 = vunpack.c.l.b16 %v332
      %v341 = vpack.c.b16 %v338, %v337
      %v342 = vpack.c.b16 %v340, %v339
      %345 = vmatprep.subr.bf16.mxu0 0
      %346 = vmatpush1.bf16.msra.mxu0 0
      %347 = vmatprep.subr.bf16.mxu0 0
      %348 = vmatpush1.bf16.msra.mxu0 0
      %349 = vmatprep.subr.bf16.mxu0 0
      %350 = vmatpush1.bf16.msra.mxu0 0
      %351 = vmatprep.subr.bf16.mxu0 0
      %352 = vmatpush1.bf16.msra.mxu0 0
      %353 = vmatprep.subr.bf16.mxu0 0
      %354 = vmatpush1.bf16.msra.mxu0 0
      %355 = vmatprep.subr.bf16.mxu0 0
      %356 = vmatpush1.bf16.msra.mxu0 0
      %357 = vmatprep.subr.bf16.mxu0 0
      %358 = vmatpush1.bf16.msra.mxu0 %v342
      %359 = vmatprep.subr.bf16.mxu0 0
      %360 = vmatpush1.bf16.msra.mxu0 %v341
      %361 = vmatprep.subr.bf16.mxu0 0
      %362 = vmatpush2.bf16.msra.mxu0 0
      %363 = vmatprep.subr.bf16.mxu0 0
      %364 = vmatpush2.bf16.msra.mxu0 0
      %365 = vmatprep.subr.bf16.mxu0 0
      %366 = vmatpush2.bf16.msra.mxu0 0
      %367 = vmatprep.subr.bf16.mxu0 0
      %368 = vmatpush2.bf16.msra.mxu0 0
      %369 = vmatprep.subr.bf16.mxu0 0
      %370 = vmatpush2.bf16.msra.mxu0 0
      %371 = vmatprep.subr.bf16.mxu0 0
      %372 = vmatpush2.bf16.msra.mxu0 0
      %373 = vmatprep.subr.bf16.mxu0 0
      %374 = vmatpush2.bf16.msra.mxu0 0
      %375 = vmatprep.subr.bf16.mxu0 0
      %376 = vmatpush2.bf16.msra.mxu0 0
      %377 = vmatprep.mubr.bf16.mxu0 0
      %378 = vmatmul.mubr.bf16.gmra.mxu0 %v285
      %v379 = vpop.f32.mrf.mxu0
      %v380 = vadd.f32 0.0, %v379
      %v381 = vpop.f32.mrf.mxu0
      %v382 = vpop.f32.mrf.mxu0
      %v383 = vadd.f32 0.0, %v382
      %v384 = vpop.f32.mrf.mxu0
      %385 = vdwg.mxu0
      %s386 = scalar_lea.vmem %s2, 32
      %v387 = vld [vmem:[%s386] sm:$0xf]
      %v388 = vld [vmem:[%s386 + $0x4] sm:$0xf]
      %v389 = vld [vmem:[%s386 + $0x8] sm:$0xf]
      %v390 = vld [vmem:[%s386 + $0xc] sm:$0xf]
      %v395 = vunpack.c.l.b16 %v387
      %v396 = vunpack.c.l.b16 %v388
      %v397 = vunpack.c.l.b16 %v389
      %v398 = vunpack.c.l.b16 %v390
      %v399 = vpack.c.b16 %v396, %v395
      %v400 = vpack.c.b16 %v398, %v397
      %403 = vmatprep.subr.bf16.mxu0 0
      %404 = vmatpush1.bf16.msra.mxu0 0
      %405 = vmatprep.subr.bf16.mxu0 0
      %406 = vmatpush1.bf16.msra.mxu0 0
      %407 = vmatprep.subr.bf16.mxu0 0
      %408 = vmatpush1.bf16.msra.mxu0 0
      %409 = vmatprep.subr.bf16.mxu0 0
      %410 = vmatpush1.bf16.msra.mxu0 0
      %411 = vmatprep.subr.bf16.mxu0 0
      %412 = vmatpush1.bf16.msra.mxu0 0
      %413 = vmatprep.subr.bf16.mxu0 0
      %414 = vmatpush1.bf16.msra.mxu0 0
      %415 = vmatprep.subr.bf16.mxu0 0
      %416 = vmatpush1.bf16.msra.mxu0 %v400
      %417 = vmatprep.subr.bf16.mxu0 0
      %418 = vmatpush1.bf16.msra.mxu0 %v399
      %419 = vmatprep.subr.bf16.mxu0 0
      %420 = vmatpush2.bf16.msra.mxu0 0
      %421 = vmatprep.subr.bf16.mxu0 0
      %422 = vmatpush2.bf16.msra.mxu0 0
      %423 = vmatprep.subr.bf16.mxu0 0
      %424 = vmatpush2.bf16.msra.mxu0 0
      %425 = vmatprep.subr.bf16.mxu0 0
      %426 = vmatpush2.bf16.msra.mxu0 0
      %427 = vmatprep.subr.bf16.mxu0 0
      %428 = vmatpush2.bf16.msra.mxu0 0
      %429 = vmatprep.subr.bf16.mxu0 0
      %430 = vmatpush2.bf16.msra.mxu0 0
      %431 = vmatprep.subr.bf16.mxu0 0
      %432 = vmatpush2.bf16.msra.mxu0 0
      %433 = vmatprep.subr.bf16.mxu0 0
      %434 = vmatpush2.bf16.msra.mxu0 0
      %435 = vmatprep.mubr.bf16.mxu0 0
      %436 = vmatmul.mubr.bf16.gmra.mxu0 %v285
      %v437 = vpop.f32.mrf.mxu0
      %v438 = vadd.f32 0.0, %v437
      %v439 = vpop.f32.mrf.mxu0
      %v440 = vpop.f32.mrf.mxu0
      %v441 = vadd.f32 0.0, %v440
      %v442 = vpop.f32.mrf.mxu0
      %443 = vdwg.mxu0
      %vm446 = vcmask 1040384
      %v447 = vrot.slane %v322, 7
      %v448 = vrot.slane %v325, 7
      %v449 = vsel %vm446, %v447, %v448
      %v452 = vsel %vm446, 0.0, %v447
      %v453 = vadd.f32 %v452, %v380
      %v454 = vadd.f32 %v449, %v383
      %vm457 = vcmask 1046528
      %v458 = vrot.slane %v438, 1
      %v459 = vrot.slane %v441, 1
      %v460 = vsel %vm457, %v458, %v459
      %v463 = vsel %vm457, %v459, 0.0
      %v464 = vadd.f32 %v453, %v460
      %v465 = vadd.f32 %v454, %v463
      %v466 = vld [vmem:[%s3] sm:$0x1]
      %v468 = vlaneseq
      %v469 = vshrl.u32 %v468, 7
      %v470 = vsub.s32 0, %v469
      %v471 = vrot.slane %v466, %v470
      %v473 = vadd.f32 %v464, %v471
      %v474 = vadd.f32 %v465, %v471
      %475 = vst.msk [vmem:[%s231] sm:$0xff] %vm283, %v473
      %476 = vst.msk [vmem:[%s231 + $0x8] sm:$0xff] %vm283, %v474
      %v477 = vmul.f32 %v473, %v262
      %v478 = vmul.f32 %v474, %v263
      %v479 = vsel %vm283, %v477, 0.0
      %v480 = vsel %vm283, %v478, 0.0
      %v481 = vadd.f32 %v479, %v480
      %v482 = vrot.slane %v481, 4
      %v483 = vadd.f32 %v481, %v482
      %v484 = vrot.slane %v483, 2
      %v485 = vadd.f32 %v483, %v484
      %v486 = vrot.slane %v485, 1
      %v487 = vadd.f32 %v485, %v486
      %v488 = vmul.f32 %v477, %v473
      %v489 = vmul.f32 %v478, %v474
      %v490 = vsel %vm283, %v488, 0.0
      %v491 = vsel %vm283, %v489, 0.0
      %v492 = vadd.f32 %v490, %v491
      %v493 = vrot.slane %v492, 4
      %v494 = vadd.f32 %v492, %v493
      %v495 = vrot.slane %v494, 2
      %v496 = vadd.f32 %v494, %v495
      %v497 = vrot.slane %v496, 1
      %v498 = vadd.f32 %v496, %v497
      %v499 = vsel %vm446, %v487, %v498
      %vm500 = vcmask 254976
      %501 = vst.msk [vmem:[%s235] sm:$0x3] %vm500, %v499
      %p502 = scmp.lt.s32.totalorder %s17, 1
      %s503 = scalar_select %p502, %s17, 1
      %s504 = smul.addr %s503, 2
      %s505 = smul.addr %s504, 8
      %s506 = scalar_lea.vmem %s4, %s505
      %p507 = scmp.lt.s32.totalorder %s17, 1
      %s508 = scalar_select %p507, %s17, 1
      %s509 = smul.addr %s508, 2
      %s510 = scalar_lea.vmem %s5, %s509
      // Predicated region
      $region37: #{cbhg_forward.7} parent=35 // pred_check
        %p511 = pneg %p124
      $region38: #{cbhg_forward.7} parent=35 // pred_check_branch
        %513 = sbr.rel (%p511) target = $region40
      $region39: #{cbhg_forward.7} parent=35 // pred_region
        _
      $region40: #{cbhg_forward.7} parent=35 // pred_fallthru
        _
      // Predicated region
      $region41: #{cbhg_forward.7} parent=35 // pred_check
        %p514 = pneg %p150
      $region42: #{cbhg_forward.7} parent=35 // pred_check_branch
        %516 = sbr.rel (%p514) target = $region44
      $region43: #{cbhg_forward.7} parent=35 // pred_region
        _
      $region44: #{cbhg_forward.7} parent=35 // pred_fallthru
        _
    $region36: #{cbhg_forward.7} parent=5 // pred_fallthru
      _
    %p517 = scmp.le.s32.totalorder 2, %s12
    // Predicated region
    $region45: #{cbhg_forward.7} parent=5 // pred_check
      %p518 = pneg %p517
    $region46: #{cbhg_forward.7} parent=5 // pred_check_branch
      %520 = sbr.rel (%p518) target = $region48
    $region47: #{cbhg_forward.7} parent=5 // pred_region
      %s521 = ssub.s32 %s12, 2
      // Predicated region
      $region49: #{cbhg_forward.7} parent=47 // pred_check
        %p522 = pneg %p130
      $region50: #{cbhg_forward.7} parent=47 // pred_check_branch
        %524 = sbr.rel (%p522) target = $region52
      $region51: #{cbhg_forward.7} parent=47 // pred_region
        %p525 = scmp.lt.s32.totalorder %s18, 1
        %s526 = scalar_select %p525, %s18, 1
        %s527 = smul.addr %s526, 2
        %s528 = smul.addr %s527, 8
        %s529 = scalar_lea.vmem %s4, %s528
      $region52: #{cbhg_forward.7} parent=47 // pred_fallthru
        _
      // Predicated region
      $region53: #{cbhg_forward.7} parent=47 // pred_check
        %p530 = pneg %p156
      $region54: #{cbhg_forward.7} parent=47 // pred_check_branch
        %532 = sbr.rel (%p530) target = $region56
      $region55: #{cbhg_forward.7} parent=47 // pred_region
        %p533 = scmp.lt.s32.totalorder %s18, 1
        %s534 = scalar_select %p533, %s18, 1
        %s535 = smul.addr %s534, 2
        %s536 = scalar_lea.vmem %s5, %s535
      $region56: #{cbhg_forward.7} parent=47 // pred_fallthru
        _
    $region48: #{cbhg_forward.7} parent=5 // pred_fallthru
      _
  $region6: #{cbhg_forward.7} parent=0 // loop_footer
    %s16 = sadd.s32 1, %s12
  $region7: #{cbhg_forward.7} parent=0 // loop_footer_branch
    %11 = sbr.rel target = $region3
  $region8: #{cbhg_forward.7} parent=0 // loop_exit
    _

// kernel: cbhg_forward.6
$region0: #{cbhg_forward.6}
  #allocation0 [shape = 'u32[]', space=smem, size = 0x4, offset = 0x4, fixed_abs, tag = 'smem constant byte address 0x4 - core index']
  #allocation1 [shape = 'u32[144,128]{1,0:T(1,128)}', space=vmem, size = 0x12000, scoped, tag = 'internal scratch']
  %s0 = inlined_call_operand.vmem [shape: f32[2,16,64], index: 0, kind: input, shape index: {}]
  %s1 = inlined_call_operand.vmem [shape: f32[2,64], index: 1, kind: input, shape index: {}]
  %s2 = inlined_call_operand.vmem [shape: bf16[3,64,32], index: 2, kind: input, shape index: {}]
  %s3 = inlined_call_operand.vmem [shape: f32[1,32], index: 3, kind: input, shape index: {}]
  %s4 = inlined_call_operand.vmem [shape: f32[2,16,32], index: 4, kind: output, shape index: {0}]
  %s5 = inlined_call_operand.vmem [shape: f32[2,2,32], index: 5, kind: output, shape index: {1}]
  %6 = xla_tuple %s4, %s5
  %s7 = sld [smem:[#allocation0]]
  $region57: #{cbhg_forward.6} parent=0
    _
  %s9 = ssub.s32 1, %s7
  %s10 = scalar_select 0, %s9, %s7
  loop: start=0, step=1, limit=4
  $region2: #{cbhg_forward.6} parent=0 // loop_pre_header
    _
  $region3: #{cbhg_forward.6} parent=0 // loop_header
    %s12 = sphi 0, %s16
    %p13 = scmp.ge.s32.totalorder %s12, 4
    %s22 = sphi 0, %s24
    %s25 = sphi 0, %s22
    %s26 = sphi 0, %s25
    %s42 = sphi 0, %s26
    %s46 = sphi 0, %s46
    %s48 = sphi 0, %s46
    %s49 = sphi 0, %s48
    %s63 = sphi 0, %s49
    %s67 = sphi 0, %s67
    %s69 = sphi 0, %s67
    %s70 = sphi 0, %s69
    %s84 = sphi 0, %s70
    %s88 = sphi 0, %s88
    %s90 = sphi 0, %s88
    %s91 = sphi 0, %s90
    %s105 = sphi 0, %s91
    %s111 = sphi 0, %s113
    %s114 = sphi 0, %s111
    %s115 = sphi 0, %s114
    %s131 = sphi 0, %s115
    %s137 = sphi 0, %s139
    %s140 = sphi 0, %s137
    %s141 = sphi 0, %s140
    %s157 = sphi 0, %s141
  $region4: #{cbhg_forward.6} parent=0 // loop_header_branch
    %15 = sbr.rel (%p13) target = $region8
  $region5: #{cbhg_forward.6} parent=0 // loop_body
    %s17 = ssub.s32 %s12, 1
    %s18 = ssub.s32 %s12, 2
    %s19 = sadd.s32 %s12, 1
    %s20 = ssub.s32 %s12, %s19
    %p21 = scmp.eq.s32.totalorder %s20, 0
    %s23 = sadd.s32 %s22, 1
    %s24 = scalar_select %p21, %s22, %s23
    %p27 = pneg %p21
    %p28 = scmp.eq.s32.totalorder %s12, 1
    %p29 = por %p27, %p28
    %p30 = scmp.ne.s32.totalorder %s22, %s25
    %p31 = scmp.eq.s32.totalorder %s12, 0
    %p32 = por %p30, %p31
    %p33 = scmp.ne.s32.totalorder %s22, %s25
    %p34 = scmp.eq.s32.totalorder %s17, 1
    %p35 = por %p33, %p34
    %p36 = scmp.ne.s32.totalorder %s25, %s26
    %p37 = scmp.eq.s32.totalorder %s17, 0
    %p38 = por %p36, %p37
    %p39 = scmp.ne.s32.totalorder %s25, %s26
    %p40 = scmp.eq.s32.totalorder %s18, 1
    %p41 = por %p39, %p40
    %p43 = scmp.ne.s32.totalorder %s26, %s42
    %p44 = scmp.eq.s32.totalorder %s18, 0
    %p45 = por %p43, %p44
    %s47 = sadd.s32 %s46, 1
    %p50 = scmp.eq.s32.totalorder %s12, 1
    %p51 = scmp.ne.s32.totalorder %s46, %s48
    %p52 = scmp.eq.s32.totalorder %s12, 0
    %p53 = por %p51, %p52
    %p54 = scmp.ne.s32.totalorder %s46, %s48
    %p55 = scmp.eq.s32.totalorder %s17, 1
    %p56 = por %p54, %p55
    %p57 = scmp.ne.s32.totalorder %s48, %s49
    %p58 = scmp.eq.s32.totalorder %s17, 0
    %p59 = por %p57, %p58
    %p60 = scmp.ne.s32.totalorder %s48, %s49
    %p61 = scmp.eq.s32.totalorder %s18, 1
    %p62 = por %p60, %p61
    %p64 = scmp.ne.s32.totalorder %s49, %s63
    %p65 = scmp.eq.s32.totalorder %s18, 0
    %p66 = por %p64, %p65
    %s68 = sadd.s32 %s67, 1
    %p71 = scmp.eq.s32.totalorder %s12, 1
    %p72 = scmp.ne.s32.totalorder %s67, %s69
    %p73 = scmp.eq.s32.totalorder %s12, 0
    %p74 = por %p72, %p73
    %p75 = scmp.ne.s32.totalorder %s67, %s69
    %p76 = scmp.eq.s32.totalorder %s17, 1
    %p77 = por %p75, %p76
    %p78 = scmp.ne.s32.totalorder %s69, %s70
    %p79 = scmp.eq.s32.totalorder %s17, 0
    %p80 = por %p78, %p79
    %p81 = scmp.ne.s32.totalorder %s69, %s70
    %p82 = scmp.eq.s32.totalorder %s18, 1
    %p83 = por %p81, %p82
    %p85 = scmp.ne.s32.totalorder %s70, %s84
    %p86 = scmp.eq.s32.totalorder %s18, 0
    %p87 = por %p85, %p86
    %s89 = sadd.s32 %s88, 1
    %p92 = scmp.eq.s32.totalorder %s12, 1
    %p93 = scmp.ne.s32.totalorder %s88, %s90
    %p94 = scmp.eq.s32.totalorder %s12, 0
    %p95 = por %p93, %p94
    %p96 = scmp.ne.s32.totalorder %s88, %s90
    %p97 = scmp.eq.s32.totalorder %s17, 1
    %p98 = por %p96, %p97
    %p99 = scmp.ne.s32.totalorder %s90, %s91
    %p100 = scmp.eq.s32.totalorder %s17, 0
    %p101 = por %p99, %p100
    %p102 = scmp.ne.s32.totalorder %s90, %s91
    %p103 = scmp.eq.s32.totalorder %s18, 1
    %p104 = por %p102, %p103
    %p106 = scmp.ne.s32.totalorder %s91, %s105
    %p107 = scmp.eq.s32.totalorder %s18, 0
    %p108 = por %p106, %p107
    %s109 = ssub.s32 %s12, %s19
    %p110 = scmp.eq.s32.totalorder %s109, 0
    %s112 = sadd.s32 %s111, 1
    %s113 = scalar_select %p110, %s111, %s112
    %p116 = pneg %p110
    %p117 = scmp.eq.s32.totalorder %s12, 1
    %p118 = por %p116, %p117
    %p119 = scmp.ne.s32.totalorder %s111, %s114
    %p120 = scmp.eq.s32.totalorder %s12, 0
    %p121 = por %p119, %p120
    %p122 = scmp.ne.s32.totalorder %s111, %s114
    %p123 = scmp.eq.s32.totalorder %s17, 1
    %p124 = por %p122, %p123
    %p125 = scmp.ne.s32.totalorder %s114, %s115
    %p126 = scmp.eq.s32.totalorder %s17, 0
    %p127 = por %p125, %p126
    %p128 = scmp.ne.s32.totalorder %s114, %s115
    %p129 = scmp.eq.s32.totalorder %s18, 1
    %p130 = por %p128, %p129
    %p132 = scmp.ne.s32.totalorder %s115, %s131
    %p133 = scmp.eq.s32.totalorder %s18, 0
    %p134 = por %p132, %p133
    %s135 = ssub.s32 %s12, %s19
    %p136 = scmp.eq.s32.totalorder %s135, 0
    %s138 = sadd.s32 %s137, 1
    %s139 = scalar_select %p136, %s137, %s138
    %p142 = pneg %p136
    %p143 = scmp.eq.s32.totalorder %s12, 1
    %p144 = por %p142, %p143
    %p145 = scmp.ne.s32.totalorder %s137, %s140
    %p146 = scmp.eq.s32.totalorder %s12, 0
    %p147 = por %p145, %p146
    %p148 = scmp.ne.s32.totalorder %s137, %s140
    %p149 = scmp.eq.s32.totalorder %s17, 1
    %p150 = por %p148, %p149
    %p151 = scmp.ne.s32.totalorder %s140, %s141
    %p152 = scmp.eq.s32.totalorder %s17, 0
    %p153 = por %p151, %p152
    %p154 = scmp.ne.s32.totalorder %s140, %s141
    %p155 = scmp.eq.s32.totalorder %s18, 1
    %p156 = por %p154, %p155
    %p158 = scmp.ne.s32.totalorder %s141, %s157
    %p159 = scmp.eq.s32.totalorder %s18, 0
    %p160 = por %p158, %p159
    %p161 = scmp.le.s32.totalorder 1, %s12
    %p162 = scmp.lt.s32.totalorder %s12, 3
    %p163 = pnand %p161, %p162
    %p164 = pneg %p163
    // Predicated region
    $region9: #{cbhg_forward.6} parent=5 // pred_check
      _
    $region10: #{cbhg_forward.6} parent=5 // pred_check_branch
      %166 = sbr.rel (%p163) target = $region12
    $region11: #{cbhg_forward.6} parent=5 // pred_region
      %s167 = ssub.s32 %s12, 1
      // Predicated region
      $region13: #{cbhg_forward.6} parent=11 // pred_check
        %p168 = pneg %p59
      $region14: #{cbhg_forward.6} parent=11 // pred_check_branch
        %170 = sbr.rel (%p168) target = $region16
      $region15: #{cbhg_forward.6} parent=11 // pred_region
        _
      $region16: #{cbhg_forward.6} parent=11 // pred_fallthru
        _
      // Predicated region
      $region17: #{cbhg_forward.6} parent=11 // pred_check
        %p171 = pneg %p80
      $region18: #{cbhg_forward.6} parent=11 // pred_check_branch
        %173 = sbr.rel (%p171) target = $region20
      $region19: #{cbhg_forward.6} parent=11 // pred_region
        _
      $region20: #{cbhg_forward.6} parent=11 // pred_fallthru
        _
      // Predicated region
      $region21: #{cbhg_forward.6} parent=11 // pred_check
        %p174 = pneg %p101
      $region22: #{cbhg_forward.6} parent=11 // pred_check_branch
        %176 = sbr.rel (%p174) target = $region24
      $region23: #{cbhg_forward.6} parent=11 // pred_region
        _
      $region24: #{cbhg_forward.6} parent=11 // pred_fallthru
        _
    $region12: #{cbhg_forward.6} parent=5 // pred_fallthru
      _
    %p177 = scmp.lt.s32.totalorder %s12, 2
    // Predicated region
    $region25: #{cbhg_forward.6} parent=5 // pred_check
      %p178 = pneg %p177
    $region26: #{cbhg_forward.6} parent=5 // pred_check_branch
      %180 = sbr.rel (%p178) target = $region28
    $region27: #{cbhg_forward.6} parent=5 // pred_region
      // Predicated region
      $region29: #{cbhg_forward.6} parent=27 // pred_check
        %p181 = pneg %p32
      $region30: #{cbhg_forward.6} parent=27 // pred_check_branch
        %183 = sbr.rel (%p181) target = $region32
      $region31: #{cbhg_forward.6} parent=27 // pred_region
        %p184 = scmp.lt.s32.totalorder %s12, 1
        %s185 = scalar_select %p184, %s12, 1
        %s186 = smul.addr %s185, 2
        %s187 = smul.addr %s186, 8
        %s188 = scalar_lea.vmem %s0, %s187
      $region32: #{cbhg_forward.6} parent=27 // pred_fallthru
        _
    $region28: #{cbhg_forward.6} parent=5 // pred_fallthru
      _
    %p189 = scmp.le.s32.totalorder 1, %s12
    %p190 = scmp.lt.s32.totalorder %s12, 3
    %p191 = pnand %p189, %p190
    %p192 = pneg %p191
    // Predicated region
    $region33: #{cbhg_forward.6} parent=5 // pred_check
      _
    $region34: #{cbhg_forward.6} parent=5 // pred_check_branch
      %194 = sbr.rel (%p191) target = $region36
    $region35: #{cbhg_forward.6} parent=5 // pred_region
      %s195 = ssub.s32 %s12, 1
      %p196 = scmp.lt.s32.totalorder %s17, 1
      %s197 = scalar_select %p196, %s17, 1
      %s198 = smul.addr %s197, 2
      %s199 = smul.addr %s198, 8
      %s200 = scalar_lea.vmem %s0, %s199
      %p201 = pneg %p38
      %p202 = pneg %p35
      %p203 = pneg %p59
      %p204 = pneg %p56
      %p205 = pneg %p80
      %p206 = pneg %p77
      %p207 = pneg %p101
      %p208 = pneg %p98
      %p209 = pneg %p127
      %p210 = pneg %p124
      %p211 = scmp.lt.s32.totalorder %s17, 1
      %s212 = scalar_select %p211, %s17, 1
      %s213 = smul.addr %s212, 2
      %s214 = smul.addr %s213, 8
      %s215 = scalar_lea.vmem %s4, %s214
      %p216 = pneg %p153
      %p217 = pneg %p150
      %p218 = scmp.lt.s32.totalorder %s17, 1
      %s219 = scalar_select %p218, %s17, 1
      %s220 = smul.addr %s219, 2
      %s221 = scalar_lea.vmem %s5, %s220
      %p222 = scmp.lt.s32.totalorder %s17, 1
      %s223 = scalar_select %p222, %s17, 1
      %s224 = smul.addr %s223, 2
      %s225 = smul.addr %s224, 8
      %s226 = scalar_lea.vmem %s0, %s225
      %p227 = scmp.lt.s32.totalorder %s17, 1
      %s228 = scalar_select %p227, %s17, 1
      %s229 = smul.addr %s228, 2
      %s230 = smul.addr %s229, 8
      %s231 = scalar_lea.vmem %s4, %s230
      %p232 = scmp.lt.s32.totalorder %s17, 1
      %s233 = scalar_select %p232, %s17, 1
      %s234 = smul.addr %s233, 2
      %s235 = scalar_lea.vmem %s5, %s234
      %v237 = vld [vmem:[%s226] sm:$0xff]
      %v238 = vld [vmem:[%s226 + $0x8] sm:$0xff]
      %v239 = vld [vmem:[%s1] sm:$0x1]
      %v240 = vlaneseq
      %v241 = vshrl.u32 %v240, 7
      %v242 = vsub.s32 0, %v241
      %v243 = vrot.slane %v239, %v242
      %v244 = vmul.f32 %v237, %v243
      %v245 = vmul.f32 %v238, %v243
      %v246 = vld [vmem:[%s1 + $0x1] sm:$0x1]
      %v247 = vlaneseq
      %v248 = vshrl.u32 %v247, 7
      %v249 = vsub.s32 0, %v248
      %v250 = vrot.slane %v246, %v249
      %v251 = vadd.f32 %v244, %v250
      %v252 = vadd.f32 %v245, %v250
      %v253 = vmax.f32 %v251, 0.0
      %v254 = vmax.f32 %v252, 0.0
      %vm257 = vcmask 1046528
      %v258 = vrot.slane %v253, 1
      %v259 = vrot.slane %v254, 1
      %v260 = vsel %vm257, %v258, %v259
      %v263 = vsel %vm257, %v259, 0.0
      %v264 = vmax.f32 %v253, %v260
      %v265 = vmax.f32 %v254, %v263
      %v266 = vlaneseq
      %v267 = vshrl.u32 %v266, 7
      %v268 = vadd.s32 %v267, 8
      %vm269 = vcmp.lt.s32.totalorder %v267, 8
      %vm270 = vcmp.lt.s32.totalorder %v268, 8
      %v271 = vsel %vm269, 1, 0
      %v272 = vsel %vm270, 1, 0
      %v273 = vcvt.s32.f32 %v271
      %v274 = vcvt.s32.f32 %v272
      %v275 = vmul.f32 %v264, %v273
      %v276 = vmul.f32 %v265, %v274
      %v277 = vpack.c.bf16 %v276, %v275
      %v278 = vld [vmem:[%s2] sm:$0xf]
      %v279 = vld [vmem:[%s2 + $0x4] sm:$0xf]
      %v280 = vld [vmem:[%s2 + $0x8] sm:$0xf]
      %v281 = vld [vmem:[%s2 + $0xc] sm:$0xf]
      %v282 = vld [vmem:[%s2 + $0x10] sm:$0xf]
      %v283 = vld [vmem:[%s2 + $0x14] sm:$0xf]
      %v284 = vld [vmem:[%s2 + $0x18] sm:$0xf]
      %v285 = vld [vmem:[%s2 + $0x1c] sm:$0xf]
      %v294 = vunpack.c.l.b16 %v278
      %v295 = vunpack.c.l.b16 %v279
      %v296 = vunpack.c.l.b16 %v280
      %v297 = vunpack.c.l.b16 %v281
      %v298 = vunpack.c.l.b16 %v282
      %v299 = vunpack.c.l.b16 %v283
      %v300 = vunpack.c.l.b16 %v284
      %v301 = vunpack.c.l.b16 %v285
      %v302 = vpack.c.b16 %v295, %v294
      %v303 = vpack.c.b16 %v297, %v296
      %v304 = vpack.c.b16 %v299, %v298
      %v305 = vpack.c.b16 %v301, %v300
      %vm310 = vcmask 523264
      %v312 = vsel %vm310, %v277, 0
      %314 = vmatprep.subr.bf16.mxu0 0
      %315 = vmatpush1.bf16.msra.mxu0 0
      %316 = vmatprep.subr.bf16.mxu0 0
      %317 = vmatpush1.bf16.msra.mxu0 0
      %318 = vmatprep.subr.bf16.mxu0 0
      %319 = vmatpush1.bf16.msra.mxu0 0
      %320 = vmatprep.subr.bf16.mxu0 0
      %321 = vmatpush1.bf16.msra.mxu0 0
      %322 = vmatprep.subr.bf16.mxu0 0
      %323 = vmatpush1.bf16.msra.mxu0 %v305
      %324 = vmatprep.subr.bf16.mxu0 0
      %325 = vmatpush1.bf16.msra.mxu0 %v304
      %326 = vmatprep.subr.bf16.mxu0 0
      %327 = vmatpush1.bf16.msra.mxu0 %v303
      %328 = vmatprep.subr.bf16.mxu0 0
      %329 = vmatpush1.bf16.msra.mxu0 %v302
      %330 = vmatprep.subr.bf16.mxu0 0
      %331 = vmatpush2.bf16.msra.mxu0 0
      %332 = vmatprep.subr.bf16.mxu0 0
      %333 = vmatpush2.bf16.msra.mxu0 0
      %334 = vmatprep.subr.bf16.mxu0 0
      %335 = vmatpush2.bf16.msra.mxu0 0
      %336 = vmatprep.subr.bf16.mxu0 0
      %337 = vmatpush2.bf16.msra.mxu0 0
      %338 = vmatprep.subr.bf16.mxu0 0
      %339 = vmatpush2.bf16.msra.mxu0 0
      %340 = vmatprep.subr.bf16.mxu0 0
      %341 = vmatpush2.bf16.msra.mxu0 0
      %342 = vmatprep.subr.bf16.mxu0 0
      %343 = vmatpush2.bf16.msra.mxu0 0
      %344 = vmatprep.subr.bf16.mxu0 0
      %345 = vmatpush2.bf16.msra.mxu0 0
      %346 = vmatprep.mubr.bf16.mxu0 0
      %347 = vmatmul.mubr.bf16.gmra.mxu0 %v312
      %v348 = vpop.f32.mrf.mxu0
      %v349 = vadd.f32 0.0, %v348
      %v350 = vpop.f32.mrf.mxu0
      %v351 = vpop.f32.mrf.mxu0
      %v352 = vadd.f32 0.0, %v351
      %v353 = vpop.f32.mrf.mxu0
      %354 = vdwg.mxu0
      %s355 = scalar_lea.vmem %s2, 32
      %v356 = vld [vmem:[%s355] sm:$0xf]
      %v357 = vld [vmem:[%s355 + $0x4] sm:$0xf]
      %v358 = vld [vmem:[%s355 + $0x8] sm:$0xf]
      %v359 = vld [vmem:[%s355 + $0xc] sm:$0xf]
      %v360 = vld [vmem:[%s355 + $0x10] sm:$0xf]
      %v361 = vld [vmem:[%s355 + $0x14] sm:$0xf]
      %v362 = vld [vmem:[%s355 + $0x18] sm:$0xf]
      %v363 = vld [vmem:[%s355 + $0x1c] sm:$0xf]
      %v372 = vunpack.c.l.b16 %v356
      %v373 = vunpack.c.l.b16 %v357
      %v374 = vunpack.c.l.b16 %v358
      %v375 = vunpack.c.l.b16 %v359
      %v376 = vunpack.c.l.b16 %v360
      %v377 = vunpack.c.l.b16 %v361
      %v378 = vunpack.c.l.b16 %v362
      %v379 = vunpack.c.l.b16 %v363
      %v380 = vpack.c.b16 %v373, %v372
      %v381 = vpack.c.b16 %v375, %v374
      %v382 = vpack.c.b16 %v377, %v376
      %v383 = vpack.c.b16 %v379, %v378
      %388 = vmatprep.subr.bf16.mxu0 0
      %389 = vmatpush1.bf16.msra.mxu0 0
      %390 = vmatprep.subr.bf16.mxu0 0
      %391 = vmatpush1.bf16.msra.mxu0 0
      %392 = vmatprep.subr.bf16.mxu0 0
      %393 = vmatpush1.bf16.msra.mxu0 0
      %394 = vmatprep.subr.bf16.mxu0 0
      %395 = vmatpush1.bf16.msra.mxu0 0
      %396 = vmatprep.subr.bf16.mxu0 0
      %397 = vmatpush1.bf16.msra.mxu0 %v383
      %398 = vmatprep.subr.bf16.mxu0 0
      %399 = vmatpush1.bf16.msra.mxu0 %v382
      %400 = vmatprep.subr.bf16.mxu0 0
      %401 = vmatpush1.bf16.msra.mxu0 %v381
      %402 = vmatprep.subr.bf16.mxu0 0
      %403 = vmatpush1.bf16.msra.mxu0 %v380
      %404 = vmatprep.subr.bf16.mxu0 0
      %405 = vmatpush2.bf16.msra.mxu0 0
      %406 = vmatprep.subr.bf16.mxu0 0
      %407 = vmatpush2.bf16.msra.mxu0 0
      %408 = vmatprep.subr.bf16.mxu0 0
      %409 = vmatpush2.bf16.msra.mxu0 0
      %410 = vmatprep.subr.bf16.mxu0 0
      %411 = vmatpush2.bf16.msra.mxu0 0
      %412 = vmatprep.subr.bf16.mxu0 0
      %413 = vmatpush2.bf16.msra.mxu0 0
      %414 = vmatprep.subr.bf16.mxu0 0
      %415 = vmatpush2.bf16.msra.mxu0 0
      %416 = vmatprep.subr.bf16.mxu0 0
      %417 = vmatpush2.bf16.msra.mxu0 0
      %418 = vmatprep.subr.bf16.mxu0 0
      %419 = vmatpush2.bf16.msra.mxu0 0
      %420 = vmatprep.mubr.bf16.mxu0 0
      %421 = vmatmul.mubr.bf16.gmra.mxu0 %v312
      %v422 = vpop.f32.mrf.mxu0
      %v423 = vadd.f32 0.0, %v422
      %v424 = vpop.f32.mrf.mxu0
      %v425 = vpop.f32.mrf.mxu0
      %v426 = vadd.f32 0.0, %v425
      %v427 = vpop.f32.mrf.mxu0
      %428 = vdwg.mxu0
      %s429 = scalar_lea.vmem %s2, 64
      %v430 = vld [vmem:[%s429] sm:$0xf]
      %v431 = vld [vmem:[%s429 + $0x4] sm:$0xf]
      %v432 = vld [vmem:[%s429 + $0x8] sm:$0xf]
      %v433 = vld [vmem:[%s429 + $0xc] sm:$0xf]
      %v434 = vld [vmem:[%s429 + $0x10] sm:$0xf]
      %v435 = vld [vmem:[%s429 + $0x14] sm:$0xf]
      %v436 = vld [vmem:[%s429 + $0x18] sm:$0xf]
      %v437 = vld [vmem:[%s429 + $0x1c] sm:$0xf]
      %v446 = vunpack.c.l.b16 %v430
      %v447 = vunpack.c.l.b16 %v431
      %v448 = vunpack.c.l.b16 %v432
      %v449 = vunpack.c.l.b16 %v433
      %v450 = vunpack.c.l.b16 %v434
      %v451 = vunpack.c.l.b16 %v435
      %v452 = vunpack.c.l.b16 %v436
      %v453 = vunpack.c.l.b16 %v437
      %v454 = vpack.c.b16 %v447, %v446
      %v455 = vpack.c.b16 %v449, %v448
      %v456 = vpack.c.b16 %v451, %v450
      %v457 = vpack.c.b16 %v453, %v452
      %462 = vmatprep.subr.bf16.mxu0 0
      %463 = vmatpush1.bf16.msra.mxu0 0
      %464 = vmatprep.subr.bf16.mxu0 0
      %465 = vmatpush1.bf16.msra.mxu0 0
      %466 = vmatprep.subr.bf16.mxu0 0
      %467 = vmatpush1.bf16.msra.mxu0 0
      %468 = vmatprep.subr.bf16.mxu0 0
      %469 = vmatpush1.bf16.msra.mxu0 0
      %470 = vmatprep.subr.bf16.mxu0 0
      %471 = vmatpush1.bf16.msra.mxu0 %v457
      %472 = vmatprep.subr.bf16.mxu0 0
      %473 = vmatpush1.bf16.msra.mxu0 %v456
      %474 = vmatprep.subr.bf16.mxu0 0
      %475 = vmatpush1.bf16.msra.mxu0 %v455
      %476 = vmatprep.subr.bf16.mxu0 0
      %477 = vmatpush1.bf16.msra.mxu0 %v454
      %478 = vmatprep.subr.bf16.mxu0 0
      %479 = vmatpush2.bf16.msra.mxu0 0
      %480 = vmatprep.subr.bf16.mxu0 0
      %481 = vmatpush2.bf16.msra.mxu0 0
      %482 = vmatprep.subr.bf16.mxu0 0
      %483 = vmatpush2.bf16.msra.mxu0 0
      %484 = vmatprep.subr.bf16.mxu0 0
      %485 = vmatpush2.bf16.msra.mxu0 0
      %486 = vmatprep.subr.bf16.mxu0 0
      %487 = vmatpush2.bf16.msra.mxu0 0
      %488 = vmatprep.subr.bf16.mxu0 0
      %489 = vmatpush2.bf16.msra.mxu0 0
      %490 = vmatprep.subr.bf16.mxu0 0
      %491 = vmatpush2.bf16.msra.mxu0 0
      %492 = vmatprep.subr.bf16.mxu0 0
      %493 = vmatpush2.bf16.msra.mxu0 0
      %494 = vmatprep.mubr.bf16.mxu0 0
      %495 = vmatmul.mubr.bf16.gmra.mxu0 %v312
      %v496 = vpop.f32.mrf.mxu0
      %v497 = vadd.f32 0.0, %v496
      %v498 = vpop.f32.mrf.mxu0
      %v499 = vpop.f32.mrf.mxu0
      %v500 = vadd.f32 0.0, %v499
      %v501 = vpop.f32.mrf.mxu0
      %502 = vdwg.mxu0
      %vm505 = vcmask 1040384
      %v506 = vrot.slane %v349, 7
      %v507 = vrot.slane %v352, 7
      %v508 = vsel %vm505, %v506, %v507
      %v511 = vsel %vm505, 0.0, %v506
      %v512 = vadd.f32 %v511, %v423
      %v513 = vadd.f32 %v508, %v426
      %v516 = vrot.slane %v497, 1
      %v517 = vrot.slane %v500, 1
      %v518 = vsel %vm257, %v516, %v517
      %v521 = vsel %vm257, %v517, 0.0
      %v522 = vadd.f32 %v512, %v518
      %v523 = vadd.f32 %v513, %v521
      %v524 = vld [vmem:[%s3] sm:$0x1]
      %v526 = vlaneseq
      %v527 = vshrl.u32 %v526, 7
      %v528 = vsub.s32 0, %v527
      %v529 = vrot.slane %v524, %v528
      %v531 = vadd.f32 %v522, %v529
      %v532 = vadd.f32 %v523, %v529
      %vm533 = vcmask 261120
      %534 = vst.msk [vmem:[%s231] sm:$0xff] %vm533, %v531
      %535 = vst.msk [vmem:[%s231 + $0x8] sm:$0xff] %vm533, %v532
      %v536 = vmul.f32 %v531, %v273
      %v537 = vmul.f32 %v532, %v274
      %v538 = vsel %vm533, %v536, 0.0
      %v539 = vsel %vm533, %v537, 0.0
      %v540 = vadd.f32 %v538, %v539
      %v541 = vrot.slane %v540, 4
      %v542 = vadd.f32 %v540, %v541
      %v543 = vrot.slane %v542, 2
      %v544 = vadd.f32 %v542, %v543
      %v545 = vrot.slane %v544, 1
      %v546 = vadd.f32 %v544, %v545
      %v547 = vmul.f32 %v536, %v531
      %v548 = vmul.f32 %v537, %v532
      %v549 = vsel %vm533, %v547, 0.0
      %v550 = vsel %vm533, %v548, 0.0
      %v551 = vadd.f32 %v549, %v550
      %v552 = vrot.slane %v551, 4
      %v553 = vadd.f32 %v551, %v552
      %v554 = vrot.slane %v553, 2
      %v555 = vadd.f32 %v553, %v554
      %v556 = vrot.slane %v555, 1
      %v557 = vadd.f32 %v555, %v556
      %v558 = vsel %vm505, %v546, %v557
      %vm559 = vcmask 254976
      %560 = vst.msk [vmem:[%s235] sm:$0x3] %vm559, %v558
      %p561 = scmp.lt.s32.totalorder %s17, 1
      %s562 = scalar_select %p561, %s17, 1
      %s563 = smul.addr %s562, 2
      %s564 = smul.addr %s563, 8
      %s565 = scalar_lea.vmem %s4, %s564
      %p566 = scmp.lt.s32.totalorder %s17, 1
      %s567 = scalar_select %p566, %s17, 1
      %s568 = smul.addr %s567, 2
      %s569 = scalar_lea.vmem %s5, %s568
      // Predicated region
      $region37: #{cbhg_forward.6} parent=35 // pred_check
        %p570 = pneg %p124
      $region38: #{cbhg_forward.6} parent=35 // pred_check_branch
        %572 = sbr.rel (%p570) target = $region40
      $region39: #{cbhg_forward.6} parent=35 // pred_region
        _
      $region40: #{cbhg_forward.6} parent=35 // pred_fallthru
        _
      // Predicated region
      $region41: #{cbhg_forward.6} parent=35 // pred_check
        %p573 = pneg %p150
      $region42: #{cbhg_forward.6} parent=35 // pred_check_branch
        %575 = sbr.rel (%p573) target = $region44
      $region43: #{cbhg_forward.6} parent=35 // pred_region
        _
      $region44: #{cbhg_forward.6} parent=35 // pred_fallthru
        _
    $region36: #{cbhg_forward.6} parent=5 // pred_fallthru
      _
    %p576 = scmp.le.s32.totalorder 2, %s12
    // Predicated region
    $region45: #{cbhg_forward.6} parent=5 // pred_check
      %p577 = pneg %p576
    $region46: #{cbhg_forward.6} parent=5 // pred_check_branch
      %579 = sbr.rel (%p577) target = $region48
    $region47: #{cbhg_forward.6} parent=5 // pred_region
      %s580 = ssub.s32 %s12, 2
      // Predicated region
      $region49: #{cbhg_forward.6} parent=47 // pred_check
        %p581 = pneg %p130
      $region50: #{cbhg_forward.6} parent=47 // pred_check_branch
        %583 = sbr.rel (%p581) target = $region52
      $region51: #{cbhg_forward.6} parent=47 // pred_region
        %p584 = scmp.lt.s32.totalorder %s18, 1
        %s585 = scalar_select %p584, %s18, 1
        %s586 = smul.addr %s585, 2
        %s587 = smul.addr %s586, 8
        %s588 = scalar_lea.vmem %s4, %s587
      $region52: #{cbhg_forward.6} parent=47 // pred_fallthru
        _
      // Predicated region
      $region53: #{cbhg_forward.6} parent=47 // pred_check
        %p589 = pneg %p156
      $region54: #{cbhg_forward.6} parent=47 // pred_check_branch
        %591 = sbr.rel (%p589) target = $region56
      $region55: #{cbhg_forward.6} parent=47 // pred_region
        %p592 = scmp.lt.s32.totalorder %s18, 1
        %s593 = scalar_select %p592, %s18, 1
        %s594 = smul.addr %s593, 2
        %s595 = scalar_lea.vmem %s5, %s594
      $region56: #{cbhg_forward.6} parent=47 // pred_fallthru
        _
    $region48: #{cbhg_forward.6} parent=5 // pred_fallthru
      _
  $region6: #{cbhg_forward.6} parent=0 // loop_footer
    %s16 = sadd.s32 1, %s12
  $region7: #{cbhg_forward.6} parent=0 // loop_footer_branch
    %11 = sbr.rel target = $region3
  $region8: #{cbhg_forward.6} parent=0 // loop_exit
    _

// kernel: cbhg_forward.8
$region0: #{cbhg_forward.8}
  #allocation0 [shape = 'u32[]', space=smem, size = 0x4, offset = 0x4, fixed_abs, tag = 'smem constant byte address 0x4 - core index']
  #allocation1 [shape = 'u32[144,128]{1,0:T(1,128)}', space=vmem, size = 0x12000, scoped, tag = 'internal scratch']
  %s0 = inlined_call_operand.vmem [shape: f32[32,32], index: 0, kind: input, shape index: {}]
  %s1 = inlined_call_operand.vmem [shape: f32[32,16], index: 1, kind: input, shape index: {}]
  %s2 = inlined_call_operand.vmem [shape: f32[2,32], index: 2, kind: input, shape index: {}]
  %s3 = inlined_call_operand.vmem [shape: bf16[16,32], index: 3, kind: input, shape index: {}]
  %s4 = inlined_call_operand.vmem [shape: f32[1,32], index: 4, kind: input, shape index: {}]
  %s5 = inlined_call_operand.vmem [shape: bf16[4,32,96], index: 5, kind: input, shape index: {}]
  %s6 = inlined_call_operand.vmem [shape: f32[4,1,96], index: 6, kind: input, shape index: {}]
  %s7 = inlined_call_operand.vmem [shape: bf16[32,64], index: 7, kind: input, shape index: {}]
  %s8 = inlined_call_operand.vmem [shape: f32[1,64], index: 8, kind: input, shape index: {}]
  %s9 = inlined_call_operand.vmem [shape: bf16[32,192], index: 9, kind: input, shape index: {}]
  %s10 = inlined_call_operand.vmem [shape: f32[1,192], index: 10, kind: input, shape index: {}]
  %s11 = inlined_call_operand.vmem [shape: f32[2,32,32], index: 11, kind: output, shape index: {0}]
  %s12 = inlined_call_operand.vmem [shape: f32[2,32,96], index: 12, kind: output, shape index: {1}]
  %13 = xla_tuple %s11, %s12
  %s14 = sld [smem:[#allocation0]]
  $region62: #{cbhg_forward.8} parent=0
    _
  %s16 = ssub.s32 1, %s14
  %s17 = scalar_select 0, %s16, %s14
  // Predicated region
  $region2: #{cbhg_forward.8} parent=0 // pred_check
    _
  $region3: #{cbhg_forward.8} parent=0 // pred_check_branch
    %19 = sbr.rel (0) target = $region5
  $region4: #{cbhg_forward.8} parent=0 // pred_region
    _
  $region5: #{cbhg_forward.8} parent=0 // pred_fallthru
    _
  // Predicated region
  $region6: #{cbhg_forward.8} parent=0 // pred_check
    _
  $region7: #{cbhg_forward.8} parent=0 // pred_check_branch
    %21 = sbr.rel (0) target = $region9
  $region8: #{cbhg_forward.8} parent=0 // pred_region
    _
  $region9: #{cbhg_forward.8} parent=0 // pred_fallthru
    _
  // Predicated region
  $region10: #{cbhg_forward.8} parent=0 // pred_check
    _
  $region11: #{cbhg_forward.8} parent=0 // pred_check_branch
    %23 = sbr.rel (0) target = $region13
  $region12: #{cbhg_forward.8} parent=0 // pred_region
    _
  $region13: #{cbhg_forward.8} parent=0 // pred_fallthru
    _
  // Predicated region
  $region14: #{cbhg_forward.8} parent=0 // pred_check
    _
  $region15: #{cbhg_forward.8} parent=0 // pred_check_branch
    %25 = sbr.rel (0) target = $region17
  $region16: #{cbhg_forward.8} parent=0 // pred_region
    _
  $region17: #{cbhg_forward.8} parent=0 // pred_fallthru
    _
  // Predicated region
  $region18: #{cbhg_forward.8} parent=0 // pred_check
    _
  $region19: #{cbhg_forward.8} parent=0 // pred_check_branch
    %27 = sbr.rel (0) target = $region21
  $region20: #{cbhg_forward.8} parent=0 // pred_region
    _
  $region21: #{cbhg_forward.8} parent=0 // pred_fallthru
    _
  // Predicated region
  $region22: #{cbhg_forward.8} parent=0 // pred_check
    _
  $region23: #{cbhg_forward.8} parent=0 // pred_check_branch
    %29 = sbr.rel (0) target = $region25
  $region24: #{cbhg_forward.8} parent=0 // pred_region
    _
  $region25: #{cbhg_forward.8} parent=0 // pred_fallthru
    _
  // Predicated region
  $region26: #{cbhg_forward.8} parent=0 // pred_check
    _
  $region27: #{cbhg_forward.8} parent=0 // pred_check_branch
    %31 = sbr.rel (0) target = $region29
  $region28: #{cbhg_forward.8} parent=0 // pred_region
    _
  $region29: #{cbhg_forward.8} parent=0 // pred_fallthru
    _
  // Predicated region
  $region30: #{cbhg_forward.8} parent=0 // pred_check
    _
  $region31: #{cbhg_forward.8} parent=0 // pred_check_branch
    %33 = sbr.rel (0) target = $region33
  $region32: #{cbhg_forward.8} parent=0 // pred_region
    _
  $region33: #{cbhg_forward.8} parent=0 // pred_fallthru
    _
  // Predicated region
  $region34: #{cbhg_forward.8} parent=0 // pred_check
    _
  $region35: #{cbhg_forward.8} parent=0 // pred_check_branch
    %35 = sbr.rel (0) target = $region37
  $region36: #{cbhg_forward.8} parent=0 // pred_region
    _
  $region37: #{cbhg_forward.8} parent=0 // pred_fallthru
    _
  // Predicated region
  $region38: #{cbhg_forward.8} parent=0 // pred_check
    _
  $region39: #{cbhg_forward.8} parent=0 // pred_check_branch
    %37 = sbr.rel (0) target = $region41
  $region40: #{cbhg_forward.8} parent=0 // pred_region
    _
  $region41: #{cbhg_forward.8} parent=0 // pred_fallthru
    _
  // Predicated region
  $region42: #{cbhg_forward.8} parent=0 // pred_check
    _
  $region43: #{cbhg_forward.8} parent=0 // pred_check_branch
    %39 = sbr.rel (0) target = $region45
  $region44: #{cbhg_forward.8} parent=0 // pred_region
    _
  $region45: #{cbhg_forward.8} parent=0 // pred_fallthru
    _
  %v41 = vld [vmem:[%s0] sm:$0xff]
  %v42 = vld [vmem:[%s0 + $0x8] sm:$0xff]
  %v43 = vld [vmem:[%s0 + $0x10] sm:$0xff]
  %v44 = vld [vmem:[%s0 + $0x18] sm:$0xff]
  %v45 = vld [vmem:[%s2] sm:$0x1]
  %v46 = vlaneseq
  %v47 = vshrl.u32 %v46, 7
  %v48 = vsub.s32 0, %v47
  %v49 = vrot.slane %v45, %v48
  %v50 = vmul.f32 %v41, %v49
  %v51 = vmul.f32 %v42, %v49
  %v52 = vmul.f32 %v43, %v49
  %v53 = vmul.f32 %v44, %v49
  %v54 = vld [vmem:[%s2 + $0x1] sm:$0x1]
  %v55 = vlaneseq
  %v56 = vshrl.u32 %v55, 7
  %v57 = vsub.s32 0, %v56
  %v58 = vrot.slane %v54, %v57
  %v59 = vadd.f32 %v50, %v58
  %v60 = vadd.f32 %v51, %v58
  %v61 = vadd.f32 %v52, %v58
  %v62 = vadd.f32 %v53, %v58
  %v63 = vld [vmem:[%s1] sm:$0xff]
  %v64 = vld [vmem:[%s1 + $0x8] sm:$0xff]
  %v65 = vld [vmem:[%s1 + $0x10] sm:$0xff]
  %v66 = vld [vmem:[%s1 + $0x18] sm:$0xff]
  %v67 = vpack.c.bf16 %v64, %v63
  %v68 = vpack.c.bf16 %v66, %v65
  %v69 = vld [vmem:[%s3] sm:$0xf]
  %v70 = vld [vmem:[%s3 + $0x4] sm:$0xf]
  %v71 = vld [vmem:[%s4] sm:$0x1]
  %v73 = vlaneseq
  %v74 = vshrl.u32 %v73, 7
  %v75 = vsub.s32 0, %v74
  %v76 = vrot.slane %v71, %v75
  %v80 = vunpack.c.l.b16 %v69
  %v81 = vunpack.c.l.b16 %v70
  %v82 = vpack.c.b16 %v81, %v80
  %vm84 = vcmask 130048
  %v86 = vsel %vm84, %v67, 0
  %v89 = vsel %vm84, %v68, 0
  %91 = vmatprep.subr.bf16.mxu0 0
  %92 = vmatpush1.bf16.msra.mxu0 0
  %93 = vmatprep.subr.bf16.mxu0 0
  %94 = vmatpush1.bf16.msra.mxu0 0
  %95 = vmatprep.subr.bf16.mxu0 0
  %96 = vmatpush1.bf16.msra.mxu0 0
  %97 = vmatprep.subr.bf16.mxu0 0
  %98 = vmatpush1.bf16.msra.mxu0 0
  %99 = vmatprep.subr.bf16.mxu0 0
  %100 = vmatpush1.bf16.msra.mxu0 0
  %101 = vmatprep.subr.bf16.mxu0 0
  %102 = vmatpush1.bf16.msra.mxu0 0
  %103 = vmatprep.subr.bf16.mxu0 0
  %104 = vmatpush1.bf16.msra.mxu0 0
  %105 = vmatprep.subr.bf16.mxu0 0
  %106 = vmatpush1.bf16.msra.mxu0 %v82
  %107 = vmatprep.subr.bf16.mxu0 0
  %108 = vmatpush2.bf16.msra.mxu0 0
  %109 = vmatprep.subr.bf16.mxu0 0
  %110 = vmatpush2.bf16.msra.mxu0 0
  %111 = vmatprep.subr.bf16.mxu0 0
  %112 = vmatpush2.bf16.msra.mxu0 0
  %113 = vmatprep.subr.bf16.mxu0 0
  %114 = vmatpush2.bf16.msra.mxu0 0
  %115 = vmatprep.subr.bf16.mxu0 0
  %116 = vmatpush2.bf16.msra.mxu0 0
  %117 = vmatprep.subr.bf16.mxu0 0
  %118 = vmatpush2.bf16.msra.mxu0 0
  %119 = vmatprep.subr.bf16.mxu0 0
  %120 = vmatpush2.bf16.msra.mxu0 0
  %121 = vmatprep.subr.bf16.mxu0 0
  %122 = vmatpush2.bf16.msra.mxu0 0
  %123 = vmatprep.mubr.bf16.mxu0 0
  %124 = vmatmul.mubr.bf16.gmra.mxu0 %v86
  %v125 = vpop.f32.mrf.mxu0
  %v126 = vadd.f32 %v76, %v125
  %v127 = vpop.f32.mrf.mxu0
  %v128 = vpop.f32.mrf.mxu0
  %v129 = vadd.f32 %v76, %v128
  %v130 = vpop.f32.mrf.mxu0
  %131 = vmatprep.mubr.bf16.mxu0 0
  %132 = vmatmul.mubr.bf16.gmra.mxu0 %v89
  %v133 = vpop.f32.mrf.mxu0
  %v134 = vadd.f32 %v76, %v133
  %v135 = vpop.f32.mrf.mxu0
  %v136 = vpop.f32.mrf.mxu0
  %v137 = vadd.f32 %v76, %v136
  %v138 = vpop.f32.mrf.mxu0
  %139 = vdwg.mxu0
  %v140 = vadd.f32 %v126, %v59
  %v141 = vadd.f32 %v129, %v60
  %v142 = vadd.f32 %v134, %v61
  %v143 = vadd.f32 %v137, %v62
  %v144 = vpack.c.bf16 %v141, %v140
  %v145 = vpack.c.bf16 %v143, %v142
  %v146 = vld [vmem:[%s5] sm:$0xf]
  %v147 = vld [vmem:[%s5 + $0x4] sm:$0xf]
  %v148 = vld [vmem:[%s5 + $0x8] sm:$0xf]
  %v149 = vld [vmem:[%s5 + $0xc] sm:$0xf]
  %v150 = vld [vmem:[%s6] sm:$0x1]
  %v152 = vlaneseq
  %v153 = vshrl.u32 %v152, 7
  %v154 = vsub.s32 0, %v153
  %v155 = vrot.slane %v150, %v154
  %v161 = vunpack.c.l.b16 %v146
  %v162 = vunpack.c.l.b16 %v147
  %v163 = vunpack.c.l.b16 %v148
  %v164 = vunpack.c.l.b16 %v149
  %v165 = vpack.c.b16 %v162, %v161
  %v166 = vpack.c.b16 %v164, %v163
  %vm169 = vcmask 261120
  %v171 = vsel %vm169, %v144, 0
  %v174 = vsel %vm169, %v145, 0
  %176 = vmatprep.subr.bf16.mxu0 0
  %177 = vmatpush1.bf16.msra.mxu0 0
  %178 = vmatprep.subr.bf16.mxu0 0
  %179 = vmatpush1.bf16.msra.mxu0 0
  %180 = vmatprep.subr.bf16.mxu0 0
  %181 = vmatpush1.bf16.msra.mxu0 0
  %182 = vmatprep.subr.bf16.mxu0 0
  %183 = vmatpush1.bf16.msra.mxu0 0
  %184 = vmatprep.subr.bf16.mxu0 0
  %185 = vmatpush1.bf16.msra.mxu0 0
  %186 = vmatprep.subr.bf16.mxu0 0
  %187 = vmatpush1.bf16.msra.mxu0 0
  %188 = vmatprep.subr.bf16.mxu0 0
  %189 = vmatpush1.bf16.msra.mxu0 %v166
  %190 = vmatprep.subr.bf16.mxu0 0
  %191 = vmatpush1.bf16.msra.mxu0 %v165
  %192 = vmatprep.subr.bf16.mxu0 0
  %193 = vmatpush2.bf16.msra.mxu0 0
  %194 = vmatprep.subr.bf16.mxu0 0
  %195 = vmatpush2.bf16.msra.mxu0 0
  %196 = vmatprep.subr.bf16.mxu0 0
  %197 = vmatpush2.bf16.msra.mxu0 0
  %198 = vmatprep.subr.bf16.mxu0 0
  %199 = vmatpush2.bf16.msra.mxu0 0
  %200 = vmatprep.subr.bf16.mxu0 0
  %201 = vmatpush2.bf16.msra.mxu0 0
  %202 = vmatprep.subr.bf16.mxu0 0
  %203 = vmatpush2.bf16.msra.mxu0 0
  %204 = vmatprep.subr.bf16.mxu0 0
  %205 = vmatpush2.bf16.msra.mxu0 0
  %206 = vmatprep.subr.bf16.mxu0 0
  %207 = vmatpush2.bf16.msra.mxu0 0
  %208 = vmatprep.mubr.bf16.mxu0 0
  %209 = vmatmul.mubr.bf16.gmra.mxu0 %v171
  %v210 = vpop.f32.mrf.mxu0
  %v211 = vadd.f32 %v155, %v210
  %v212 = vpop.f32.mrf.mxu0
  %v213 = vpop.f32.mrf.mxu0
  %v214 = vadd.f32 %v155, %v213
  %v215 = vpop.f32.mrf.mxu0
  %216 = vmatprep.mubr.bf16.mxu0 0
  %217 = vmatmul.mubr.bf16.gmra.mxu0 %v174
  %v218 = vpop.f32.mrf.mxu0
  %v219 = vadd.f32 %v155, %v218
  %v220 = vpop.f32.mrf.mxu0
  %v221 = vpop.f32.mrf.mxu0
  %v222 = vadd.f32 %v155, %v221
  %v223 = vpop.f32.mrf.mxu0
  %224 = vdwg.mxu0
  %v225 = vxor.u32 %v211, 2147483648
  %v226 = vxor.u32 %v214, 2147483648
  %v227 = vxor.u32 %v219, 2147483648
  %v228 = vxor.u32 %v222, 2147483648
  %v229 = vmul.f32 %v225, 1.442695
  %v230 = vpow.pop %v229
  %v231 = vmul.f32 %v226, 1.442695
  %v232 = vpow.pop %v231
  %v233 = vmul.f32 %v227, 1.442695
  %v234 = vpow.pop %v233
  %v235 = vmul.f32 %v228, 1.442695
  %v236 = vpow.pop %v235
  %v237 = vadd.f32 %v230, 1.0
  %v238 = vadd.f32 %v232, 1.0
  %v239 = vadd.f32 %v234, 1.0
  %v240 = vadd.f32 %v236, 1.0
  %v241 = vrcp.pop %v237
  %v242 = vmul.f32 1.0, %v241
  %v243 = vrcp.pop %v238
  %v244 = vmul.f32 1.0, %v243
  %v245 = vrcp.pop %v239
  %v246 = vmul.f32 1.0, %v245
  %v247 = vrcp.pop %v240
  %v248 = vmul.f32 1.0, %v247
  %v249 = vmax.f32 %v211, 0.0
  %v250 = vmax.f32 %v214, 0.0
  %v251 = vmax.f32 %v219, 0.0
  %v252 = vmax.f32 %v222, 0.0
  %257 = vrot.lane.b32.xlu0 %v249, 96
  %v258 = vpop.permute.xlu0 %257
  %259 = vrot.lane.b32.xlu0 %v250, 96
  %v260 = vpop.permute.xlu0 %259
  %261 = vrot.lane.b32.xlu0 %v251, 96
  %v262 = vpop.permute.xlu0 %261
  %263 = vrot.lane.b32.xlu0 %v252, 96
  %v264 = vpop.permute.xlu0 %263
  %v269 = vmul.f32 %v242, %v258
  %v270 = vmul.f32 %v244, %v260
  %v271 = vmul.f32 %v246, %v262
  %v272 = vmul.f32 %v248, %v264
  %v273 = vsub.f32 1.0, %v242
  %v274 = vsub.f32 1.0, %v244
  %v275 = vsub.f32 1.0, %v246
  %v276 = vsub.f32 1.0, %v248
  %281 = vrot.lane.b32.xlu0 %v211, 64
  %v282 = vpop.permute.xlu0 %281
  %283 = vrot.lane.b32.xlu0 %v214, 64
  %v284 = vpop.permute.xlu0 %283
  %285 = vrot.lane.b32.xlu0 %v219, 64
  %v286 = vpop.permute.xlu0 %285
  %287 = vrot.lane.b32.xlu0 %v222, 64
  %v288 = vpop.permute.xlu0 %287
  %v293 = vmul.f32 %v273, %v282
  %v294 = vmul.f32 %v274, %v284
  %v295 = vmul.f32 %v275, %v286
  %v296 = vmul.f32 %v276, %v288
  %v297 = vadd.f32 %v269, %v293
  %v298 = vadd.f32 %v270, %v294
  %v299 = vadd.f32 %v271, %v295
  %v300 = vadd.f32 %v272, %v296
  %v301 = vpack.c.bf16 %v298, %v297
  %v302 = vpack.c.bf16 %v300, %v299
  %s303 = scalar_lea.vmem %s5, 16
  %v304 = vld [vmem:[%s303] sm:$0xf]
  %v305 = vld [vmem:[%s303 + $0x4] sm:$0xf]
  %v306 = vld [vmem:[%s303 + $0x8] sm:$0xf]
  %v307 = vld [vmem:[%s303 + $0xc] sm:$0xf]
  %s308 = scalar_lea.vmem %s6, 1
  %v309 = vld [vmem:[%s308] sm:$0x1]
  %v311 = vlaneseq
  %v312 = vshrl.u32 %v311, 7
  %v313 = vsub.s32 0, %v312
  %v314 = vrot.slane %v309, %v313
  %v320 = vunpack.c.l.b16 %v304
  %v321 = vunpack.c.l.b16 %v305
  %v322 = vunpack.c.l.b16 %v306
  %v323 = vunpack.c.l.b16 %v307
  %v324 = vpack.c.b16 %v321, %v320
  %v325 = vpack.c.b16 %v323, %v322
  %v329 = vsel %vm169, %v301, 0
  %v332 = vsel %vm169, %v302, 0
  %334 = vmatprep.subr.bf16.mxu0 0
  %335 = vmatpush1.bf16.msra.mxu0 0
  %336 = vmatprep.subr.bf16.mxu0 0
  %337 = vmatpush1.bf16.msra.mxu0 0
  %338 = vmatprep.subr.bf16.mxu0 0
  %339 = vmatpush1.bf16.msra.mxu0 0
  %340 = vmatprep.subr.bf16.mxu0 0
  %341 = vmatpush1.bf16.msra.mxu0 0
  %342 = vmatprep.subr.bf16.mxu0 0
  %343 = vmatpush1.bf16.msra.mxu0 0
  %344 = vmatprep.subr.bf16.mxu0 0
  %345 = vmatpush1.bf16.msra.mxu0 0
  %346 = vmatprep.subr.bf16.mxu0 0
  %347 = vmatpush1.bf16.msra.mxu0 %v325
  %348 = vmatprep.subr.bf16.mxu0 0
  %349 = vmatpush1.bf16.msra.mxu0 %v324
  %350 = vmatprep.subr.bf16.mxu0 0
  %351 = vmatpush2.bf16.msra.mxu0 0
  %352 = vmatprep.subr.bf16.mxu0 0
  %353 = vmatpush2.bf16.msra.mxu0 0
  %354 = vmatprep.subr.bf16.mxu0 0
  %355 = vmatpush2.bf16.msra.mxu0 0
  %356 = vmatprep.subr.bf16.mxu0 0
  %357 = vmatpush2.bf16.msra.mxu0 0
  %358 = vmatprep.subr.bf16.mxu0 0
  %359 = vmatpush2.bf16.msra.mxu0 0
  %360 = vmatprep.subr.bf16.mxu0 0
  %361 = vmatpush2.bf16.msra.mxu0 0
  %362 = vmatprep.subr.bf16.mxu0 0
  %363 = vmatpush2.bf16.msra.mxu0 0
  %364 = vmatprep.subr.bf16.mxu0 0
  %365 = vmatpush2.bf16.msra.mxu0 0
  %366 = vmatprep.mubr.bf16.mxu0 0
  %367 = vmatmul.mubr.bf16.gmra.mxu0 %v329
  %v368 = vpop.f32.mrf.mxu0
  %v369 = vadd.f32 %v314, %v368
  %v370 = vpop.f32.mrf.mxu0
  %v371 = vpop.f32.mrf.mxu0
  %v372 = vadd.f32 %v314, %v371
  %v373 = vpop.f32.mrf.mxu0
  %374 = vmatprep.mubr.bf16.mxu0 0
  %375 = vmatmul.mubr.bf16.gmra.mxu0 %v332
  %v376 = vpop.f32.mrf.mxu0
  %v377 = vadd.f32 %v314, %v376
  %v378 = vpop.f32.mrf.mxu0
  %v379 = vpop.f32.mrf.mxu0
  %v380 = vadd.f32 %v314, %v379
  %v381 = vpop.f32.mrf.mxu0
  %382 = vdwg.mxu0
  %v383 = vxor.u32 %v369, 2147483648
  %v384 = vxor.u32 %v372, 2147483648
  %v385 = vxor.u32 %v377, 2147483648
  %v386 = vxor.u32 %v380, 2147483648
  %v387 = vmul.f32 %v383, 1.442695
  %v388 = vpow.pop %v387
  %v389 = vmul.f32 %v384, 1.442695
  %v390 = vpow.pop %v389
  %v391 = vmul.f32 %v385, 1.442695
  %v392 = vpow.pop %v391
  %v393 = vmul.f32 %v386, 1.442695
  %v394 = vpow.pop %v393
  %v395 = vadd.f32 %v388, 1.0
  %v396 = vadd.f32 %v390, 1.0
  %v397 = vadd.f32 %v392, 1.0
  %v398 = vadd.f32 %v394, 1.0
  %v399 = vrcp.pop %v395
  %v400 = vmul.f32 1.0, %v399
  %v401 = vrcp.pop %v396
  %v402 = vmul.f32 1.0, %v401
  %v403 = vrcp.pop %v397
  %v404 = vmul.f32 1.0, %v403
  %v405 = vrcp.pop %v398
  %v406 = vmul.f32 1.0, %v405
  %v407 = vmax.f32 %v369, 0.0
  %v408 = vmax.f32 %v372, 0.0
  %v409 = vmax.f32 %v377, 0.0
  %v410 = vmax.f32 %v380, 0.0
  %415 = vrot.lane.b32.xlu0 %v407, 96
  %v416 = vpop.permute.xlu0 %415
  %417 = vrot.lane.b32.xlu0 %v408, 96
  %v418 = vpop.permute.xlu0 %417
  %419 = vrot.lane.b32.xlu0 %v409, 96
  %v420 = vpop.permute.xlu0 %419
  %421 = vrot.lane.b32.xlu0 %v410, 96
  %v422 = vpop.permute.xlu0 %421
  %v427 = vmul.f32 %v400, %v416
  %v428 = vmul.f32 %v402, %v418
  %v429 = vmul.f32 %v404, %v420
  %v430 = vmul.f32 %v406, %v422
  %v431 = vsub.f32 1.0, %v400
  %v432 = vsub.f32 1.0, %v402
  %v433 = vsub.f32 1.0, %v404
  %v434 = vsub.f32 1.0, %v406
  %439 = vrot.lane.b32.xlu0 %v369, 64
  %v440 = vpop.permute.xlu0 %439
  %441 = vrot.lane.b32.xlu0 %v372, 64
  %v442 = vpop.permute.xlu0 %441
  %443 = vrot.lane.b32.xlu0 %v377, 64
  %v444 = vpop.permute.xlu0 %443
  %445 = vrot.lane.b32.xlu0 %v380, 64
  %v446 = vpop.permute.xlu0 %445
  %v451 = vmul.f32 %v431, %v440
  %v452 = vmul.f32 %v432, %v442
  %v453 = vmul.f32 %v433, %v444
  %v454 = vmul.f32 %v434, %v446
  %v455 = vadd.f32 %v427, %v451
  %v456 = vadd.f32 %v428, %v452
  %v457 = vadd.f32 %v429, %v453
  %v458 = vadd.f32 %v430, %v454
  %v459 = vpack.c.bf16 %v456, %v455
  %v460 = vpack.c.bf16 %v458, %v457
  %s461 = scalar_lea.vmem %s5, 32
  %v462 = vld [vmem:[%s461] sm:$0xf]
  %v463 = vld [vmem:[%s461 + $0x4] sm:$0xf]
  %v464 = vld [vmem:[%s461 + $0x8] sm:$0xf]
  %v465 = vld [vmem:[%s461 + $0xc] sm:$0xf]
  %s466 = scalar_lea.vmem %s6, 2
  %v467 = vld [vmem:[%s466] sm:$0x1]
  %v469 = vlaneseq
  %v470 = vshrl.u32 %v469, 7
  %v471 = vsub.s32 0, %v470
  %v472 = vrot.slane %v467, %v471
  %v478 = vunpack.c.l.b16 %v462
  %v479 = vunpack.c.l.b16 %v463
  %v480 = vunpack.c.l.b16 %v464
  %v481 = vunpack.c.l.b16 %v465
  %v482 = vpack.c.b16 %v479, %v478
  %v483 = vpack.c.b16 %v481, %v480
  %v487 = vsel %vm169, %v459, 0
  %v490 = vsel %vm169, %v460, 0
  %492 = vmatprep.subr.bf16.mxu0 0
  %493 = vmatpush1.bf16.msra.mxu0 0
  %494 = vmatprep.subr.bf16.mxu0 0
  %495 = vmatpush1.bf16.msra.mxu0 0
  %496 = vmatprep.subr.bf16.mxu0 0
  %497 = vmatpush1.bf16.msra.mxu0 0
  %498 = vmatprep.subr.bf16.mxu0 0
  %499 = vmatpush1.bf16.msra.mxu0 0
  %500 = vmatprep.subr.bf16.mxu0 0
  %501 = vmatpush1.bf16.msra.mxu0 0
  %502 = vmatprep.subr.bf16.mxu0 0
  %503 = vmatpush1.bf16.msra.mxu0 0
  %504 = vmatprep.subr.bf16.mxu0 0
  %505 = vmatpush1.bf16.msra.mxu0 %v483
  %506 = vmatprep.subr.bf16.mxu0 0
  %507 = vmatpush1.bf16.msra.mxu0 %v482
  %508 = vmatprep.subr.bf16.mxu0 0
  %509 = vmatpush2.bf16.msra.mxu0 0
  %510 = vmatprep.subr.bf16.mxu0 0
  %511 = vmatpush2.bf16.msra.mxu0 0
  %512 = vmatprep.subr.bf16.mxu0 0
  %513 = vmatpush2.bf16.msra.mxu0 0
  %514 = vmatprep.subr.bf16.mxu0 0
  %515 = vmatpush2.bf16.msra.mxu0 0
  %516 = vmatprep.subr.bf16.mxu0 0
  %517 = vmatpush2.bf16.msra.mxu0 0
  %518 = vmatprep.subr.bf16.mxu0 0
  %519 = vmatpush2.bf16.msra.mxu0 0
  %520 = vmatprep.subr.bf16.mxu0 0
  %521 = vmatpush2.bf16.msra.mxu0 0
  %522 = vmatprep.subr.bf16.mxu0 0
  %523 = vmatpush2.bf16.msra.mxu0 0
  %524 = vmatprep.mubr.bf16.mxu0 0
  %525 = vmatmul.mubr.bf16.gmra.mxu0 %v487
  %v526 = vpop.f32.mrf.mxu0
  %v527 = vadd.f32 %v472, %v526
  %v528 = vpop.f32.mrf.mxu0
  %v529 = vpop.f32.mrf.mxu0
  %v530 = vadd.f32 %v472, %v529
  %v531 = vpop.f32.mrf.mxu0
  %532 = vmatprep.mubr.bf16.mxu0 0
  %533 = vmatmul.mubr.bf16.gmra.mxu0 %v490
  %v534 = vpop.f32.mrf.mxu0
  %v535 = vadd.f32 %v472, %v534
  %v536 = vpop.f32.mrf.mxu0
  %v537 = vpop.f32.mrf.mxu0
  %v538 = vadd.f32 %v472, %v537
  %v539 = vpop.f32.mrf.mxu0
  %540 = vdwg.mxu0
  %v541 = vxor.u32 %v527, 2147483648
  %v542 = vxor.u32 %v530, 2147483648
  %v543 = vxor.u32 %v535, 2147483648
  %v544 = vxor.u32 %v538, 2147483648
  %v545 = vmul.f32 %v541, 1.442695
  %v546 = vpow.pop %v545
  %v547 = vmul.f32 %v542, 1.442695
  %v548 = vpow.pop %v547
  %v549 = vmul.f32 %v543, 1.442695
  %v550 = vpow.pop %v549
  %v551 = vmul.f32 %v544, 1.442695
  %v552 = vpow.pop %v551
  %v553 = vadd.f32 %v546, 1.0
  %v554 = vadd.f32 %v548, 1.0
  %v555 = vadd.f32 %v550, 1.0
  %v556 = vadd.f32 %v552, 1.0
  %v557 = vrcp.pop %v553
  %v558 = vmul.f32 1.0, %v557
  %v559 = vrcp.pop %v554
  %v560 = vmul.f32 1.0, %v559
  %v561 = vrcp.pop %v555
  %v562 = vmul.f32 1.0, %v561
  %v563 = vrcp.pop %v556
  %v564 = vmul.f32 1.0, %v563
  %v565 = vmax.f32 %v527, 0.0
  %v566 = vmax.f32 %v530, 0.0
  %v567 = vmax.f32 %v535, 0.0
  %v568 = vmax.f32 %v538, 0.0
  %573 = vrot.lane.b32.xlu0 %v565, 96
  %v574 = vpop.permute.xlu0 %573
  %575 = vrot.lane.b32.xlu0 %v566, 96
  %v576 = vpop.permute.xlu0 %575
  %577 = vrot.lane.b32.xlu0 %v567, 96
  %v578 = vpop.permute.xlu0 %577
  %579 = vrot.lane.b32.xlu0 %v568, 96
  %v580 = vpop.permute.xlu0 %579
  %v585 = vmul.f32 %v558, %v574
  %v586 = vmul.f32 %v560, %v576
  %v587 = vmul.f32 %v562, %v578
  %v588 = vmul.f32 %v564, %v580
  %v589 = vsub.f32 1.0, %v558
  %v590 = vsub.f32 1.0, %v560
  %v591 = vsub.f32 1.0, %v562
  %v592 = vsub.f32 1.0, %v564
  %597 = vrot.lane.b32.xlu0 %v527, 64
  %v598 = vpop.permute.xlu0 %597
  %599 = vrot.lane.b32.xlu0 %v530, 64
  %v600 = vpop.permute.xlu0 %599
  %601 = vrot.lane.b32.xlu0 %v535, 64
  %v602 = vpop.permute.xlu0 %601
  %603 = vrot.lane.b32.xlu0 %v538, 64
  %v604 = vpop.permute.xlu0 %603
  %v609 = vmul.f32 %v589, %v598
  %v610 = vmul.f32 %v590, %v600
  %v611 = vmul.f32 %v591, %v602
  %v612 = vmul.f32 %v592, %v604
  %v613 = vadd.f32 %v585, %v609
  %v614 = vadd.f32 %v586, %v610
  %v615 = vadd.f32 %v587, %v611
  %v616 = vadd.f32 %v588, %v612
  %v617 = vpack.c.bf16 %v614, %v613
  %v618 = vpack.c.bf16 %v616, %v615
  %s619 = scalar_lea.vmem %s5, 48
  %v620 = vld [vmem:[%s619] sm:$0xf]
  %v621 = vld [vmem:[%s619 + $0x4] sm:$0xf]
  %v622 = vld [vmem:[%s619 + $0x8] sm:$0xf]
  %v623 = vld [vmem:[%s619 + $0xc] sm:$0xf]
  %s624 = scalar_lea.vmem %s6, 3
  %v625 = vld [vmem:[%s624] sm:$0x1]
  %v627 = vlaneseq
  %v628 = vshrl.u32 %v627, 7
  %v629 = vsub.s32 0, %v628
  %v630 = vrot.slane %v625, %v629
  %v636 = vunpack.c.l.b16 %v620
  %v637 = vunpack.c.l.b16 %v621
  %v638 = vunpack.c.l.b16 %v622
  %v639 = vunpack.c.l.b16 %v623
  %v640 = vpack.c.b16 %v637, %v636
  %v641 = vpack.c.b16 %v639, %v638
  %v645 = vsel %vm169, %v617, 0
  %v648 = vsel %vm169, %v618, 0
  %650 = vmatprep.subr.bf16.mxu0 0
  %651 = vmatpush1.bf16.msra.mxu0 0
  %652 = vmatprep.subr.bf16.mxu0 0
  %653 = vmatpush1.bf16.msra.mxu0 0
  %654 = vmatprep.subr.bf16.mxu0 0
  %655 = vmatpush1.bf16.msra.mxu0 0
  %656 = vmatprep.subr.bf16.mxu0 0
  %657 = vmatpush1.bf16.msra.mxu0 0
  %658 = vmatprep.subr.bf16.mxu0 0
  %659 = vmatpush1.bf16.msra.mxu0 0
  %660 = vmatprep.subr.bf16.mxu0 0
  %661 = vmatpush1.bf16.msra.mxu0 0
  %662 = vmatprep.subr.bf16.mxu0 0
  %663 = vmatpush1.bf16.msra.mxu0 %v641
  %664 = vmatprep.subr.bf16.mxu0 0
  %665 = vmatpush1.bf16.msra.mxu0 %v640
  %666 = vmatprep.subr.bf16.mxu0 0
  %667 = vmatpush2.bf16.msra.mxu0 0
  %668 = vmatprep.subr.bf16.mxu0 0
  %669 = vmatpush2.bf16.msra.mxu0 0
  %670 = vmatprep.subr.bf16.mxu0 0
  %671 = vmatpush2.bf16.msra.mxu0 0
  %672 = vmatprep.subr.bf16.mxu0 0
  %673 = vmatpush2.bf16.msra.mxu0 0
  %674 = vmatprep.subr.bf16.mxu0 0
  %675 = vmatpush2.bf16.msra.mxu0 0
  %676 = vmatprep.subr.bf16.mxu0 0
  %677 = vmatpush2.bf16.msra.mxu0 0
  %678 = vmatprep.subr.bf16.mxu0 0
  %679 = vmatpush2.bf16.msra.mxu0 0
  %680 = vmatprep.subr.bf16.mxu0 0
  %681 = vmatpush2.bf16.msra.mxu0 0
  %682 = vmatprep.mubr.bf16.mxu0 0
  %683 = vmatmul.mubr.bf16.gmra.mxu0 %v645
  %v684 = vpop.f32.mrf.mxu0
  %v685 = vadd.f32 %v630, %v684
  %v686 = vpop.f32.mrf.mxu0
  %v687 = vpop.f32.mrf.mxu0
  %v688 = vadd.f32 %v630, %v687
  %v689 = vpop.f32.mrf.mxu0
  %690 = vmatprep.mubr.bf16.mxu0 0
  %691 = vmatmul.mubr.bf16.gmra.mxu0 %v648
  %v692 = vpop.f32.mrf.mxu0
  %v693 = vadd.f32 %v630, %v692
  %v694 = vpop.f32.mrf.mxu0
  %v695 = vpop.f32.mrf.mxu0
  %v696 = vadd.f32 %v630, %v695
  %v697 = vpop.f32.mrf.mxu0
  %698 = vdwg.mxu0
  %v699 = vxor.u32 %v685, 2147483648
  %v700 = vxor.u32 %v688, 2147483648
  %v701 = vxor.u32 %v693, 2147483648
  %v702 = vxor.u32 %v696, 2147483648
  %v703 = vmul.f32 %v699, 1.442695
  %v704 = vpow.pop %v703
  %v705 = vmul.f32 %v700, 1.442695
  %v706 = vpow.pop %v705
  %v707 = vmul.f32 %v701, 1.442695
  %v708 = vpow.pop %v707
  %v709 = vmul.f32 %v702, 1.442695
  %v710 = vpow.pop %v709
  %v711 = vadd.f32 %v704, 1.0
  %v712 = vadd.f32 %v706, 1.0
  %v713 = vadd.f32 %v708, 1.0
  %v714 = vadd.f32 %v710, 1.0
  %v715 = vrcp.pop %v711
  %v716 = vmul.f32 1.0, %v715
  %v717 = vrcp.pop %v712
  %v718 = vmul.f32 1.0, %v717
  %v719 = vrcp.pop %v713
  %v720 = vmul.f32 1.0, %v719
  %v721 = vrcp.pop %v714
  %v722 = vmul.f32 1.0, %v721
  %v723 = vmax.f32 %v685, 0.0
  %v724 = vmax.f32 %v688, 0.0
  %v725 = vmax.f32 %v693, 0.0
  %v726 = vmax.f32 %v696, 0.0
  %731 = vrot.lane.b32.xlu0 %v723, 96
  %v732 = vpop.permute.xlu0 %731
  %733 = vrot.lane.b32.xlu0 %v724, 96
  %v734 = vpop.permute.xlu0 %733
  %735 = vrot.lane.b32.xlu0 %v725, 96
  %v736 = vpop.permute.xlu0 %735
  %737 = vrot.lane.b32.xlu0 %v726, 96
  %v738 = vpop.permute.xlu0 %737
  %v743 = vmul.f32 %v716, %v732
  %v744 = vmul.f32 %v718, %v734
  %v745 = vmul.f32 %v720, %v736
  %v746 = vmul.f32 %v722, %v738
  %v747 = vsub.f32 1.0, %v716
  %v748 = vsub.f32 1.0, %v718
  %v749 = vsub.f32 1.0, %v720
  %v750 = vsub.f32 1.0, %v722
  %755 = vrot.lane.b32.xlu0 %v685, 64
  %v756 = vpop.permute.xlu0 %755
  %757 = vrot.lane.b32.xlu0 %v688, 64
  %v758 = vpop.permute.xlu0 %757
  %759 = vrot.lane.b32.xlu0 %v693, 64
  %v760 = vpop.permute.xlu0 %759
  %761 = vrot.lane.b32.xlu0 %v696, 64
  %v762 = vpop.permute.xlu0 %761
  %v767 = vmul.f32 %v747, %v756
  %v768 = vmul.f32 %v748, %v758
  %v769 = vmul.f32 %v749, %v760
  %v770 = vmul.f32 %v750, %v762
  %v771 = vadd.f32 %v743, %v767
  %v772 = vadd.f32 %v744, %v768
  %v773 = vadd.f32 %v745, %v769
  %v774 = vadd.f32 %v746, %v770
  %v775 = vpack.c.bf16 %v772, %v771
  %v776 = vpack.c.bf16 %v774, %v773
  %v777 = vld [vmem:[%s7] sm:$0xf]
  %v778 = vld [vmem:[%s7 + $0x4] sm:$0xf]
  %v779 = vld [vmem:[%s7 + $0x8] sm:$0xf]
  %v780 = vld [vmem:[%s7 + $0xc] sm:$0xf]
  %v781 = vld [vmem:[%s8] sm:$0x1]
  %v783 = vlaneseq
  %v784 = vshrl.u32 %v783, 7
  %v785 = vsub.s32 0, %v784
  %v786 = vrot.slane %v781, %v785
  %v792 = vunpack.c.l.b16 %v777
  %v793 = vunpack.c.l.b16 %v778
  %v794 = vunpack.c.l.b16 %v779
  %v795 = vunpack.c.l.b16 %v780
  %v796 = vpack.c.b16 %v793, %v792
  %v797 = vpack.c.b16 %v795, %v794
  %v801 = vsel %vm169, %v775, 0
  %v804 = vsel %vm169, %v776, 0
  %806 = vmatprep.subr.bf16.mxu0 0
  %807 = vmatpush1.bf16.msra.mxu0 0
  %808 = vmatprep.subr.bf16.mxu0 0
  %809 = vmatpush1.bf16.msra.mxu0 0
  %810 = vmatprep.subr.bf16.mxu0 0
  %811 = vmatpush1.bf16.msra.mxu0 0
  %812 = vmatprep.subr.bf16.mxu0 0
  %813 = vmatpush1.bf16.msra.mxu0 0
  %814 = vmatprep.subr.bf16.mxu0 0
  %815 = vmatpush1.bf16.msra.mxu0 0
  %816 = vmatprep.subr.bf16.mxu0 0
  %817 = vmatpush1.bf16.msra.mxu0 0
  %818 = vmatprep.subr.bf16.mxu0 0
  %819 = vmatpush1.bf16.msra.mxu0 %v797
  %820 = vmatprep.subr.bf16.mxu0 0
  %821 = vmatpush1.bf16.msra.mxu0 %v796
  %822 = vmatprep.subr.bf16.mxu0 0
  %823 = vmatpush2.bf16.msra.mxu0 0
  %824 = vmatprep.subr.bf16.mxu0 0
  %825 = vmatpush2.bf16.msra.mxu0 0
  %826 = vmatprep.subr.bf16.mxu0 0
  %827 = vmatpush2.bf16.msra.mxu0 0
  %828 = vmatprep.subr.bf16.mxu0 0
  %829 = vmatpush2.bf16.msra.mxu0 0
  %830 = vmatprep.subr.bf16.mxu0 0
  %831 = vmatpush2.bf16.msra.mxu0 0
  %832 = vmatprep.subr.bf16.mxu0 0
  %833 = vmatpush2.bf16.msra.mxu0 0
  %834 = vmatprep.subr.bf16.mxu0 0
  %835 = vmatpush2.bf16.msra.mxu0 0
  %836 = vmatprep.subr.bf16.mxu0 0
  %837 = vmatpush2.bf16.msra.mxu0 0
  %838 = vmatprep.mubr.bf16.mxu0 0
  %839 = vmatmul.mubr.bf16.gmra.mxu0 %v801
  %v840 = vpop.f32.mrf.mxu0
  %v841 = vadd.f32 %v786, %v840
  %v842 = vpop.f32.mrf.mxu0
  %v843 = vpop.f32.mrf.mxu0
  %v844 = vadd.f32 %v786, %v843
  %v845 = vpop.f32.mrf.mxu0
  %846 = vmatprep.mubr.bf16.mxu0 0
  %847 = vmatmul.mubr.bf16.gmra.mxu0 %v804
  %v848 = vpop.f32.mrf.mxu0
  %v849 = vadd.f32 %v786, %v848
  %v850 = vpop.f32.mrf.mxu0
  %v851 = vpop.f32.mrf.mxu0
  %v852 = vadd.f32 %v786, %v851
  %v853 = vpop.f32.mrf.mxu0
  %854 = vdwg.mxu0
  %v855 = vld [vmem:[%s9] sm:$0xff]
  %v856 = vld [vmem:[%s9 + $0x8] sm:$0xff]
  %v857 = vld [vmem:[%s9 + $0x10] sm:$0xff]
  %v858 = vld [vmem:[%s9 + $0x18] sm:$0xff]
  %v859 = vld [vmem:[%s10] sm:$0x3]
  %v861 = vlaneseq
  %v862 = vshrl.u32 %v861, 7
  %v863 = vsub.s32 0, %v862
  %v864 = vrot.slane %v859, %v863
  %v865 = vlaneseq
  %v866 = vshrl.u32 %v865, 7
  %v867 = vsub.s32 1, %v866
  %v868 = vrot.slane %v859, %v867
  %v875 = vunpack.c.l.b16 %v855
  %v876 = vunpack.c.h.b16 %v855
  %v877 = vunpack.c.l.b16 %v856
  %v878 = vunpack.c.h.b16 %v856
  %v879 = vunpack.c.l.b16 %v857
  %v880 = vunpack.c.h.b16 %v857
  %v881 = vunpack.c.l.b16 %v858
  %v882 = vunpack.c.h.b16 %v858
  %v883 = vpack.c.b16 %v877, %v875
  %v884 = vpack.c.b16 %v878, %v876
  %v885 = vpack.c.b16 %v881, %v879
  %v886 = vpack.c.b16 %v882, %v880
  %891 = vmatprep.subr.bf16.mxu0 0
  %892 = vmatpush1.bf16.msra.mxu0 0
  %893 = vmatprep.subr.bf16.mxu0 0
  %894 = vmatpush1.bf16.msra.mxu0 0
  %895 = vmatprep.subr.bf16.mxu0 0
  %896 = vmatpush1.bf16.msra.mxu0 0
  %897 = vmatprep.subr.bf16.mxu0 0
  %898 = vmatpush1.bf16.msra.mxu0 0
  %899 = vmatprep.subr.bf16.mxu0 0
  %900 = vmatpush1.bf16.msra.mxu0 0
  %901 = vmatprep.subr.bf16.mxu0 0
  %902 = vmatpush1.bf16.msra.mxu0 0
  %903 = vmatprep.subr.bf16.mxu0 %v886
  %904 = vmatpush1.bf16.msra.mxu0 %v885
  %905 = vmatprep.subr.bf16.mxu0 %v884
  %906 = vmatpush1.bf16.msra.mxu0 %v883
  %907 = vmatprep.subr.bf16.mxu0 0
  %908 = vmatpush2.bf16.msra.mxu0 0
  %909 = vmatprep.subr.bf16.mxu0 0
  %910 = vmatpush2.bf16.msra.mxu0 0
  %911 = vmatprep.subr.bf16.mxu0 0
  %912 = vmatpush2.bf16.msra.mxu0 0
  %913 = vmatprep.subr.bf16.mxu0 0
  %914 = vmatpush2.bf16.msra.mxu0 0
  %915 = vmatprep.subr.bf16.mxu0 0
  %916 = vmatpush2.bf16.msra.mxu0 0
  %917 = vmatprep.subr.bf16.mxu0 0
  %918 = vmatpush2.bf16.msra.mxu0 0
  %919 = vmatprep.subr.bf16.mxu0 0
  %920 = vmatpush2.bf16.msra.mxu0 0
  %921 = vmatprep.subr.bf16.mxu0 0
  %922 = vmatpush2.bf16.msra.mxu0 0
  %923 = vmatprep.mubr.bf16.mxu0 0
  %924 = vmatmul.mubr.bf16.gmra.mxu0 %v801
  %v925 = vpop.f32.mrf.mxu0
  %v926 = vadd.f32 %v864, %v925
  %v927 = vpop.f32.mrf.mxu0
  %v928 = vadd.f32 %v868, %v927
  %v929 = vpop.f32.mrf.mxu0
  %v930 = vadd.f32 %v864, %v929
  %v931 = vpop.f32.mrf.mxu0
  %v932 = vadd.f32 %v868, %v931
  %933 = vmatprep.mubr.bf16.mxu0 0
  %934 = vmatmul.mubr.bf16.gmra.mxu0 %v804
  %v935 = vpop.f32.mrf.mxu0
  %v936 = vadd.f32 %v864, %v935
  %v937 = vpop.f32.mrf.mxu0
  %v938 = vadd.f32 %v868, %v937
  %v939 = vpop.f32.mrf.mxu0
  %v940 = vadd.f32 %v864, %v939
  %v941 = vpop.f32.mrf.mxu0
  %v942 = vadd.f32 %v868, %v941
  %943 = vdwg.mxu0
  %944 = vst.msk [vmem:[%s11] sm:$0xff] %vm169, %v841
  %945 = vst.msk [vmem:[%s11 + $0x8] sm:$0xff] %vm169, %v844
  %946 = vst.msk [vmem:[%s11 + $0x10] sm:$0xff] %vm169, %v849
  %947 = vst.msk [vmem:[%s11 + $0x18] sm:$0xff] %vm169, %v852
  %952 = vrot.lane.b32.xlu0 %v841, 96
  %v953 = vpop.permute.xlu0 %952
  %954 = vrot.lane.b32.xlu0 %v844, 96
  %v955 = vpop.permute.xlu0 %954
  %956 = vrot.lane.b32.xlu0 %v849, 96
  %v957 = vpop.permute.xlu0 %956
  %958 = vrot.lane.b32.xlu0 %v852, 96
  %v959 = vpop.permute.xlu0 %958
  %s964 = scalar_lea.vmem %s11, 32
  %965 = vst.msk [vmem:[%s964] sm:$0xff] %vm169, %v953
  %966 = vst.msk [vmem:[%s964 + $0x8] sm:$0xff] %vm169, %v955
  %967 = vst.msk [vmem:[%s964 + $0x10] sm:$0xff] %vm169, %v957
  %968 = vst.msk [vmem:[%s964 + $0x18] sm:$0xff] %vm169, %v959
  %vm969 = vcmask 785408
  %970 = vst.msk [vmem:[%s12] sm:$0xff] %vm969, %v926
  %971 = vst.msk [vmem:[%s12 + $0x8] sm:$0xff] %vm969, %v930
  %972 = vst.msk [vmem:[%s12 + $0x10] sm:$0xff] %vm969, %v936
  %973 = vst.msk [vmem:[%s12 + $0x18] sm:$0xff] %vm969, %v940
  %982 = vrot.lane.b32.xlu0 %v926, 32
  %v983 = vpop.permute.xlu0 %982
  %984 = vrot.lane.b32.xlu0 %v928, 32
  %v985 = vpop.permute.xlu0 %984
  %986 = vrot.lane.b32.xlu0 %v930, 32
  %v987 = vpop.permute.xlu0 %986
  %988 = vrot.lane.b32.xlu0 %v932, 32
  %v989 = vpop.permute.xlu0 %988
  %990 = vrot.lane.b32.xlu0 %v936, 32
  %v991 = vpop.permute.xlu0 %990
  %992 = vrot.lane.b32.xlu0 %v938, 32
  %v993 = vpop.permute.xlu0 %992
  %994 = vrot.lane.b32.xlu0 %v940, 32
  %v995 = vpop.permute.xlu0 %994
  %996 = vrot.lane.b32.xlu0 %v942, 32
  %v997 = vpop.permute.xlu0 %996
  %v998 = vsel %vm169, %v983, %v985
  %v999 = vsel %vm169, %v987, %v989
  %v1000 = vsel %vm169, %v991, %v993
  %v1001 = vsel %vm169, %v995, %v997
  %s1006 = scalar_lea.vmem %s12, 32
  %1007 = vst.msk [vmem:[%s1006] sm:$0xff] %vm969, %v998
  %1008 = vst.msk [vmem:[%s1006 + $0x8] sm:$0xff] %vm969, %v999
  %1009 = vst.msk [vmem:[%s1006 + $0x10] sm:$0xff] %vm969, %v1000
  %1010 = vst.msk [vmem:[%s1006 + $0x18] sm:$0xff] %vm969, %v1001
  // Predicated region
  $region46: #{cbhg_forward.8} parent=0 // pred_check
    _
  $region47: #{cbhg_forward.8} parent=0 // pred_check_branch
    %1012 = sbr.rel (0) target = $region49
  $region48: #{cbhg_forward.8} parent=0 // pred_region
    _
  $region49: #{cbhg_forward.8} parent=0 // pred_fallthru
    _
  // Predicated region
  $region50: #{cbhg_forward.8} parent=0 // pred_check
    _
  $region51: #{cbhg_forward.8} parent=0 // pred_check_branch
    %1014 = sbr.rel (0) target = $region53
  $region52: #{cbhg_forward.8} parent=0 // pred_region
    _
  $region53: #{cbhg_forward.8} parent=0 // pred_fallthru
    _
  // Predicated region
  $region54: #{cbhg_forward.8} parent=0 // pred_check
    _
  $region55: #{cbhg_forward.8} parent=0 // pred_check_branch
    %1016 = sbr.rel (0) target = $region57
  $region56: #{cbhg_forward.8} parent=0 // pred_region
    _
  $region57: #{cbhg_forward.8} parent=0 // pred_fallthru
    _
  // Predicated region
  $region58: #{cbhg_forward.8} parent=0 // pred_check
    _
  $region59: #{cbhg_forward.8} parent=0 // pred_check_branch
    %1018 = sbr.rel (0) target = $region61
  $region60: #{cbhg_forward.8} parent=0 // pred_region
    _
  $region61: #{cbhg_forward.8} parent=0 // pred_fallthru
    _

// kernel: cbhg_forward.9
$region0: #{cbhg_forward.9}
  #allocation0 [shape = 'u32[]', space=smem, size = 0x4, offset = 0x4, fixed_abs, tag = 'smem constant byte address 0x4 - core index']
  #allocation1 [shape = 'u32[144,128]{1,0:T(1,128)}', space=vmem, size = 0x12000, scoped, tag = 'internal scratch']
  #allocation2 [shape = 'f32[2,32]{1,0:T(2,128)}', space=vmem, size = 0x400, scoped, tag = 'scratch operand']
  %s0 = inlined_call_operand.vmem [shape: f32[2,16,2,96], index: 0, kind: input, shape index: {}]
  %s1 = inlined_call_operand.vmem [shape: f32[2,16,2,32], index: 1, kind: input, shape index: {}]
  %s2 = inlined_call_operand.vmem [shape: f32[16,2,1], index: 2, kind: input, shape index: {}]
  %s3 = inlined_call_operand.vmem [shape: f32[2,32,96], index: 3, kind: input, shape index: {}]
  %s4 = inlined_call_operand.vmem [shape: f32[2,1,32], index: 4, kind: input, shape index: {}]
  %s5 = inlined_call_operand.vmem [shape: f32[2,16,2,32], index: 5, kind: output, shape index: {}]
  %s6 = sld [smem:[#allocation0]]
  $region64: #{cbhg_forward.9} parent=0
    _
  %s8 = ssub.s32 1, %s6
  %s9 = scalar_select 0, %s8, %s6
  loop: start=0, step=1, limit=6
  $region2: #{cbhg_forward.9} parent=0 // loop_pre_header
    _
  $region3: #{cbhg_forward.9} parent=0 // loop_header
    %s11 = sphi 0, %s15
    %p12 = scmp.ge.s32.totalorder %s11, 6
    %s18 = sphi 0, %s30
    %s19 = sphi 0, %s26
    %s20 = sphi 0, %s18
    %s21 = sphi 0, %s19
    %s22 = sphi 0, %s20
    %s23 = sphi 0, %s21
    %s45 = sphi 0, %s47
    %s48 = sphi 0, %s45
    %s49 = sphi 0, %s48
    %s65 = sphi 0, %s49
    %s83 = sphi 0, %s85
    %s86 = sphi 0, %s83
    %s87 = sphi 0, %s86
    %s103 = sphi 0, %s87
    %s119 = sphi 0, %s121
    %s122 = sphi 0, %s119
    %s123 = sphi 0, %s122
    %s139 = sphi 0, %s123
    %s145 = sphi 0, %s147
    %s148 = sphi 0, %s145
    %s149 = sphi 0, %s148
    %s165 = sphi 0, %s149
    %s171 = sphi 0, %s173
    %s174 = sphi 0, %s171
    %s175 = sphi 0, %s174
    %s191 = sphi 0, %s175
    %s209 = sphi 0, %s211
    %s212 = sphi 0, %s209
    %s213 = sphi 0, %s212
    %s229 = sphi 0, %s213
  $region4: #{cbhg_forward.9} parent=0 // loop_header_branch
    %14 = sbr.rel (%p12) target = $region8
  $region5: #{cbhg_forward.9} parent=0 // loop_body
    %s16 = ssub.s32 %s11, 1
    %s17 = ssub.s32 %s11, 2
    %s24 = sadd.s32 1, %s19
    %p25 = scmp.ge.s32.totalorder %s24, 2
    %s26 = scalar_select %p25, 0, %s24
    %s27 = sadd.s32 1, %s18
    %s28 = scalar_select %p25, %s27, %s18
    %p29 = scmp.ge.s32.totalorder %s28, 2
    %s30 = scalar_select %p29, 0, %s28
    %s31 = ssub.s32 1, %s18
    %s32 = smul.u32 %s31, %s19
    %s33 = ssub.s32 1, %s19
    %s34 = smul.u32 %s18, %s33
    %s35 = sadd.s32 %s32, %s34
    %s36 = ssub.s32 1, %s30
    %s37 = smul.u32 %s36, %s26
    %s38 = ssub.s32 1, %s26
    %s39 = smul.u32 %s30, %s38
    %s40 = sadd.s32 %s37, %s39
    %s41 = ssub.s32 %s18, %s30
    %s42 = ssub.s32 %s35, %s40
    %s43 = sor.u32 %s41, %s42
    %p44 = scmp.eq.s32.totalorder %s43, 0
    %s46 = sadd.s32 %s45, 1
    %s47 = scalar_select %p44, %s45, %s46
    %p50 = pneg %p44
    %p51 = scmp.eq.s32.totalorder %s11, 3
    %p52 = por %p50, %p51
    %p53 = scmp.ne.s32.totalorder %s45, %s48
    %p54 = scmp.eq.s32.totalorder %s11, 0
    %p55 = por %p53, %p54
    %p56 = scmp.ne.s32.totalorder %s45, %s48
    %p57 = scmp.eq.s32.totalorder %s16, 3
    %p58 = por %p56, %p57
    %p59 = scmp.ne.s32.totalorder %s48, %s49
    %p60 = scmp.eq.s32.totalorder %s16, 0
    %p61 = por %p59, %p60
    %p62 = scmp.ne.s32.totalorder %s48, %s49
    %p63 = scmp.eq.s32.totalorder %s17, 3
    %p64 = por %p62, %p63
    %p66 = scmp.ne.s32.totalorder %s49, %s65
    %p67 = scmp.eq.s32.totalorder %s17, 0
    %p68 = por %p66, %p67
    %s69 = ssub.s32 1, %s18
    %s70 = smul.u32 %s69, %s19
    %s71 = ssub.s32 1, %s19
    %s72 = smul.u32 %s18, %s71
    %s73 = sadd.s32 %s70, %s72
    %s74 = ssub.s32 1, %s30
    %s75 = smul.u32 %s74, %s26
    %s76 = ssub.s32 1, %s26
    %s77 = smul.u32 %s30, %s76
    %s78 = sadd.s32 %s75, %s77
    %s79 = ssub.s32 %s18, %s30
    %s80 = ssub.s32 %s73, %s78
    %s81 = sor.u32 %s79, %s80
    %p82 = scmp.eq.s32.totalorder %s81, 0
    %s84 = sadd.s32 %s83, 1
    %s85 = scalar_select %p82, %s83, %s84
    %p88 = pneg %p82
    %p89 = scmp.eq.s32.totalorder %s11, 3
    %p90 = por %p88, %p89
    %p91 = scmp.ne.s32.totalorder %s83, %s86
    %p92 = scmp.eq.s32.totalorder %s11, 0
    %p93 = por %p91, %p92
    %p94 = scmp.ne.s32.totalorder %s83, %s86
    %p95 = scmp.eq.s32.totalorder %s16, 3
    %p96 = por %p94, %p95
    %p97 = scmp.ne.s32.totalorder %s86, %s87
    %p98 = scmp.eq.s32.totalorder %s16, 0
    %p99 = por %p97, %p98
    %p100 = scmp.ne.s32.totalorder %s86, %s87
    %p101 = scmp.eq.s32.totalorder %s17, 3
    %p102 = por %p100, %p101
    %p104 = scmp.ne.s32.totalorder %s87, %s103
    %p105 = scmp.eq.s32.totalorder %s17, 0
    %p106 = por %p104, %p105
    %s107 = ssub.s32 1, %s18
    %s108 = smul.u32 %s107, %s19
    %s109 = ssub.s32 1, %s19
    %s110 = smul.u32 %s18, %s109
    %s111 = sadd.s32 %s108, %s110
    %s112 = ssub.s32 1, %s30
    %s113 = smul.u32 %s112, %s26
    %s114 = ssub.s32 1, %s26
    %s115 = smul.u32 %s30, %s114
    %s116 = sadd.s32 %s113, %s115
    %s117 = ssub.s32 %s111, %s116
    %p118 = scmp.eq.s32.totalorder %s117, 0
    %s120 = sadd.s32 %s119, 1
    %s121 = scalar_select %p118, %s119, %s120
    %p124 = pneg %p118
    %p125 = scmp.eq.s32.totalorder %s11, 3
    %p126 = por %p124, %p125
    %p127 = scmp.ne.s32.totalorder %s119, %s122
    %p128 = scmp.eq.s32.totalorder %s11, 0
    %p129 = por %p127, %p128
    %p130 = scmp.ne.s32.totalorder %s119, %s122
    %p131 = scmp.eq.s32.totalorder %s16, 3
    %p132 = por %p130, %p131
    %p133 = scmp.ne.s32.totalorder %s122, %s123
    %p134 = scmp.eq.s32.totalorder %s16, 0
    %p135 = por %p133, %p134
    %p136 = scmp.ne.s32.totalorder %s122, %s123
    %p137 = scmp.eq.s32.totalorder %s17, 3
    %p138 = por %p136, %p137
    %p140 = scmp.ne.s32.totalorder %s123, %s139
    %p141 = scmp.eq.s32.totalorder %s17, 0
    %p142 = por %p140, %p141
    %s143 = ssub.s32 %s18, %s30
    %p144 = scmp.eq.s32.totalorder %s143, 0
    %s146 = sadd.s32 %s145, 1
    %s147 = scalar_select %p144, %s145, %s146
    %p150 = pneg %p144
    %p151 = scmp.eq.s32.totalorder %s11, 3
    %p152 = por %p150, %p151
    %p153 = scmp.ne.s32.totalorder %s145, %s148
    %p154 = scmp.eq.s32.totalorder %s11, 0
    %p155 = por %p153, %p154
    %p156 = scmp.ne.s32.totalorder %s145, %s148
    %p157 = scmp.eq.s32.totalorder %s16, 3
    %p158 = por %p156, %p157
    %p159 = scmp.ne.s32.totalorder %s148, %s149
    %p160 = scmp.eq.s32.totalorder %s16, 0
    %p161 = por %p159, %p160
    %p162 = scmp.ne.s32.totalorder %s148, %s149
    %p163 = scmp.eq.s32.totalorder %s17, 3
    %p164 = por %p162, %p163
    %p166 = scmp.ne.s32.totalorder %s149, %s165
    %p167 = scmp.eq.s32.totalorder %s17, 0
    %p168 = por %p166, %p167
    %s169 = ssub.s32 %s18, %s30
    %p170 = scmp.eq.s32.totalorder %s169, 0
    %s172 = sadd.s32 %s171, 1
    %s173 = scalar_select %p170, %s171, %s172
    %p176 = pneg %p170
    %p177 = scmp.eq.s32.totalorder %s11, 3
    %p178 = por %p176, %p177
    %p179 = scmp.ne.s32.totalorder %s171, %s174
    %p180 = scmp.eq.s32.totalorder %s11, 0
    %p181 = por %p179, %p180
    %p182 = scmp.ne.s32.totalorder %s171, %s174
    %p183 = scmp.eq.s32.totalorder %s16, 3
    %p184 = por %p182, %p183
    %p185 = scmp.ne.s32.totalorder %s174, %s175
    %p186 = scmp.eq.s32.totalorder %s16, 0
    %p187 = por %p185, %p186
    %p188 = scmp.ne.s32.totalorder %s174, %s175
    %p189 = scmp.eq.s32.totalorder %s17, 3
    %p190 = por %p188, %p189
    %p192 = scmp.ne.s32.totalorder %s175, %s191
    %p193 = scmp.eq.s32.totalorder %s17, 0
    %p194 = por %p192, %p193
    %s195 = ssub.s32 1, %s18
    %s196 = smul.u32 %s195, %s19
    %s197 = ssub.s32 1, %s19
    %s198 = smul.u32 %s18, %s197
    %s199 = sadd.s32 %s196, %s198
    %s200 = ssub.s32 1, %s30
    %s201 = smul.u32 %s200, %s26
    %s202 = ssub.s32 1, %s26
    %s203 = smul.u32 %s30, %s202
    %s204 = sadd.s32 %s201, %s203
    %s205 = ssub.s32 %s18, %s30
    %s206 = ssub.s32 %s199, %s204
    %s207 = sor.u32 %s205, %s206
    %p208 = scmp.eq.s32.totalorder %s207, 0
    %s210 = sadd.s32 %s209, 1
    %s211 = scalar_select %p208, %s209, %s210
    %p214 = pneg %p208
    %p215 = scmp.eq.s32.totalorder %s11, 3
    %p216 = por %p214, %p215
    %p217 = scmp.ne.s32.totalorder %s209, %s212
    %p218 = scmp.eq.s32.totalorder %s11, 0
    %p219 = por %p217, %p218
    %p220 = scmp.ne.s32.totalorder %s209, %s212
    %p221 = scmp.eq.s32.totalorder %s16, 3
    %p222 = por %p220, %p221
    %p223 = scmp.ne.s32.totalorder %s212, %s213
    %p224 = scmp.eq.s32.totalorder %s16, 0
    %p225 = por %p223, %p224
    %p226 = scmp.ne.s32.totalorder %s212, %s213
    %p227 = scmp.eq.s32.totalorder %s17, 3
    %p228 = por %p226, %p227
    %p230 = scmp.ne.s32.totalorder %s213, %s229
    %p231 = scmp.eq.s32.totalorder %s17, 0
    %p232 = por %p230, %p231
    %p233 = scmp.le.s32.totalorder 1, %s11
    %p234 = scmp.lt.s32.totalorder %s11, 5
    %p235 = pnand %p233, %p234
    %p236 = pneg %p235
    // Predicated region
    $region9: #{cbhg_forward.9} parent=5 // pred_check
      _
    $region10: #{cbhg_forward.9} parent=5 // pred_check_branch
      %238 = sbr.rel (%p235) target = $region12
    $region11: #{cbhg_forward.9} parent=5 // pred_region
      %s239 = ssub.s32 %s11, 1
    $region12: #{cbhg_forward.9} parent=5 // pred_fallthru
      _
    %p240 = scmp.lt.s32.totalorder %s11, 4
    // Predicated region
    $region13: #{cbhg_forward.9} parent=5 // pred_check
      %p241 = pneg %p240
    $region14: #{cbhg_forward.9} parent=5 // pred_check_branch
      %243 = sbr.rel (%p241) target = $region16
    $region15: #{cbhg_forward.9} parent=5 // pred_region
      // Predicated region
      $region17: #{cbhg_forward.9} parent=15 // pred_check
        %p244 = pneg %p55
      $region18: #{cbhg_forward.9} parent=15 // pred_check_branch
        %246 = sbr.rel (%p244) target = $region20
      $region19: #{cbhg_forward.9} parent=15 // pred_region
        %s247 = ssub.s32 1, %s18
        %s248 = smul.u32 %s247, %s19
        %s249 = ssub.s32 1, %s19
        %s250 = smul.u32 %s18, %s249
        %s251 = sadd.s32 %s248, %s250
        %s252 = smul.u32 8, %s251
        %p253 = scmp.lt.s32.totalorder %s18, 1
        %s254 = scalar_select %p253, %s18, 1
        %p255 = scmp.lt.s32.totalorder %s252, 15
        %s256 = scalar_select %p255, %s252, 15
        %s257 = smul.addr %s254, 16
        %s258 = sadd.s32 %s256, %s257
        %s259 = smul.addr %s258, 2
        %s260 = scalar_lea.vmem %s0, %s259
        %s261 = ssub.s32 1, %s18
        %s262 = smul.u32 %s261, %s19
        %s263 = ssub.s32 1, %s19
        %s264 = smul.u32 %s18, %s263
        %s265 = sadd.s32 %s262, %s264
        %s266 = smul.u32 8, %s265
      $region20: #{cbhg_forward.9} parent=15 // pred_fallthru
        _
      // Predicated region
      $region21: #{cbhg_forward.9} parent=15 // pred_check
        %p267 = pneg %p93
      $region22: #{cbhg_forward.9} parent=15 // pred_check_branch
        %269 = sbr.rel (%p267) target = $region24
      $region23: #{cbhg_forward.9} parent=15 // pred_region
        %s270 = ssub.s32 1, %s18
        %s271 = smul.u32 %s270, %s19
        %s272 = ssub.s32 1, %s19
        %s273 = smul.u32 %s18, %s272
        %s274 = sadd.s32 %s271, %s273
        %s275 = smul.u32 8, %s274
        %p276 = scmp.lt.s32.totalorder %s18, 1
        %s277 = scalar_select %p276, %s18, 1
        %p278 = scmp.lt.s32.totalorder %s275, 15
        %s279 = scalar_select %p278, %s275, 15
        %s280 = smul.addr %s277, 16
        %s281 = sadd.s32 %s279, %s280
        %s282 = smul.addr %s281, 2
        %s283 = scalar_lea.vmem %s1, %s282
        %s284 = ssub.s32 1, %s18
        %s285 = smul.u32 %s284, %s19
        %s286 = ssub.s32 1, %s19
        %s287 = smul.u32 %s18, %s286
        %s288 = sadd.s32 %s285, %s287
        %s289 = smul.u32 8, %s288
      $region24: #{cbhg_forward.9} parent=15 // pred_fallthru
        _
      // Predicated region
      $region25: #{cbhg_forward.9} parent=15 // pred_check
        %p290 = pneg %p129
      $region26: #{cbhg_forward.9} parent=15 // pred_check_branch
        %292 = sbr.rel (%p290) target = $region28
      $region27: #{cbhg_forward.9} parent=15 // pred_region
        %s293 = ssub.s32 1, %s18
        %s294 = smul.u32 %s293, %s19
        %s295 = ssub.s32 1, %s19
        %s296 = smul.u32 %s18, %s295
        %s297 = sadd.s32 %s294, %s296
        %s298 = smul.u32 8, %s297
        %p299 = scmp.lt.s32.totalorder %s298, 15
        %s300 = scalar_select %p299, %s298, 15
        %s301 = smul.addr %s300, 2
        %s302 = scalar_lea.vmem %s2, %s301
        %s303 = ssub.s32 1, %s18
        %s304 = smul.u32 %s303, %s19
        %s305 = ssub.s32 1, %s19
        %s306 = smul.u32 %s18, %s305
        %s307 = sadd.s32 %s304, %s306
        %s308 = smul.u32 8, %s307
      $region28: #{cbhg_forward.9} parent=15 // pred_fallthru
        _
      // Predicated region
      $region29: #{cbhg_forward.9} parent=15 // pred_check
        %p309 = pneg %p155
      $region30: #{cbhg_forward.9} parent=15 // pred_check_branch
        %311 = sbr.rel (%p309) target = $region32
      $region31: #{cbhg_forward.9} parent=15 // pred_region
        %p312 = scmp.lt.s32.totalorder %s18, 1
        %s313 = scalar_select %p312, %s18, 1
        %s314 = smul.addr %s313, 4
        %s315 = smul.addr %s314, 8
        %s316 = scalar_lea.vmem %s3, %s315
      $region32: #{cbhg_forward.9} parent=15 // pred_fallthru
        _
      // Predicated region
      $region33: #{cbhg_forward.9} parent=15 // pred_check
        %p317 = pneg %p181
      $region34: #{cbhg_forward.9} parent=15 // pred_check_branch
        %319 = sbr.rel (%p317) target = $region36
      $region35: #{cbhg_forward.9} parent=15 // pred_region
        %p320 = scmp.lt.s32.totalorder %s18, 1
        %s321 = scalar_select %p320, %s18, 1
        %s322 = scalar_lea.vmem %s4, %s321
      $region36: #{cbhg_forward.9} parent=15 // pred_fallthru
        _
    $region16: #{cbhg_forward.9} parent=5 // pred_fallthru
      _
    %p323 = scmp.le.s32.totalorder 1, %s11
    %p324 = scmp.lt.s32.totalorder %s11, 5
    %p325 = pnand %p323, %p324
    %p326 = pneg %p325
    // Predicated region
    $region37: #{cbhg_forward.9} parent=5 // pred_check
      _
    $region38: #{cbhg_forward.9} parent=5 // pred_check_branch
      %328 = sbr.rel (%p325) target = $region40
    $region39: #{cbhg_forward.9} parent=5 // pred_region
      %s329 = ssub.s32 %s11, 1
      %s330 = ssub.s32 1, %s20
      %s331 = smul.u32 %s330, %s21
      %s332 = ssub.s32 1, %s21
      %s333 = smul.u32 %s20, %s332
      %s334 = sadd.s32 %s331, %s333
      %s335 = smul.u32 8, %s334
      %p336 = scmp.lt.s32.totalorder %s20, 1
      %s337 = scalar_select %p336, %s20, 1
      %p338 = scmp.lt.s32.totalorder %s335, 15
      %s339 = scalar_select %p338, %s335, 15
      %s340 = smul.addr %s337, 16
      %s341 = sadd.s32 %s339, %s340
      %s342 = smul.addr %s341, 2
      %s343 = scalar_lea.vmem %s0, %s342
      %p344 = pneg %p61
      %p345 = pneg %p58
      %s346 = ssub.s32 1, %s20
      %s347 = smul.u32 %s346, %s21
      %s348 = ssub.s32 1, %s21
      %s349 = smul.u32 %s20, %s348
      %s350 = sadd.s32 %s347, %s349
      %s351 = smul.u32 8, %s350
      %p352 = scmp.lt.s32.totalorder %s20, 1
      %s353 = scalar_select %p352, %s20, 1
      %p354 = scmp.lt.s32.totalorder %s351, 15
      %s355 = scalar_select %p354, %s351, 15
      %s356 = smul.addr %s353, 16
      %s357 = sadd.s32 %s355, %s356
      %s358 = smul.addr %s357, 2
      %s359 = scalar_lea.vmem %s1, %s358
      %p360 = pneg %p99
      %p361 = pneg %p96
      %s362 = ssub.s32 1, %s20
      %s363 = smul.u32 %s362, %s21
      %s364 = ssub.s32 1, %s21
      %s365 = smul.u32 %s20, %s364
      %s366 = sadd.s32 %s363, %s365
      %s367 = smul.u32 8, %s366
      %p368 = scmp.lt.s32.totalorder %s367, 15
      %s369 = scalar_select %p368, %s367, 15
      %s370 = smul.addr %s369, 2
      %s371 = scalar_lea.vmem %s2, %s370
      %p372 = pneg %p135
      %p373 = pneg %p132
      %p374 = scmp.lt.s32.totalorder %s20, 1
      %s375 = scalar_select %p374, %s20, 1
      %s376 = smul.addr %s375, 4
      %s377 = smul.addr %s376, 8
      %s378 = scalar_lea.vmem %s3, %s377
      %p379 = pneg %p161
      %p380 = pneg %p158
      %p381 = scmp.lt.s32.totalorder %s20, 1
      %s382 = scalar_select %p381, %s20, 1
      %s383 = scalar_lea.vmem %s4, %s382
      %p384 = pneg %p187
      %p385 = pneg %p184
      %p386 = pneg %p225
      %p387 = pneg %p222
      %s388 = ssub.s32 1, %s20
      %s389 = smul.u32 %s388, %s21
      %s390 = ssub.s32 1, %s21
      %s391 = smul.u32 %s20, %s390
      %s392 = sadd.s32 %s389, %s391
      %s393 = smul.u32 8, %s392
      %p394 = scmp.lt.s32.totalorder %s20, 1
      %s395 = scalar_select %p394, %s20, 1
      %p396 = scmp.lt.s32.totalorder %s393, 15
      %s397 = scalar_select %p396, %s393, 15
      %s398 = smul.addr %s395, 16
      %s399 = sadd.s32 %s397, %s398
      %s400 = smul.addr %s399, 2
      %s401 = scalar_lea.vmem %s5, %s400
      %s402 = ssub.s32 1, %s20
      %s403 = smul.u32 %s402, %s21
      %s404 = ssub.s32 1, %s21
      %s405 = smul.u32 %s20, %s404
      %s406 = sadd.s32 %s403, %s405
      %s407 = smul.u32 8, %s406
      %p408 = scmp.lt.s32.totalorder %s20, 1
      %s409 = scalar_select %p408, %s20, 1
      %p410 = scmp.lt.s32.totalorder %s407, 15
      %s411 = scalar_select %p410, %s407, 15
      %s412 = smul.addr %s409, 16
      %s413 = sadd.s32 %s411, %s412
      %s414 = smul.addr %s413, 2
      %s415 = scalar_lea.vmem %s0, %s414
      %s416 = ssub.s32 1, %s20
      %s417 = smul.u32 %s416, %s21
      %s418 = ssub.s32 1, %s21
      %s419 = smul.u32 %s20, %s418
      %s420 = sadd.s32 %s417, %s419
      %s421 = smul.u32 8, %s420
      %s422 = ssub.s32 1, %s20
      %s423 = smul.u32 %s422, %s21
      %s424 = ssub.s32 1, %s21
      %s425 = smul.u32 %s20, %s424
      %s426 = sadd.s32 %s423, %s425
      %s427 = smul.u32 8, %s426
      %p428 = scmp.lt.s32.totalorder %s20, 1
      %s429 = scalar_select %p428, %s20, 1
      %p430 = scmp.lt.s32.totalorder %s427, 15
      %s431 = scalar_select %p430, %s427, 15
      %s432 = smul.addr %s429, 16
      %s433 = sadd.s32 %s431, %s432
      %s434 = smul.addr %s433, 2
      %s435 = scalar_lea.vmem %s1, %s434
      %s436 = ssub.s32 1, %s20
      %s437 = smul.u32 %s436, %s21
      %s438 = ssub.s32 1, %s21
      %s439 = smul.u32 %s20, %s438
      %s440 = sadd.s32 %s437, %s439
      %s441 = smul.u32 8, %s440
      %s442 = ssub.s32 1, %s20
      %s443 = smul.u32 %s442, %s21
      %s444 = ssub.s32 1, %s21
      %s445 = smul.u32 %s20, %s444
      %s446 = sadd.s32 %s443, %s445
      %s447 = smul.u32 8, %s446
      %p448 = scmp.lt.s32.totalorder %s447, 15
      %s449 = scalar_select %p448, %s447, 15
      %s450 = smul.addr %s449, 2
      %s451 = scalar_lea.vmem %s2, %s450
      %s452 = ssub.s32 1, %s20
      %s453 = smul.u32 %s452, %s21
      %s454 = ssub.s32 1, %s21
      %s455 = smul.u32 %s20, %s454
      %s456 = sadd.s32 %s453, %s455
      %s457 = smul.u32 8, %s456
      %p458 = scmp.lt.s32.totalorder %s20, 1
      %s459 = scalar_select %p458, %s20, 1
      %s460 = smul.addr %s459, 4
      %s461 = smul.addr %s460, 8
      %s462 = scalar_lea.vmem %s3, %s461
      %p463 = scmp.lt.s32.totalorder %s20, 1
      %s464 = scalar_select %p463, %s20, 1
      %s465 = scalar_lea.vmem %s4, %s464
      %s466 = ssub.s32 1, %s20
      %s467 = smul.u32 %s466, %s21
      %s468 = ssub.s32 1, %s21
      %s469 = smul.u32 %s20, %s468
      %s470 = sadd.s32 %s467, %s469
      %s471 = smul.u32 8, %s470
      %p472 = scmp.lt.s32.totalorder %s20, 1
      %s473 = scalar_select %p472, %s20, 1
      %p474 = scmp.lt.s32.totalorder %s471, 15
      %s475 = scalar_select %p474, %s471, 15
      %s476 = smul.addr %s473, 16
      %s477 = sadd.s32 %s475, %s476
      %s478 = smul.addr %s477, 2
      %s479 = scalar_lea.vmem %s5, %s478
      %s480 = ssub.s32 1, %s20
      %s481 = smul.u32 %s480, %s21
      %s482 = ssub.s32 1, %s21
      %s483 = smul.u32 %s20, %s482
      %s484 = sadd.s32 %s481, %s483
      %s485 = smul.u32 8, %s484
      %p486 = scmp.eq.s32.totalorder %s21, 0
      // Predicated region
      $region41: #{cbhg_forward.9} parent=39 // pred_check
        %p487 = pneg %p486
      $region42: #{cbhg_forward.9} parent=39 // pred_check_branch
        %489 = sbr.rel (%p487) target = $region44
      $region43: #{cbhg_forward.9} parent=39 // pred_region
        %vm490 = vcmask 254976
        %491 = vst.msk [vmem:[#allocation2] sm:$0x3] %vm490, 0.0
      $region44: #{cbhg_forward.9} parent=39 // pred_fallthru
        _
      %v492 = vld [vmem:[%s462] sm:$0xff]
      %v493 = vld [vmem:[%s462 + $0x8] sm:$0xff]
      %v494 = vld [vmem:[%s462 + $0x10] sm:$0xff]
      %v495 = vld [vmem:[%s462 + $0x18] sm:$0xff]
      %v496 = vld [vmem:[%s465] sm:$0x1]
      %v497 = vld [vmem:[#allocation2] sm:$0x3]
      loop: start=0, step=1, limit=8
      $region45: #{cbhg_forward.9} parent=39 // loop_pre_header
        _
      $region46: #{cbhg_forward.9} parent=39 // loop_header
        %s499 = sphi 0, %s503
        %p500 = scmp.ge.s32.totalorder %s499, 8
        %v504 = vphi %v497, %v658
      $region47: #{cbhg_forward.9} parent=39 // loop_header_branch
        %502 = sbr.rel (%p500) target = $region51
      $region48: #{cbhg_forward.9} parent=39 // loop_body
        %s505 = ssub.s32 1, %s20
        %s506 = smul.u32 %s505, %s499
        %s507 = ssub.s32 7, %s499
        %s508 = smul.u32 %s20, %s507
        %s509 = sadd.s32 %s506, %s508
        %s510 = smul.u32 %s509, 2
        %s511 = scalar_lea.vmem %s415, %s510
        %v512 = vld [vmem:[%s511] sm:$0x3]
        %vm513 = vcmask 261120
        %v515 = vsel %vm513, %v504, 0
        %517 = vmatprep.subr.mxu0 0.0
        %518 = vmatpush1.msra.mxu0 0.0
        %519 = vmatprep.subr.mxu0 0.0
        %520 = vmatpush1.msra.mxu0 0.0
        %521 = vmatprep.subr.mxu0 0.0
        %522 = vmatpush1.msra.mxu0 0.0
        %523 = vmatprep.subr.mxu0 0.0
        %524 = vmatpush1.msra.mxu0 0.0
        %525 = vmatprep.subr.mxu0 0.0
        %526 = vmatpush1.msra.mxu0 0.0
        %527 = vmatprep.subr.mxu0 0.0
        %528 = vmatpush1.msra.mxu0 0.0
        %529 = vmatprep.subr.mxu0 0.0
        %530 = vmatpush1.msra.mxu0 0.0
        %531 = vmatprep.subr.mxu0 0.0
        %532 = vmatpush1.msra.mxu0 0.0
        %533 = vmatprep.subr.mxu0 0.0
        %534 = vmatpush1.msra.mxu0 0.0
        %535 = vmatprep.subr.mxu0 0.0
        %536 = vmatpush1.msra.mxu0 0.0
        %537 = vmatprep.subr.mxu0 0.0
        %538 = vmatpush1.msra.mxu0 0.0
        %539 = vmatprep.subr.mxu0 0.0
        %540 = vmatpush1.msra.mxu0 0.0
        %541 = vmatprep.subr.mxu0 0.0
        %542 = vmatpush1.msra.mxu0 %v495
        %543 = vmatprep.subr.mxu0 0.0
        %544 = vmatpush1.msra.mxu0 %v494
        %545 = vmatprep.subr.mxu0 0.0
        %546 = vmatpush1.msra.mxu0 %v493
        %547 = vmatprep.subr.mxu0 0.0
        %548 = vmatpush1.msra.mxu0 %v492
        %549 = vmatprep.subr.mxu0 0.0
        %550 = vmatpush2.msra.mxu0 0.0
        %551 = vmatprep.subr.mxu0 0.0
        %552 = vmatpush2.msra.mxu0 0.0
        %553 = vmatprep.subr.mxu0 0.0
        %554 = vmatpush2.msra.mxu0 0.0
        %555 = vmatprep.subr.mxu0 0.0
        %556 = vmatpush2.msra.mxu0 0.0
        %557 = vmatprep.subr.mxu0 0.0
        %558 = vmatpush2.msra.mxu0 0.0
        %559 = vmatprep.subr.mxu0 0.0
        %560 = vmatpush2.msra.mxu0 0.0
        %561 = vmatprep.subr.mxu0 0.0
        %562 = vmatpush2.msra.mxu0 0.0
        %563 = vmatprep.subr.mxu0 0.0
        %564 = vmatpush2.msra.mxu0 0.0
        %565 = vmatprep.subr.mxu0 0.0
        %566 = vmatpush2.msra.mxu0 0.0
        %567 = vmatprep.subr.mxu0 0.0
        %568 = vmatpush2.msra.mxu0 0.0
        %569 = vmatprep.subr.mxu0 0.0
        %570 = vmatpush2.msra.mxu0 0.0
        %571 = vmatprep.subr.mxu0 0.0
        %572 = vmatpush2.msra.mxu0 0.0
        %573 = vmatprep.subr.mxu0 0.0
        %574 = vmatpush2.msra.mxu0 0.0
        %575 = vmatprep.subr.mxu0 0.0
        %576 = vmatpush2.msra.mxu0 0.0
        %577 = vmatprep.subr.mxu0 0.0
        %578 = vmatpush2.msra.mxu0 0.0
        %579 = vmatprep.subr.mxu0 0.0
        %580 = vmatpush2.msra.mxu0 0.0
        %581 = vmatprep.mubr.f32.mxu0 0.0
        %582 = vmatmul.mubr.f32.gmra.mxu0 %v515
        %v583 = vpop.f32.mrf.mxu0
        %v584 = vadd.f32 0.0, %v583
        %v585 = vpop.f32.mrf.mxu0
        %586 = vdwg.mxu0
        %v587 = vadd.f32 %v512, %v584
        %v588 = vxor.u32 %v587, 2147483648
        %v589 = vmul.f32 %v588, 1.442695
        %v590 = vpow.pop %v589
        %v591 = vadd.f32 %v590, 1.0
        %v592 = vrcp.pop %v591
        %v593 = vmul.f32 1.0, %v592
        %v595 = vlaneseq
        %v596 = vshrl.u32 %v595, 7
        %v597 = vsub.s32 0, %v596
        %v598 = vrot.slane %v496, %v597
        %599 = vrot.lane.b32.xlu0 %v598, 64
        %v600 = vpop.permute.xlu0 %599
        %v602 = vadd.f32 %v584, %v600
        %604 = vrot.lane.b32.xlu0 %v602, 64
        %v605 = vpop.permute.xlu0 %604
        %v607 = vmul.f32 %v593, %v605
        %609 = vrot.lane.b32.xlu0 %v607, 64
        %v610 = vpop.permute.xlu0 %609
        %v612 = vadd.f32 %v512, %v610
        %v613 = vtanh.pop %v612
        %v614 = vsub.f32 1.0, %v593
        %616 = vrot.lane.b32.xlu0 %v613, 96
        %v617 = vpop.permute.xlu0 %616
        %v619 = vmul.f32 %v614, %v617
        %620 = vrot.lane.b32.xlu0 %v504, 32
        %v621 = vpop.permute.xlu0 %620
        %v623 = vmul.f32 %v593, %v621
        %v624 = vadd.f32 %v619, %v623
        %s625 = scalar_lea.vmem %s451, %s510
        %v626 = vld [vmem:[%s625] sm:$0x3]
        %628 = vset.pattern.permute.xlu0 0
        %629 = vperm.xlu0 %628, %v626
        %v630 = vpop.permute.xlu0 %629
        %v632 = vmul.f32 %v630, %v624
        %v633 = vsub.f32 1.0, %v626
        %635 = vset.pattern.permute.xlu0 0
        %636 = vperm.xlu0 %635, %v633
        %v637 = vpop.permute.xlu0 %636
        %v639 = vmul.f32 %v637, %v504
        %641 = vrot.lane.b32.xlu0 %v639, 32
        %v642 = vpop.permute.xlu0 %641
        %v644 = vadd.f32 %v632, %v642
        %s645 = scalar_lea.vmem %s435, %s510
        %v646 = vld [vmem:[%s645] sm:$0x3]
        %v647 = vmul.f32 %v630, %v644
        %649 = vrot.lane.b32.xlu0 %v647, 96
        %v650 = vpop.permute.xlu0 %649
        %v652 = vadd.f32 %v646, %v650
        %s653 = scalar_lea.vmem %s479, %s510
        %vm654 = vcmask 254976
        %655 = vst.msk [vmem:[%s653] sm:$0x3] %vm654, %v652
        %657 = vrot.lane.b32.xlu0 %v644, 96
        %v658 = vpop.permute.xlu0 %657
      $region49: #{cbhg_forward.9} parent=39 // loop_footer
        %s503 = sadd.s32 1, %s499
      $region50: #{cbhg_forward.9} parent=39 // loop_footer_branch
        %498 = sbr.rel target = $region46
      $region51: #{cbhg_forward.9} parent=39 // loop_exit
        _
      %vm660 = vcmask 254976
      %661 = vst.msk [vmem:[#allocation2] sm:$0x3] %vm660, %v504
      %s662 = ssub.s32 1, %s20
      %s663 = smul.u32 %s662, %s21
      %s664 = ssub.s32 1, %s21
      %s665 = smul.u32 %s20, %s664
      %s666 = sadd.s32 %s663, %s665
      %s667 = smul.u32 8, %s666
      %p668 = scmp.lt.s32.totalorder %s20, 1
      %s669 = scalar_select %p668, %s20, 1
      %p670 = scmp.lt.s32.totalorder %s667, 15
      %s671 = scalar_select %p670, %s667, 15
      %s672 = smul.addr %s669, 16
      %s673 = sadd.s32 %s671, %s672
      %s674 = smul.addr %s673, 2
      %s675 = scalar_lea.vmem %s5, %s674
      // Predicated region
      $region52: #{cbhg_forward.9} parent=39 // pred_check
        %p676 = pneg %p222
      $region53: #{cbhg_forward.9} parent=39 // pred_check_branch
        %678 = sbr.rel (%p676) target = $region55
      $region54: #{cbhg_forward.9} parent=39 // pred_region
        %s679 = ssub.s32 1, %s20
        %s680 = smul.u32 %s679, %s21
        %s681 = ssub.s32 1, %s21
        %s682 = smul.u32 %s20, %s681
        %s683 = sadd.s32 %s680, %s682
        %s684 = smul.u32 8, %s683
      $region55: #{cbhg_forward.9} parent=39 // pred_fallthru
        _
    $region40: #{cbhg_forward.9} parent=5 // pred_fallthru
      _
    %p685 = scmp.le.s32.totalorder 2, %s11
    // Predicated region
    $region56: #{cbhg_forward.9} parent=5 // pred_check
      %p686 = pneg %p685
    $region57: #{cbhg_forward.9} parent=5 // pred_check_branch
      %688 = sbr.rel (%p686) target = $region59
    $region58: #{cbhg_forward.9} parent=5 // pred_region
      %s689 = ssub.s32 %s11, 2
      // Predicated region
      $region60: #{cbhg_forward.9} parent=58 // pred_check
        %p690 = pneg %p228
      $region61: #{cbhg_forward.9} parent=58 // pred_check_branch
        %692 = sbr.rel (%p690) target = $region63
      $region62: #{cbhg_forward.9} parent=58 // pred_region
        %s693 = ssub.s32 1, %s22
        %s694 = smul.u32 %s693, %s23
        %s695 = ssub.s32 1, %s23
        %s696 = smul.u32 %s22, %s695
        %s697 = sadd.s32 %s694, %s696
        %s698 = smul.u32 8, %s697
        %p699 = scmp.lt.s32.totalorder %s22, 1
        %s700 = scalar_select %p699, %s22, 1
        %p701 = scmp.lt.s32.totalorder %s698, 15
        %s702 = scalar_select %p701, %s698, 15
        %s703 = smul.addr %s700, 16
        %s704 = sadd.s32 %s702, %s703
        %s705 = smul.addr %s704, 2
        %s706 = scalar_lea.vmem %s5, %s705
      $region63: #{cbhg_forward.9} parent=58 // pred_fallthru
        _
    $region59: #{cbhg_forward.9} parent=5 // pred_fallthru
      _
  $region6: #{cbhg_forward.9} parent=0 // loop_footer
    %s15 = sadd.s32 1, %s11
  $region7: #{cbhg_forward.9} parent=0 // loop_footer_branch
    %10 = sbr.rel target = $region3
  $region8: #{cbhg_forward.9} parent=0 // loop_exit
    _

</llo_original>
